<compile_context>
chip_gen: v7x
topology: tpu7x:2x2x1
jax: 0.10.0
libtpu: 0.0.40
codegen_flags: <defaults>
</compile_context>

<pallas_src>
import functools

import jax
import jax.numpy as jnp
import numpy as np
from jax.experimental import pallas as pl
from jax.experimental.pallas import tpu as pltpu


# Per-layer config of the PyTorch Discriminator: (stride, padding, has_bn, epilogue)
LAYER_CFG = (
    (2, 1, False, "lrelu"),
    (2, 1, True,  "bn_lrelu"),
    (2, 1, True,  "bn_lrelu"),
    (2, 1, True,  "bn_lrelu"),
    (1, 0, False, "sigmoid"),
)
LRELU_SLOPE = 0.2
BN_EPS = 1e-5


def _round_up(v, m):
    return (v + m - 1) // m * m


# ---------------------------------------------------------------------------
# Pallas kernels (bf16 GEMM on the MXU + fused f32 epilogue).
# ---------------------------------------------------------------------------
def _gemm_act_kernel(x_ref, w_ref, o_ref, *, epilogue):
    # x_ref: (TM, K) bf16   w_ref: (K, C) bf16   o_ref: (TM, C)
    acc = jnp.dot(x_ref[...], w_ref[...], preferred_element_type=jnp.float32)
    if epilogue == "lrelu":
        acc = jnp.where(acc >= 0.0, acc, LRELU_SLOPE * acc)
    elif epilogue == "sigmoid":
        acc = 1.0 / (1.0 + jnp.exp(-acc))
    o_ref[...] = acc.astype(o_ref.dtype)


def _gemm_bn_lrelu_kernel(x_ref, w_ref, g_ref, b_ref, o_ref):
    # Full-M GEMM with fused BatchNorm (biased batch stats over M) + LeakyReLU.
    y = jnp.dot(x_ref[...], w_ref[...], preferred_element_type=jnp.float32)
    mean = jnp.mean(y, axis=0, keepdims=True)                  # (1, C)
    var = jnp.mean(jnp.square(y - mean), axis=0, keepdims=True)
    y = (y - mean) * jax.lax.rsqrt(var + BN_EPS)
    y = y * g_ref[...] + b_ref[...]
    y = jnp.where(y >= 0.0, y, LRELU_SLOPE * y)
    o_ref[...] = y.astype(o_ref.dtype)


def gemm_act(cols, w_mat, epilogue, out_dtype, tm_max=512):
    """Conv-as-GEMM with fused elementwise epilogue; tiled over M ('parallel')."""
    M, K = cols.shape
    _, C = w_mat.shape
    TM = min(tm_max, _round_up(M, 8))
    m_pad = (-M) % TM
    if m_pad:
        cols = jnp.pad(cols, ((0, m_pad), (0, 0)))
    Mp = M + m_pad
    y = pl.pallas_call(
        functools.partial(_gemm_act_kernel, epilogue=epilogue),
        out_shape=jax.ShapeDtypeStruct((Mp, C), out_dtype),
        grid=(Mp // TM,),
        in_specs=[
            pl.BlockSpec((TM, K), lambda i: (i, 0)),
            pl.BlockSpec((K, C), lambda i: (0, 0)),
        ],
        out_specs=pl.BlockSpec((TM, C), lambda i: (i, 0)),
        compiler_params=pltpu.CompilerParams(
            dimension_semantics=("parallel",)),
    )(cols, w_mat)
    return y[:M] if m_pad else y


def gemm_bn_lrelu(cols, w_mat, gamma, beta, out_dtype):
    """Conv-as-GEMM with BatchNorm(train) + LeakyReLU fused in one kernel."""
    M, K = cols.shape
    _, C = w_mat.shape
    # TODO(synk): if batch grows so the full-M tile no longer fits VMEM
    # (notably v7x's 64 MiB), switch to a two-pass / partial-sum BN reduction.
    return pl.pallas_call(
        _gemm_bn_lrelu_kernel,
        out_shape=jax.ShapeDtypeStruct((M, C), out_dtype),
        grid=(1,),
        in_specs=[
            pl.BlockSpec((M, K), lambda i: (0, 0)),
            pl.BlockSpec((K, C), lambda i: (0, 0)),
            pl.BlockSpec((1, C), lambda i: (0, 0)),
            pl.BlockSpec((1, C), lambda i: (0, 0)),
        ],
        out_specs=pl.BlockSpec((M, C), lambda i: (0, 0)),
        compiler_params=pltpu.CompilerParams(
            dimension_semantics=("arbitrary",)),
    )(cols, w_mat,
      gamma.reshape(1, C).astype(jnp.float32),
      beta.reshape(1, C).astype(jnp.float32))


# ---------------------------------------------------------------------------
# Plain-JAX glue: NHWC patch extraction (single fused XLA op) + weight matrix.
# ---------------------------------------------------------------------------
def _patches_nhwc(x, k, stride, pad):
    # x: (N, H, W, C) -> (N, OH, OW, C*k*k)
    return jax.lax.conv_general_dilated_patches(
        x, filter_shape=(k, k), window_strides=(stride, stride),
        padding=[(pad, pad), (pad, pad)],
        dimension_numbers=("NHWC", "HWIO", "NHWC"))


def _weight_matrix(w):
    """(Cout, Cin, KH, KW) torch Conv2d weight -> (Cin*KH*KW, Cout) whose row
    ordering matches _patches_nhwc by construction (same patches op)."""
    cout, cin, kh, kw = w.shape
    w_nhwc = jnp.transpose(w, (0, 2, 3, 1))             # (Cout, KH, KW, Cin)
    rows = _patches_nhwc(w_nhwc, kh, 1, 0)              # (Cout, 1, 1, Cin*KH*KW)
    return rows.reshape(cout, cin * kh * kw).T          # (Cin*KH*KW, Cout)


# ---------------------------------------------------------------------------
# Discriminator: params + forward.
# ---------------------------------------------------------------------------
def init_discriminator_params(key, ndf, nc):
    chans = [(nc, ndf), (ndf, ndf * 2), (ndf * 2, ndf * 4),
             (ndf * 4, ndf * 8), (ndf * 8, 1)]
    params = []
    for i, (cin, cout) in enumerate(chans):
        key, kw, kg, kb = jax.random.split(key, 4)
        w = 0.02 * jax.random.normal(kw, (cout, cin, 4, 4), jnp.float32)
        if LAYER_CFG[i][2]:
            gamma = 1.0 + 0.1 * jax.random.normal(kg, (cout,), jnp.float32)
            beta = 0.1 * jax.random.normal(kb, (cout,), jnp.float32)
        else:
            gamma = beta = None
        params.append((w, gamma, beta))
    return params


def discriminator_forward(params, x_nchw):
    # NCHW -> NHWC once, bf16 activations between layers, f32 final output.
    x = jnp.transpose(x_nchw, (0, 2, 3, 1)).astype(jnp.bfloat16)
    n_layers = len(params)
    for i, (w, gamma, beta) in enumerate(params):
        stride, pad, has_bn, epi = LAYER_CFG[i]
        cout, cin, k, _ = w.shape
        n, h, wd, _ = x.shape
        oh = (h + 2 * pad - k) // stride + 1
        ow = (wd + 2 * pad - k) // stride + 1
        last = i == n_layers - 1
        if oh == 1 and ow == 1 and pad == 0 and k == h and k == wd:
            # 4x4 -> 1x1 head: im2col is just a flatten ((kh,kw,c) ordering).
            cols = x.reshape(n, h * wd * cin)
            w_mat = jnp.transpose(w, (2, 3, 1, 0)).reshape(k * k * cin, cout)
        else:
            cols = _patches_nhwc(x, k, stride, pad).reshape(n * oh * ow,
                                                            cin * k * k)
            w_mat = _weight_matrix(w)
        w_mat = w_mat.astype(jnp.bfloat16)
        out_dtype = jnp.float32 if last else jnp.bfloat16
        if has_bn:
            y = gemm_bn_lrelu(cols, w_mat, gamma, beta, out_dtype)
        else:
            y = gemm_act(cols, w_mat, epi, out_dtype)
        x = y.reshape(n, oh, ow, cout)
    return jnp.transpose(x, (0, 3, 1, 2))               # back to NCHW


# Pure-JAX f32 reference (sanity check only).
def discriminator_reference(params, x):
    h = x
    for i, (w, gamma, beta) in enumerate(params):
        stride, pad, has_bn, epi = LAYER_CFG[i]
        y = jax.lax.conv_general_dilated(
            h, w, window_strides=(stride, stride),
            padding=[(pad, pad), (pad, pad)],
            dimension_numbers=("NCHW", "OIHW", "NCHW"),
            precision=jax.lax.Precision.HIGHEST)
        if has_bn:
            mean = jnp.mean(y, axis=(0, 2, 3), keepdims=True)
            var = jnp.mean(jnp.square(y - mean), axis=(0, 2, 3), keepdims=True)
            y = (y - mean) * jax.lax.rsqrt(var + BN_EPS)
            y = y * gamma[None, :, None, None] + beta[None, :, None, None]
        if epi == "sigmoid":
            y = 1.0 / (1.0 + jnp.exp(-y))
        else:
            y = jnp.where(y >= 0, y, LRELU_SLOPE * y)
        h = y
    return h


if __name__ == "__main__":
    nc, ndf, batch = 3, 16, 2
    key = jax.random.PRNGKey(0)
    kx, kp = jax.random.split(key)
    x = jax.random.normal(kx, (batch, nc, 64, 64), jnp.float32)
    params = init_discriminator_params(kp, ndf, nc)

    forward = jax.jit(discriminator_forward)
    out = jax.block_until_ready(forward(params, x))
    assert out.shape == (batch, 1, 1, 1)
    assert bool(jnp.all(jnp.isfinite(out)))

    # Correctness check against the pure-JAX f32 reference (tolerance covers
    # bf16 GEMM inputs / bf16 inter-layer activations).
    ref = discriminator_reference(params, x)
    np.testing.assert_allclose(np.asarray(out), np.asarray(ref), atol=0.05)

    print("KERNEL_OK")
</pallas_src>

<mosaic_0001>
module attributes {stable_mosaic.version = 11 : i64} {
  func.func @_gemm_act_kernel(%arg0: i32, %arg1: memref<512x48xbf16, #tpu.memory_space<vmem>>, %arg2: memref<48x16xbf16, #tpu.memory_space<vmem>>, %arg3: memref<512x16xbf16, #tpu.memory_space<vmem>>) attributes {dimension_semantics = [#tpu.dimension_semantics<parallel>], iteration_bounds = array<i64: 4>, scalar_prefetch = 0 : i64, scratch_operands = 0 : i64, tpu.core_type = #tpu.core_type<tc>, window_params = [{transform_indices = @transform_0, window_bounds = array<i64: 512, 48>}, {pipeline_mode = #tpu.pipeline_mode<synchronous>, transform_indices = @transform_1, window_bounds = array<i64: 48, 16>}, {transform_indices = @transform_2, window_bounds = array<i64: 512, 16>}]} {
    %c0 = arith.constant 0 : index
    %c0_0 = arith.constant 0 : index
    %0 = vector.load %arg1[%c0, %c0_0] : memref<512x48xbf16, #tpu.memory_space<vmem>>, vector<512x48xbf16>
    %c0_1 = arith.constant 0 : index
    %c0_2 = arith.constant 0 : index
    %1 = vector.load %arg2[%c0_1, %c0_2] : memref<48x16xbf16, #tpu.memory_space<vmem>>, vector<48x16xbf16>
    %cst = arith.constant dense<0.000000e+00> : vector<512x16xf32>
    %2 = tpu.matmul %0, %1, %cst {dimension_numbers = #tpu.dot_dimension_numbers<[1], [0], [0], [1], [0, 0, 1, 1], [], []>} : vector<512x48xbf16>, vector<48x16xbf16>, vector<512x16xf32> -> vector<512x16xf32>
    %cst_3 = arith.constant 0.000000e+00 : f32
    %3 = vector.broadcast %cst_3 : f32 to vector<512x16xf32>
    %4 = arith.cmpf oge, %2, %3 : vector<512x16xf32>
    %cst_4 = arith.constant 2.000000e-01 : f32
    %5 = vector.broadcast %cst_4 : f32 to vector<512x16xf32>
    %6 = arith.mulf %5, %2 : vector<512x16xf32>
    %7 = arith.select %4, %2, %6 : vector<512x16xi1>, vector<512x16xf32>
    %8 = arith.truncf %7 : vector<512x16xf32> to vector<512x16xbf16>
    %c0_5 = arith.constant 0 : index
    %c0_6 = arith.constant 0 : index
    %9 = vector.load %arg3[%c0_5, %c0_6] : memref<512x16xbf16, #tpu.memory_space<vmem>>, vector<512x16xbf16>
    tpu.vector_store %arg3[%c0_5, %c0_6], %8 {strides = array<i32>} : memref<512x16xbf16, #tpu.memory_space<vmem>>, vector<512x16xbf16>,
    return
  }
  func.func @transform_0(%arg0: i32) -> (i32, i32) {
    %c0_i32 = arith.constant 0 : i32
    %c0_i32_0 = arith.constant 0 : i32
    return %arg0, %c0_i32 : i32, i32
  }
  func.func @transform_1(%arg0: i32) -> (i32, i32) {
    %c0_i32 = arith.constant 0 : i32
    %c0_i32_0 = arith.constant 0 : i32
    %c0_i32_1 = arith.constant 0 : i32
    return %c0_i32, %c0_i32_0 : i32, i32
  }
  func.func @transform_2(%arg0: i32) -> (i32, i32) {
    %c0_i32 = arith.constant 0 : i32
    %c0_i32_0 = arith.constant 0 : i32
    return %arg0, %c0_i32 : i32, i32
  }
}

module attributes {stable_mosaic.version = 11 : i64} {
  func.func @_gemm_bn_lrelu_kernel(%arg0: i32, %arg1: memref<512x256xbf16, #tpu.memory_space<vmem>>, %arg2: memref<256x32xbf16, #tpu.memory_space<vmem>>, %arg3: memref<1x32xf32, #tpu.memory_space<vmem>>, %arg4: memref<1x32xf32, #tpu.memory_space<vmem>>, %arg5: memref<512x32xbf16, #tpu.memory_space<vmem>>) attributes {dimension_semantics = [#tpu.dimension_semantics<arbitrary>], iteration_bounds = array<i64: 1>, scalar_prefetch = 0 : i64, scratch_operands = 0 : i64, tpu.core_type = #tpu.core_type<tc>, window_params = [{pipeline_mode = #tpu.pipeline_mode<synchronous>, transform_indices = @transform_0, window_bounds = array<i64: 512, 256>}, {pipeline_mode = #tpu.pipeline_mode<synchronous>, transform_indices = @transform_1, window_bounds = array<i64: 256, 32>}, {pipeline_mode = #tpu.pipeline_mode<synchronous>, transform_indices = @transform_2, window_bounds = array<i64: 1, 32>}, {pipeline_mode = #tpu.pipeline_mode<synchronous>, transform_indices = @transform_3, window_bounds = array<i64: 1, 32>}, {pipeline_mode = #tpu.pipeline_mode<synchronous>, transform_indices = @transform_4, window_bounds = array<i64: 512, 32>}]} {
    %c0 = arith.constant 0 : index
    %c0_0 = arith.constant 0 : index
    %0 = vector.load %arg1[%c0, %c0_0] : memref<512x256xbf16, #tpu.memory_space<vmem>>, vector<512x256xbf16>
    %c0_1 = arith.constant 0 : index
    %c0_2 = arith.constant 0 : index
    %1 = vector.load %arg2[%c0_1, %c0_2] : memref<256x32xbf16, #tpu.memory_space<vmem>>, vector<256x32xbf16>
    %cst = arith.constant dense<0.000000e+00> : vector<512x32xf32>
    %2 = tpu.matmul %0, %1, %cst {dimension_numbers = #tpu.dot_dimension_numbers<[1], [0], [0], [1], [0, 0, 1, 1], [], []>} : vector<512x256xbf16>, vector<256x32xbf16>, vector<512x32xf32> -> vector<512x32xf32>
    %cst_3 = arith.constant dense<0.000000e+00> : vector<32xf32>
    %3 = vector.multi_reduction <add>, %2, %cst_3 [0] : vector<512x32xf32> to vector<32xf32>
    %4 = vector.shape_cast %3 : vector<32xf32> to vector<1x32xf32>
    %cst_4 = arith.constant 5.120000e+02 : f32
    %5 = vector.broadcast %cst_4 : f32 to vector<1x32xf32>
    %6 = arith.divf %4, %5 : vector<1x32xf32>
    %7 = vector.broadcast %6 : vector<1x32xf32> to vector<512x32xf32>
    %8 = arith.subf %2, %7 : vector<512x32xf32>
    %9 = arith.mulf %8, %8 : vector<512x32xf32>
    %cst_5 = arith.constant dense<0.000000e+00> : vector<32xf32>
    %10 = vector.multi_reduction <add>, %9, %cst_5 [0] : vector<512x32xf32> to vector<32xf32>
    %11 = vector.shape_cast %10 : vector<32xf32> to vector<1x32xf32>
    %cst_6 = arith.constant 5.120000e+02 : f32
    %12 = vector.broadcast %cst_6 : f32 to vector<1x32xf32>
    %13 = arith.divf %11, %12 : vector<1x32xf32>
    %14 = vector.broadcast %6 : vector<1x32xf32> to vector<512x32xf32>
    %15 = arith.subf %2, %14 : vector<512x32xf32>
    %cst_7 = arith.constant 9.99999974E-6 : f32
    %16 = vector.broadcast %cst_7 : f32 to vector<1x32xf32>
    %17 = arith.addf %13, %16 : vector<1x32xf32>
    %18 = math.rsqrt %17 : vector<1x32xf32>
    %19 = vector.broadcast %18 : vector<1x32xf32> to vector<512x32xf32>
    %20 = arith.mulf %15, %19 : vector<512x32xf32>
    %c0_8 = arith.constant 0 : index
    %c0_9 = arith.constant 0 : index
    %21 = vector.load %arg3[%c0_8, %c0_9] : memref<1x32xf32, #tpu.memory_space<vmem>>, vector<1x32xf32>
    %22 = vector.broadcast %21 : vector<1x32xf32> to vector<512x32xf32>
    %23 = arith.mulf %20, %22 : vector<512x32xf32>
    %c0_10 = arith.constant 0 : index
    %c0_11 = arith.constant 0 : index
    %24 = vector.load %arg4[%c0_10, %c0_11] : memref<1x32xf32, #tpu.memory_space<vmem>>, vector<1x32xf32>
    %25 = vector.broadcast %24 : vector<1x32xf32> to vector<512x32xf32>
    %26 = arith.addf %23, %25 : vector<512x32xf32>
    %cst_12 = arith.constant 0.000000e+00 : f32
    %27 = vector.broadcast %cst_12 : f32 to vector<512x32xf32>
    %28 = arith.cmpf oge, %26, %27 : vector<512x32xf32>
    %cst_13 = arith.constant 2.000000e-01 : f32
    %29 = vector.broadcast %cst_13 : f32 to vector<512x32xf32>
    %30 = arith.mulf %29, %26 : vector<512x32xf32>
    %31 = arith.select %28, %26, %30 : vector<512x32xi1>, vector<512x32xf32>
    %32 = arith.truncf %31 : vector<512x32xf32> to vector<512x32xbf16>
    %c0_14 = arith.constant 0 : index
    %c0_15 = arith.constant 0 : index
    %33 = vector.load %arg5[%c0_14, %c0_15] : memref<512x32xbf16, #tpu.memory_space<vmem>>, vector<512x32xbf16>
    tpu.vector_store %arg5[%c0_14, %c0_15], %32 {strides = array<i32>} : memref<512x32xbf16, #tpu.memory_space<vmem>>, vector<512x32xbf16>,
    return
  }
  func.func @transform_0(%arg0: i32) -> (i32, i32) {
    %c0_i32 = arith.constant 0 : i32
    %c0_i32_0 = arith.constant 0 : i32
    %c0_i32_1 = arith.constant 0 : i32
    return %c0_i32, %c0_i32_0 : i32, i32
  }
  func.func @transform_1(%arg0: i32) -> (i32, i32) {
    %c0_i32 = arith.constant 0 : i32
    %c0_i32_0 = arith.constant 0 : i32
    %c0_i32_1 = arith.constant 0 : i32
    return %c0_i32, %c0_i32_0 : i32, i32
  }
  func.func @transform_2(%arg0: i32) -> (i32, i32) {
    %c0_i32 = arith.constant 0 : i32
    %c0_i32_0 = arith.constant 0 : i32
    %c0_i32_1 = arith.constant 0 : i32
    return %c0_i32, %c0_i32_0 : i32, i32
  }
  func.func @transform_3(%arg0: i32) -> (i32, i32) {
    %c0_i32 = arith.constant 0 : i32
    %c0_i32_0 = arith.constant 0 : i32
    %c0_i32_1 = arith.constant 0 : i32
    return %c0_i32, %c0_i32_0 : i32, i32
  }
  func.func @transform_4(%arg0: i32) -> (i32, i32) {
    %c0_i32 = arith.constant 0 : i32
    %c0_i32_0 = arith.constant 0 : i32
    %c0_i32_1 = arith.constant 0 : i32
    return %c0_i32, %c0_i32_0 : i32, i32
  }
}

module attributes {stable_mosaic.version = 11 : i64} {
  func.func @_gemm_bn_lrelu_kernel(%arg0: i32, %arg1: memref<128x512xbf16, #tpu.memory_space<vmem>>, %arg2: memref<512x64xbf16, #tpu.memory_space<vmem>>, %arg3: memref<1x64xf32, #tpu.memory_space<vmem>>, %arg4: memref<1x64xf32, #tpu.memory_space<vmem>>, %arg5: memref<128x64xbf16, #tpu.memory_space<vmem>>) attributes {dimension_semantics = [#tpu.dimension_semantics<arbitrary>], iteration_bounds = array<i64: 1>, scalar_prefetch = 0 : i64, scratch_operands = 0 : i64, tpu.core_type = #tpu.core_type<tc>, window_params = [{pipeline_mode = #tpu.pipeline_mode<synchronous>, transform_indices = @transform_0, window_bounds = array<i64: 128, 512>}, {pipeline_mode = #tpu.pipeline_mode<synchronous>, transform_indices = @transform_1, window_bounds = array<i64: 512, 64>}, {pipeline_mode = #tpu.pipeline_mode<synchronous>, transform_indices = @transform_2, window_bounds = array<i64: 1, 64>}, {pipeline_mode = #tpu.pipeline_mode<synchronous>, transform_indices = @transform_3, window_bounds = array<i64: 1, 64>}, {pipeline_mode = #tpu.pipeline_mode<synchronous>, transform_indices = @transform_4, window_bounds = array<i64: 128, 64>}]} {
    %c0 = arith.constant 0 : index
    %c0_0 = arith.constant 0 : index
    %0 = vector.load %arg1[%c0, %c0_0] : memref<128x512xbf16, #tpu.memory_space<vmem>>, vector<128x512xbf16>
    %c0_1 = arith.constant 0 : index
    %c0_2 = arith.constant 0 : index
    %1 = vector.load %arg2[%c0_1, %c0_2] : memref<512x64xbf16, #tpu.memory_space<vmem>>, vector<512x64xbf16>
    %cst = arith.constant dense<0.000000e+00> : vector<128x64xf32>
    %2 = tpu.matmul %0, %1, %cst {dimension_numbers = #tpu.dot_dimension_numbers<[1], [0], [0], [1], [0, 0, 1, 1], [], []>} : vector<128x512xbf16>, vector<512x64xbf16>, vector<128x64xf32> -> vector<128x64xf32>
    %cst_3 = arith.constant dense<0.000000e+00> : vector<64xf32>
    %3 = vector.multi_reduction <add>, %2, %cst_3 [0] : vector<128x64xf32> to vector<64xf32>
    %4 = vector.shape_cast %3 : vector<64xf32> to vector<1x64xf32>
    %cst_4 = arith.constant 1.280000e+02 : f32
    %5 = vector.broadcast %cst_4 : f32 to vector<1x64xf32>
    %6 = arith.divf %4, %5 : vector<1x64xf32>
    %7 = vector.broadcast %6 : vector<1x64xf32> to vector<128x64xf32>
    %8 = arith.subf %2, %7 : vector<128x64xf32>
    %9 = arith.mulf %8, %8 : vector<128x64xf32>
    %cst_5 = arith.constant dense<0.000000e+00> : vector<64xf32>
    %10 = vector.multi_reduction <add>, %9, %cst_5 [0] : vector<128x64xf32> to vector<64xf32>
    %11 = vector.shape_cast %10 : vector<64xf32> to vector<1x64xf32>
    %cst_6 = arith.constant 1.280000e+02 : f32
    %12 = vector.broadcast %cst_6 : f32 to vector<1x64xf32>
    %13 = arith.divf %11, %12 : vector<1x64xf32>
    %14 = vector.broadcast %6 : vector<1x64xf32> to vector<128x64xf32>
    %15 = arith.subf %2, %14 : vector<128x64xf32>
    %cst_7 = arith.constant 9.99999974E-6 : f32
    %16 = vector.broadcast %cst_7 : f32 to vector<1x64xf32>
    %17 = arith.addf %13, %16 : vector<1x64xf32>
    %18 = math.rsqrt %17 : vector<1x64xf32>
    %19 = vector.broadcast %18 : vector<1x64xf32> to vector<128x64xf32>
    %20 = arith.mulf %15, %19 : vector<128x64xf32>
    %c0_8 = arith.constant 0 : index
    %c0_9 = arith.constant 0 : index
    %21 = vector.load %arg3[%c0_8, %c0_9] : memref<1x64xf32, #tpu.memory_space<vmem>>, vector<1x64xf32>
    %22 = vector.broadcast %21 : vector<1x64xf32> to vector<128x64xf32>
    %23 = arith.mulf %20, %22 : vector<128x64xf32>
    %c0_10 = arith.constant 0 : index
    %c0_11 = arith.constant 0 : index
    %24 = vector.load %arg4[%c0_10, %c0_11] : memref<1x64xf32, #tpu.memory_space<vmem>>, vector<1x64xf32>
    %25 = vector.broadcast %24 : vector<1x64xf32> to vector<128x64xf32>
    %26 = arith.addf %23, %25 : vector<128x64xf32>
    %cst_12 = arith.constant 0.000000e+00 : f32
    %27 = vector.broadcast %cst_12 : f32 to vector<128x64xf32>
    %28 = arith.cmpf oge, %26, %27 : vector<128x64xf32>
    %cst_13 = arith.constant 2.000000e-01 : f32
    %29 = vector.broadcast %cst_13 : f32 to vector<128x64xf32>
    %30 = arith.mulf %29, %26 : vector<128x64xf32>
    %31 = arith.select %28, %26, %30 : vector<128x64xi1>, vector<128x64xf32>
    %32 = arith.truncf %31 : vector<128x64xf32> to vector<128x64xbf16>
    %c0_14 = arith.constant 0 : index
    %c0_15 = arith.constant 0 : index
    %33 = vector.load %arg5[%c0_14, %c0_15] : memref<128x64xbf16, #tpu.memory_space<vmem>>, vector<128x64xbf16>
    tpu.vector_store %arg5[%c0_14, %c0_15], %32 {strides = array<i32>} : memref<128x64xbf16, #tpu.memory_space<vmem>>, vector<128x64xbf16>,
    return
  }
  func.func @transform_0(%arg0: i32) -> (i32, i32) {
    %c0_i32 = arith.constant 0 : i32
    %c0_i32_0 = arith.constant 0 : i32
    %c0_i32_1 = arith.constant 0 : i32
    return %c0_i32, %c0_i32_0 : i32, i32
  }
  func.func @transform_1(%arg0: i32) -> (i32, i32) {
    %c0_i32 = arith.constant 0 : i32
    %c0_i32_0 = arith.constant 0 : i32
    %c0_i32_1 = arith.constant 0 : i32
    return %c0_i32, %c0_i32_0 : i32, i32
  }
  func.func @transform_2(%arg0: i32) -> (i32, i32) {
    %c0_i32 = arith.constant 0 : i32
    %c0_i32_0 = arith.constant 0 : i32
    %c0_i32_1 = arith.constant 0 : i32
    return %c0_i32, %c0_i32_0 : i32, i32
  }
  func.func @transform_3(%arg0: i32) -> (i32, i32) {
    %c0_i32 = arith.constant 0 : i32
    %c0_i32_0 = arith.constant 0 : i32
    %c0_i32_1 = arith.constant 0 : i32
    return %c0_i32, %c0_i32_0 : i32, i32
  }
  func.func @transform_4(%arg0: i32) -> (i32, i32) {
    %c0_i32 = arith.constant 0 : i32
    %c0_i32_0 = arith.constant 0 : i32
    %c0_i32_1 = arith.constant 0 : i32
    return %c0_i32, %c0_i32_0 : i32, i32
  }
}

module attributes {stable_mosaic.version = 11 : i64} {
  func.func @_gemm_bn_lrelu_kernel(%arg0: i32, %arg1: memref<32x1024xbf16, #tpu.memory_space<vmem>>, %arg2: memref<1024x128xbf16, #tpu.memory_space<vmem>>, %arg3: memref<1x128xf32, #tpu.memory_space<vmem>>, %arg4: memref<1x128xf32, #tpu.memory_space<vmem>>, %arg5: memref<32x128xbf16, #tpu.memory_space<vmem>>) attributes {dimension_semantics = [#tpu.dimension_semantics<arbitrary>], iteration_bounds = array<i64: 1>, scalar_prefetch = 0 : i64, scratch_operands = 0 : i64, tpu.core_type = #tpu.core_type<tc>, window_params = [{pipeline_mode = #tpu.pipeline_mode<synchronous>, transform_indices = @transform_0, window_bounds = array<i64: 32, 1024>}, {pipeline_mode = #tpu.pipeline_mode<synchronous>, transform_indices = @transform_1, window_bounds = array<i64: 1024, 128>}, {pipeline_mode = #tpu.pipeline_mode<synchronous>, transform_indices = @transform_2, window_bounds = array<i64: 1, 128>}, {pipeline_mode = #tpu.pipeline_mode<synchronous>, transform_indices = @transform_3, window_bounds = array<i64: 1, 128>}, {pipeline_mode = #tpu.pipeline_mode<synchronous>, transform_indices = @transform_4, window_bounds = array<i64: 32, 128>}]} {
    %c0 = arith.constant 0 : index
    %c0_0 = arith.constant 0 : index
    %0 = vector.load %arg1[%c0, %c0_0] : memref<32x1024xbf16, #tpu.memory_space<vmem>>, vector<32x1024xbf16>
    %c0_1 = arith.constant 0 : index
    %c0_2 = arith.constant 0 : index
    %1 = vector.load %arg2[%c0_1, %c0_2] : memref<1024x128xbf16, #tpu.memory_space<vmem>>, vector<1024x128xbf16>
    %cst = arith.constant dense<0.000000e+00> : vector<32x128xf32>
    %2 = tpu.matmul %0, %1, %cst {dimension_numbers = #tpu.dot_dimension_numbers<[1], [0], [0], [1], [0, 0, 1, 1], [], []>} : vector<32x1024xbf16>, vector<1024x128xbf16>, vector<32x128xf32> -> vector<32x128xf32>
    %cst_3 = arith.constant dense<0.000000e+00> : vector<128xf32>
    %3 = vector.multi_reduction <add>, %2, %cst_3 [0] : vector<32x128xf32> to vector<128xf32>
    %4 = vector.shape_cast %3 : vector<128xf32> to vector<1x128xf32>
    %cst_4 = arith.constant 3.200000e+01 : f32
    %5 = vector.broadcast %cst_4 : f32 to vector<1x128xf32>
    %6 = arith.divf %4, %5 : vector<1x128xf32>
    %7 = vector.broadcast %6 : vector<1x128xf32> to vector<32x128xf32>
    %8 = arith.subf %2, %7 : vector<32x128xf32>
    %9 = arith.mulf %8, %8 : vector<32x128xf32>
    %cst_5 = arith.constant dense<0.000000e+00> : vector<128xf32>
    %10 = vector.multi_reduction <add>, %9, %cst_5 [0] : vector<32x128xf32> to vector<128xf32>
    %11 = vector.shape_cast %10 : vector<128xf32> to vector<1x128xf32>
    %cst_6 = arith.constant 3.200000e+01 : f32
    %12 = vector.broadcast %cst_6 : f32 to vector<1x128xf32>
    %13 = arith.divf %11, %12 : vector<1x128xf32>
    %14 = vector.broadcast %6 : vector<1x128xf32> to vector<32x128xf32>
    %15 = arith.subf %2, %14 : vector<32x128xf32>
    %cst_7 = arith.constant 9.99999974E-6 : f32
    %16 = vector.broadcast %cst_7 : f32 to vector<1x128xf32>
    %17 = arith.addf %13, %16 : vector<1x128xf32>
    %18 = math.rsqrt %17 : vector<1x128xf32>
    %19 = vector.broadcast %18 : vector<1x128xf32> to vector<32x128xf32>
    %20 = arith.mulf %15, %19 : vector<32x128xf32>
    %c0_8 = arith.constant 0 : index
    %c0_9 = arith.constant 0 : index
    %21 = vector.load %arg3[%c0_8, %c0_9] : memref<1x128xf32, #tpu.memory_space<vmem>>, vector<1x128xf32>
    %22 = vector.broadcast %21 : vector<1x128xf32> to vector<32x128xf32>
    %23 = arith.mulf %20, %22 : vector<32x128xf32>
    %c0_10 = arith.constant 0 : index
    %c0_11 = arith.constant 0 : index
    %24 = vector.load %arg4[%c0_10, %c0_11] : memref<1x128xf32, #tpu.memory_space<vmem>>, vector<1x128xf32>
    %25 = vector.broadcast %24 : vector<1x128xf32> to vector<32x128xf32>
    %26 = arith.addf %23, %25 : vector<32x128xf32>
    %cst_12 = arith.constant 0.000000e+00 : f32
    %27 = vector.broadcast %cst_12 : f32 to vector<32x128xf32>
    %28 = arith.cmpf oge, %26, %27 : vector<32x128xf32>
    %cst_13 = arith.constant 2.000000e-01 : f32
    %29 = vector.broadcast %cst_13 : f32 to vector<32x128xf32>
    %30 = arith.mulf %29, %26 : vector<32x128xf32>
    %31 = arith.select %28, %26, %30 : vector<32x128xi1>, vector<32x128xf32>
    %32 = arith.truncf %31 : vector<32x128xf32> to vector<32x128xbf16>
    %c0_14 = arith.constant 0 : index
    %c0_15 = arith.constant 0 : index
    %33 = vector.load %arg5[%c0_14, %c0_15] : memref<32x128xbf16, #tpu.memory_space<vmem>>, vector<32x128xbf16>
    tpu.vector_store %arg5[%c0_14, %c0_15], %32 {strides = array<i32>} : memref<32x128xbf16, #tpu.memory_space<vmem>>, vector<32x128xbf16>,
    return
  }
  func.func @transform_0(%arg0: i32) -> (i32, i32) {
    %c0_i32 = arith.constant 0 : i32
    %c0_i32_0 = arith.constant 0 : i32
    %c0_i32_1 = arith.constant 0 : i32
    return %c0_i32, %c0_i32_0 : i32, i32
  }
  func.func @transform_1(%arg0: i32) -> (i32, i32) {
    %c0_i32 = arith.constant 0 : i32
    %c0_i32_0 = arith.constant 0 : i32
    %c0_i32_1 = arith.constant 0 : i32
    return %c0_i32, %c0_i32_0 : i32, i32
  }
  func.func @transform_2(%arg0: i32) -> (i32, i32) {
    %c0_i32 = arith.constant 0 : i32
    %c0_i32_0 = arith.constant 0 : i32
    %c0_i32_1 = arith.constant 0 : i32
    return %c0_i32, %c0_i32_0 : i32, i32
  }
  func.func @transform_3(%arg0: i32) -> (i32, i32) {
    %c0_i32 = arith.constant 0 : i32
    %c0_i32_0 = arith.constant 0 : i32
    %c0_i32_1 = arith.constant 0 : i32
    return %c0_i32, %c0_i32_0 : i32, i32
  }
  func.func @transform_4(%arg0: i32) -> (i32, i32) {
    %c0_i32 = arith.constant 0 : i32
    %c0_i32_0 = arith.constant 0 : i32
    %c0_i32_1 = arith.constant 0 : i32
    return %c0_i32, %c0_i32_0 : i32, i32
  }
}

module attributes {stable_mosaic.version = 11 : i64} {
  func.func @_gemm_act_kernel(%arg0: i32, %arg1: memref<8x2048xbf16, #tpu.memory_space<vmem>>, %arg2: memref<2048x1xbf16, #tpu.memory_space<vmem>>, %arg3: memref<8x1xf32, #tpu.memory_space<vmem>>) attributes {dimension_semantics = [#tpu.dimension_semantics<parallel>], iteration_bounds = array<i64: 1>, scalar_prefetch = 0 : i64, scratch_operands = 0 : i64, tpu.core_type = #tpu.core_type<tc>, window_params = [{transform_indices = @transform_0, window_bounds = array<i64: 8, 2048>}, {pipeline_mode = #tpu.pipeline_mode<synchronous>, transform_indices = @transform_1, window_bounds = array<i64: 2048, 1>}, {transform_indices = @transform_2, window_bounds = array<i64: 8, 1>}]} {
    %c0 = arith.constant 0 : index
    %c0_0 = arith.constant 0 : index
    %0 = vector.load %arg1[%c0, %c0_0] : memref<8x2048xbf16, #tpu.memory_space<vmem>>, vector<8x2048xbf16>
    %c0_1 = arith.constant 0 : index
    %c0_2 = arith.constant 0 : index
    %1 = vector.load %arg2[%c0_1, %c0_2] : memref<2048x1xbf16, #tpu.memory_space<vmem>>, vector<2048x1xbf16>
    %cst = arith.constant dense<0.000000e+00> : vector<8x1xf32>
    %2 = tpu.matmul %0, %1, %cst {dimension_numbers = #tpu.dot_dimension_numbers<[1], [0], [0], [1], [0, 0, 1, 1], [], []>} : vector<8x2048xbf16>, vector<2048x1xbf16>, vector<8x1xf32> -> vector<8x1xf32>
    %cst_3 = arith.constant 0.000000e+00 : f32
    %3 = vector.broadcast %cst_3 : f32 to vector<8x1xf32>
    %4 = arith.subf %3, %2 : vector<8x1xf32>
    %5 = math.exp %4 : vector<8x1xf32>
    %cst_4 = arith.constant 1.000000e+00 : f32
    %6 = vector.broadcast %cst_4 : f32 to vector<8x1xf32>
    %7 = arith.addf %6, %5 : vector<8x1xf32>
    %cst_5 = arith.constant 1.000000e+00 : f32
    %8 = vector.broadcast %cst_5 : f32 to vector<8x1xf32>
    %9 = arith.divf %8, %7 : vector<8x1xf32>
    %c0_6 = arith.constant 0 : index
    %c0_7 = arith.constant 0 : index
    %10 = vector.load %arg3[%c0_6, %c0_7] : memref<8x1xf32, #tpu.memory_space<vmem>>, vector<8x1xf32>
    tpu.vector_store %arg3[%c0_6, %c0_7], %9 {strides = array<i32>} : memref<8x1xf32, #tpu.memory_space<vmem>>, vector<8x1xf32>,
    return
  }
  func.func @transform_0(%arg0: i32) -> (i32, i32) {
    %c0_i32 = arith.constant 0 : i32
    %c0_i32_0 = arith.constant 0 : i32
    return %arg0, %c0_i32 : i32, i32
  }
  func.func @transform_1(%arg0: i32) -> (i32, i32) {
    %c0_i32 = arith.constant 0 : i32
    %c0_i32_0 = arith.constant 0 : i32
    %c0_i32_1 = arith.constant 0 : i32
    return %c0_i32, %c0_i32_0 : i32, i32
  }
  func.func @transform_2(%arg0: i32) -> (i32, i32) {
    %c0_i32 = arith.constant 0 : i32
    %c0_i32_0 = arith.constant 0 : i32
    return %arg0, %c0_i32 : i32, i32
  }
}

</mosaic_0001>

<llo_original>
// kernel: discriminator_forward.5
$region0: #{discriminator_forward.5}
  #allocation0 [shape = 'u32[]', space=smem, size = 0x4, offset = 0x4, fixed_abs, tag = 'smem constant byte address 0x4 - core index']
  #allocation1 [shape = 'u32[144,128]{1,0:T(1,128)}', space=vmem, size = 0x12000, scoped, tag = 'internal scratch']
  %s0 = inlined_call_operand.vmem [shape: bf16[2048,48], index: 0, kind: input, shape index: {}]
  %s1 = inlined_call_operand.vmem [shape: bf16[48,16], index: 1, kind: input, shape index: {}]
  %s2 = inlined_call_operand.vmem [shape: bf16[2048,16], index: 2, kind: output, shape index: {}]
  %s3 = sld [smem:[#allocation0]]
  $region41: #{discriminator_forward.5} parent=0
    _
  %s5 = ssub.s32 1, %s3
  %s6 = scalar_select 0, %s5, %s3
  loop: start=0, step=1, limit=6
  $region2: #{discriminator_forward.5} parent=0 // loop_pre_header
    _
  $region3: #{discriminator_forward.5} parent=0 // loop_header
    %s8 = sphi 0, %s12
    %p9 = scmp.ge.s32.totalorder %s8, 6
    %s18 = sphi 0, %s20
    %s21 = sphi 0, %s18
    %s22 = sphi 0, %s21
    %s38 = sphi 0, %s22
    %s42 = sphi 0, %s42
    %s44 = sphi 0, %s42
    %s45 = sphi 0, %s44
    %s59 = sphi 0, %s45
    %s65 = sphi 0, %s67
    %s68 = sphi 0, %s65
    %s69 = sphi 0, %s68
    %s85 = sphi 0, %s69
  $region4: #{discriminator_forward.5} parent=0 // loop_header_branch
    %11 = sbr.rel (%p9) target = $region8
  $region5: #{discriminator_forward.5} parent=0 // loop_body
    %s13 = ssub.s32 %s8, 1
    %s14 = ssub.s32 %s8, 2
    %s15 = sadd.s32 %s8, 1
    %s16 = ssub.s32 %s8, %s15
    %p17 = scmp.eq.s32.totalorder %s16, 0
    %s19 = sadd.s32 %s18, 1
    %s20 = scalar_select %p17, %s18, %s19
    %p23 = pneg %p17
    %p24 = scmp.eq.s32.totalorder %s8, 3
    %p25 = por %p23, %p24
    %p26 = scmp.ne.s32.totalorder %s18, %s21
    %p27 = scmp.eq.s32.totalorder %s8, 0
    %p28 = por %p26, %p27
    %p29 = scmp.ne.s32.totalorder %s18, %s21
    %p30 = scmp.eq.s32.totalorder %s13, 3
    %p31 = por %p29, %p30
    %p32 = scmp.ne.s32.totalorder %s21, %s22
    %p33 = scmp.eq.s32.totalorder %s13, 0
    %p34 = por %p32, %p33
    %p35 = scmp.ne.s32.totalorder %s21, %s22
    %p36 = scmp.eq.s32.totalorder %s14, 3
    %p37 = por %p35, %p36
    %p39 = scmp.ne.s32.totalorder %s22, %s38
    %p40 = scmp.eq.s32.totalorder %s14, 0
    %p41 = por %p39, %p40
    %s43 = sadd.s32 %s42, 1
    %p46 = scmp.eq.s32.totalorder %s8, 3
    %p47 = scmp.ne.s32.totalorder %s42, %s44
    %p48 = scmp.eq.s32.totalorder %s8, 0
    %p49 = por %p47, %p48
    %p50 = scmp.ne.s32.totalorder %s42, %s44
    %p51 = scmp.eq.s32.totalorder %s13, 3
    %p52 = por %p50, %p51
    %p53 = scmp.ne.s32.totalorder %s44, %s45
    %p54 = scmp.eq.s32.totalorder %s13, 0
    %p55 = por %p53, %p54
    %p56 = scmp.ne.s32.totalorder %s44, %s45
    %p57 = scmp.eq.s32.totalorder %s14, 3
    %p58 = por %p56, %p57
    %p60 = scmp.ne.s32.totalorder %s45, %s59
    %p61 = scmp.eq.s32.totalorder %s14, 0
    %p62 = por %p60, %p61
    %s63 = ssub.s32 %s8, %s15
    %p64 = scmp.eq.s32.totalorder %s63, 0
    %s66 = sadd.s32 %s65, 1
    %s67 = scalar_select %p64, %s65, %s66
    %p70 = pneg %p64
    %p71 = scmp.eq.s32.totalorder %s8, 3
    %p72 = por %p70, %p71
    %p73 = scmp.ne.s32.totalorder %s65, %s68
    %p74 = scmp.eq.s32.totalorder %s8, 0
    %p75 = por %p73, %p74
    %p76 = scmp.ne.s32.totalorder %s65, %s68
    %p77 = scmp.eq.s32.totalorder %s13, 3
    %p78 = por %p76, %p77
    %p79 = scmp.ne.s32.totalorder %s68, %s69
    %p80 = scmp.eq.s32.totalorder %s13, 0
    %p81 = por %p79, %p80
    %p82 = scmp.ne.s32.totalorder %s68, %s69
    %p83 = scmp.eq.s32.totalorder %s14, 3
    %p84 = por %p82, %p83
    %p86 = scmp.ne.s32.totalorder %s69, %s85
    %p87 = scmp.eq.s32.totalorder %s14, 0
    %p88 = por %p86, %p87
    %p89 = scmp.le.s32.totalorder 1, %s8
    %p90 = scmp.lt.s32.totalorder %s8, 5
    %p91 = pnand %p89, %p90
    %p92 = pneg %p91
    // Predicated region
    $region9: #{discriminator_forward.5} parent=5 // pred_check
      _
    $region10: #{discriminator_forward.5} parent=5 // pred_check_branch
      %94 = sbr.rel (%p91) target = $region12
    $region11: #{discriminator_forward.5} parent=5 // pred_region
      %s95 = ssub.s32 %s8, 1
      // Predicated region
      $region13: #{discriminator_forward.5} parent=11 // pred_check
        %p96 = pneg %p55
      $region14: #{discriminator_forward.5} parent=11 // pred_check_branch
        %98 = sbr.rel (%p96) target = $region16
      $region15: #{discriminator_forward.5} parent=11 // pred_region
        _
      $region16: #{discriminator_forward.5} parent=11 // pred_fallthru
        _
    $region12: #{discriminator_forward.5} parent=5 // pred_fallthru
      _
    %p99 = scmp.lt.s32.totalorder %s8, 4
    // Predicated region
    $region17: #{discriminator_forward.5} parent=5 // pred_check
      %p100 = pneg %p99
    $region18: #{discriminator_forward.5} parent=5 // pred_check_branch
      %102 = sbr.rel (%p100) target = $region20
    $region19: #{discriminator_forward.5} parent=5 // pred_region
      // Predicated region
      $region21: #{discriminator_forward.5} parent=19 // pred_check
        %p103 = pneg %p28
      $region22: #{discriminator_forward.5} parent=19 // pred_check_branch
        %105 = sbr.rel (%p103) target = $region24
      $region23: #{discriminator_forward.5} parent=19 // pred_region
        %s106 = smul.u32 64, %s8
        %p107 = scmp.lt.s32.totalorder %s106, 255
        %s108 = scalar_select %p107, %s106, 255
        %s109 = smul.addr %s108, 4
        %s110 = scalar_lea.vmem %s0, %s109
        %s111 = smul.u32 64, %s8
      $region24: #{discriminator_forward.5} parent=19 // pred_fallthru
        _
    $region20: #{discriminator_forward.5} parent=5 // pred_fallthru
      _
    %p112 = scmp.le.s32.totalorder 1, %s8
    %p113 = scmp.lt.s32.totalorder %s8, 5
    %p114 = pnand %p112, %p113
    %p115 = pneg %p114
    // Predicated region
    $region25: #{discriminator_forward.5} parent=5 // pred_check
      _
    $region26: #{discriminator_forward.5} parent=5 // pred_check_branch
      %117 = sbr.rel (%p114) target = $region28
    $region27: #{discriminator_forward.5} parent=5 // pred_region
      %s118 = ssub.s32 %s8, 1
      %s119 = smul.u32 64, %s13
      %p120 = scmp.lt.s32.totalorder %s119, 255
      %s121 = scalar_select %p120, %s119, 255
      %s122 = smul.addr %s121, 4
      %s123 = scalar_lea.vmem %s0, %s122
      %p124 = pneg %p34
      %p125 = pneg %p31
      %p126 = pneg %p55
      %p127 = pneg %p52
      %p128 = pneg %p81
      %p129 = pneg %p78
      %s130 = smul.u32 64, %s13
      %p131 = scmp.lt.s32.totalorder %s130, 255
      %s132 = scalar_select %p131, %s130, 255
      %s133 = smul.addr %s132, 4
      %s134 = scalar_lea.vmem %s2, %s133
      %s135 = smul.u32 64, %s13
      %p136 = scmp.lt.s32.totalorder %s135, 255
      %s137 = scalar_select %p136, %s135, 255
      %s138 = smul.addr %s137, 4
      %s139 = scalar_lea.vmem %s0, %s138
      %s140 = smul.u32 64, %s13
      %s141 = smul.u32 64, %s13
      %p142 = scmp.lt.s32.totalorder %s141, 255
      %s143 = scalar_select %p142, %s141, 255
      %s144 = smul.addr %s143, 4
      %s145 = scalar_lea.vmem %s2, %s144
      %s146 = smul.u32 64, %s13
      %v148 = vld [vmem:[%s139] sm:$0xf]
      %v149 = vld [vmem:[%s139 + $0x4] sm:$0xf]
      %v150 = vld [vmem:[%s139 + $0x8] sm:$0xf]
      %v151 = vld [vmem:[%s139 + $0xc] sm:$0xf]
      %v152 = vld [vmem:[%s139 + $0x10] sm:$0xf]
      %v153 = vld [vmem:[%s139 + $0x14] sm:$0xf]
      %v154 = vld [vmem:[%s139 + $0x18] sm:$0xf]
      %v155 = vld [vmem:[%s139 + $0x1c] sm:$0xf]
      %v156 = vld [vmem:[%s139 + $0x20] sm:$0xf]
      %v157 = vld [vmem:[%s139 + $0x24] sm:$0xf]
      %v158 = vld [vmem:[%s139 + $0x28] sm:$0xf]
      %v159 = vld [vmem:[%s139 + $0x2c] sm:$0xf]
      %v160 = vld [vmem:[%s139 + $0x30] sm:$0xf]
      %v161 = vld [vmem:[%s139 + $0x34] sm:$0xf]
      %v162 = vld [vmem:[%s139 + $0x38] sm:$0xf]
      %v163 = vld [vmem:[%s139 + $0x3c] sm:$0xf]
      %v164 = vld [vmem:[%s139 + $0x40] sm:$0xf]
      %v165 = vld [vmem:[%s139 + $0x44] sm:$0xf]
      %v166 = vld [vmem:[%s139 + $0x48] sm:$0xf]
      %v167 = vld [vmem:[%s139 + $0x4c] sm:$0xf]
      %v168 = vld [vmem:[%s139 + $0x50] sm:$0xf]
      %v169 = vld [vmem:[%s139 + $0x54] sm:$0xf]
      %v170 = vld [vmem:[%s139 + $0x58] sm:$0xf]
      %v171 = vld [vmem:[%s139 + $0x5c] sm:$0xf]
      %v172 = vld [vmem:[%s139 + $0x60] sm:$0xf]
      %v173 = vld [vmem:[%s139 + $0x64] sm:$0xf]
      %v174 = vld [vmem:[%s139 + $0x68] sm:$0xf]
      %v175 = vld [vmem:[%s139 + $0x6c] sm:$0xf]
      %v176 = vld [vmem:[%s139 + $0x70] sm:$0xf]
      %v177 = vld [vmem:[%s139 + $0x74] sm:$0xf]
      %v178 = vld [vmem:[%s139 + $0x78] sm:$0xf]
      %v179 = vld [vmem:[%s139 + $0x7c] sm:$0xf]
      %v180 = vld [vmem:[%s139 + $0x80] sm:$0xf]
      %v181 = vld [vmem:[%s139 + $0x84] sm:$0xf]
      %v182 = vld [vmem:[%s139 + $0x88] sm:$0xf]
      %v183 = vld [vmem:[%s139 + $0x8c] sm:$0xf]
      %v184 = vld [vmem:[%s139 + $0x90] sm:$0xf]
      %v185 = vld [vmem:[%s139 + $0x94] sm:$0xf]
      %v186 = vld [vmem:[%s139 + $0x98] sm:$0xf]
      %v187 = vld [vmem:[%s139 + $0x9c] sm:$0xf]
      %v188 = vld [vmem:[%s139 + $0xa0] sm:$0xf]
      %v189 = vld [vmem:[%s139 + $0xa4] sm:$0xf]
      %v190 = vld [vmem:[%s139 + $0xa8] sm:$0xf]
      %v191 = vld [vmem:[%s139 + $0xac] sm:$0xf]
      %v192 = vld [vmem:[%s139 + $0xb0] sm:$0xf]
      %v193 = vld [vmem:[%s139 + $0xb4] sm:$0xf]
      %v194 = vld [vmem:[%s139 + $0xb8] sm:$0xf]
      %v195 = vld [vmem:[%s139 + $0xbc] sm:$0xf]
      %v196 = vld [vmem:[%s139 + $0xc0] sm:$0xf]
      %v197 = vld [vmem:[%s139 + $0xc4] sm:$0xf]
      %v198 = vld [vmem:[%s139 + $0xc8] sm:$0xf]
      %v199 = vld [vmem:[%s139 + $0xcc] sm:$0xf]
      %v200 = vld [vmem:[%s139 + $0xd0] sm:$0xf]
      %v201 = vld [vmem:[%s139 + $0xd4] sm:$0xf]
      %v202 = vld [vmem:[%s139 + $0xd8] sm:$0xf]
      %v203 = vld [vmem:[%s139 + $0xdc] sm:$0xf]
      %v204 = vld [vmem:[%s139 + $0xe0] sm:$0xf]
      %v205 = vld [vmem:[%s139 + $0xe4] sm:$0xf]
      %v206 = vld [vmem:[%s139 + $0xe8] sm:$0xf]
      %v207 = vld [vmem:[%s139 + $0xec] sm:$0xf]
      %v208 = vld [vmem:[%s139 + $0xf0] sm:$0xf]
      %v209 = vld [vmem:[%s139 + $0xf4] sm:$0xf]
      %v210 = vld [vmem:[%s139 + $0xf8] sm:$0xf]
      %v211 = vld [vmem:[%s139 + $0xfc] sm:$0xf]
      %v212 = vld [vmem:[%s1] sm:$0xf]
      %v213 = vld [vmem:[%s1 + $0x4] sm:$0xf]
      %v214 = vld [vmem:[%s1 + $0x8] sm:$0xf]
      %v215 = vld [vmem:[%s1 + $0xc] sm:$0xf]
      %v216 = vld [vmem:[%s1 + $0x10] sm:$0xf]
      %v217 = vld [vmem:[%s1 + $0x14] sm:$0xf]
      %v282 = vunpack.c.l.b16 %v148
      %v283 = vunpack.c.l.b16 %v149
      %v284 = vunpack.c.l.b16 %v150
      %v285 = vunpack.c.l.b16 %v151
      %v286 = vunpack.c.l.b16 %v152
      %v287 = vunpack.c.l.b16 %v153
      %v288 = vunpack.c.l.b16 %v154
      %v289 = vunpack.c.l.b16 %v155
      %v290 = vunpack.c.l.b16 %v156
      %v291 = vunpack.c.l.b16 %v157
      %v292 = vunpack.c.l.b16 %v158
      %v293 = vunpack.c.l.b16 %v159
      %v294 = vunpack.c.l.b16 %v160
      %v295 = vunpack.c.l.b16 %v161
      %v296 = vunpack.c.l.b16 %v162
      %v297 = vunpack.c.l.b16 %v163
      %v298 = vunpack.c.l.b16 %v164
      %v299 = vunpack.c.l.b16 %v165
      %v300 = vunpack.c.l.b16 %v166
      %v301 = vunpack.c.l.b16 %v167
      %v302 = vunpack.c.l.b16 %v168
      %v303 = vunpack.c.l.b16 %v169
      %v304 = vunpack.c.l.b16 %v170
      %v305 = vunpack.c.l.b16 %v171
      %v306 = vunpack.c.l.b16 %v172
      %v307 = vunpack.c.l.b16 %v173
      %v308 = vunpack.c.l.b16 %v174
      %v309 = vunpack.c.l.b16 %v175
      %v310 = vunpack.c.l.b16 %v176
      %v311 = vunpack.c.l.b16 %v177
      %v312 = vunpack.c.l.b16 %v178
      %v313 = vunpack.c.l.b16 %v179
      %v314 = vunpack.c.l.b16 %v180
      %v315 = vunpack.c.l.b16 %v181
      %v316 = vunpack.c.l.b16 %v182
      %v317 = vunpack.c.l.b16 %v183
      %v318 = vunpack.c.l.b16 %v184
      %v319 = vunpack.c.l.b16 %v185
      %v320 = vunpack.c.l.b16 %v186
      %v321 = vunpack.c.l.b16 %v187
      %v322 = vunpack.c.l.b16 %v188
      %v323 = vunpack.c.l.b16 %v189
      %v324 = vunpack.c.l.b16 %v190
      %v325 = vunpack.c.l.b16 %v191
      %v326 = vunpack.c.l.b16 %v192
      %v327 = vunpack.c.l.b16 %v193
      %v328 = vunpack.c.l.b16 %v194
      %v329 = vunpack.c.l.b16 %v195
      %v330 = vunpack.c.l.b16 %v196
      %v331 = vunpack.c.l.b16 %v197
      %v332 = vunpack.c.l.b16 %v198
      %v333 = vunpack.c.l.b16 %v199
      %v334 = vunpack.c.l.b16 %v200
      %v335 = vunpack.c.l.b16 %v201
      %v336 = vunpack.c.l.b16 %v202
      %v337 = vunpack.c.l.b16 %v203
      %v338 = vunpack.c.l.b16 %v204
      %v339 = vunpack.c.l.b16 %v205
      %v340 = vunpack.c.l.b16 %v206
      %v341 = vunpack.c.l.b16 %v207
      %v342 = vunpack.c.l.b16 %v208
      %v343 = vunpack.c.l.b16 %v209
      %v344 = vunpack.c.l.b16 %v210
      %v345 = vunpack.c.l.b16 %v211
      %v346 = vpack.c.b16 %v283, %v282
      %v347 = vpack.c.b16 %v285, %v284
      %v348 = vpack.c.b16 %v287, %v286
      %v349 = vpack.c.b16 %v289, %v288
      %v350 = vpack.c.b16 %v291, %v290
      %v351 = vpack.c.b16 %v293, %v292
      %v352 = vpack.c.b16 %v295, %v294
      %v353 = vpack.c.b16 %v297, %v296
      %v354 = vpack.c.b16 %v299, %v298
      %v355 = vpack.c.b16 %v301, %v300
      %v356 = vpack.c.b16 %v303, %v302
      %v357 = vpack.c.b16 %v305, %v304
      %v358 = vpack.c.b16 %v307, %v306
      %v359 = vpack.c.b16 %v309, %v308
      %v360 = vpack.c.b16 %v311, %v310
      %v361 = vpack.c.b16 %v313, %v312
      %v362 = vpack.c.b16 %v315, %v314
      %v363 = vpack.c.b16 %v317, %v316
      %v364 = vpack.c.b16 %v319, %v318
      %v365 = vpack.c.b16 %v321, %v320
      %v366 = vpack.c.b16 %v323, %v322
      %v367 = vpack.c.b16 %v325, %v324
      %v368 = vpack.c.b16 %v327, %v326
      %v369 = vpack.c.b16 %v329, %v328
      %v370 = vpack.c.b16 %v331, %v330
      %v371 = vpack.c.b16 %v333, %v332
      %v372 = vpack.c.b16 %v335, %v334
      %v373 = vpack.c.b16 %v337, %v336
      %v374 = vpack.c.b16 %v339, %v338
      %v375 = vpack.c.b16 %v341, %v340
      %v376 = vpack.c.b16 %v343, %v342
      %v377 = vpack.c.b16 %v345, %v344
      %v384 = vunpack.c.l.b16 %v212
      %v385 = vunpack.c.l.b16 %v213
      %v386 = vunpack.c.l.b16 %v214
      %v387 = vunpack.c.l.b16 %v215
      %v388 = vunpack.c.l.b16 %v216
      %v389 = vunpack.c.l.b16 %v217
      %v390 = vpack.c.b16 %v385, %v384
      %v391 = vpack.c.b16 %v387, %v386
      %v392 = vpack.c.b16 %v389, %v388
      %vm396 = vcmask 392192
      %v398 = vsel %vm396, %v346, 0
      %v401 = vsel %vm396, %v347, 0
      %v404 = vsel %vm396, %v348, 0
      %v407 = vsel %vm396, %v349, 0
      %v410 = vsel %vm396, %v350, 0
      %v413 = vsel %vm396, %v351, 0
      %v416 = vsel %vm396, %v352, 0
      %v419 = vsel %vm396, %v353, 0
      %v422 = vsel %vm396, %v354, 0
      %v425 = vsel %vm396, %v355, 0
      %v428 = vsel %vm396, %v356, 0
      %v431 = vsel %vm396, %v357, 0
      %v434 = vsel %vm396, %v358, 0
      %v437 = vsel %vm396, %v359, 0
      %v440 = vsel %vm396, %v360, 0
      %v443 = vsel %vm396, %v361, 0
      %v446 = vsel %vm396, %v362, 0
      %v449 = vsel %vm396, %v363, 0
      %v452 = vsel %vm396, %v364, 0
      %v455 = vsel %vm396, %v365, 0
      %v458 = vsel %vm396, %v366, 0
      %v461 = vsel %vm396, %v367, 0
      %v464 = vsel %vm396, %v368, 0
      %v467 = vsel %vm396, %v369, 0
      %v470 = vsel %vm396, %v370, 0
      %v473 = vsel %vm396, %v371, 0
      %v476 = vsel %vm396, %v372, 0
      %v479 = vsel %vm396, %v373, 0
      %v482 = vsel %vm396, %v374, 0
      %v485 = vsel %vm396, %v375, 0
      %v488 = vsel %vm396, %v376, 0
      %v491 = vsel %vm396, %v377, 0
      %493 = vmatprep.subr.bf16.mxu0 0
      %494 = vmatpush1.bf16.msra.mxu0 %v390
      %495 = vmatprep.subr.bf16.mxu0 0
      %496 = vmatpush1.bf16.msra.mxu0 %v391
      %497 = vmatprep.subr.bf16.mxu0 0
      %498 = vmatpush1.bf16.msra.mxu0 %v392
      %499 = vmatprep.subr.bf16.mxu0 0
      %500 = vmatpush1.bf16.msra.mxu0 0
      %501 = vmatprep.subr.bf16.mxu0 0
      %502 = vmatpush1.bf16.msra.mxu0 0
      %503 = vmatprep.subr.bf16.mxu0 0
      %504 = vmatpush1.bf16.msra.mxu0 0
      %505 = vmatprep.subr.bf16.mxu0 0
      %506 = vmatpush1.bf16.msra.mxu0 0
      %507 = vmatprep.subr.bf16.mxu0 0
      %508 = vmatpush1.bf16.msra.mxu0 0
      %509 = vmatprep.subr.bf16.mxu0 0
      %510 = vmatpush1.bf16.msra.mxu0 0
      %511 = vmatprep.subr.bf16.mxu0 0
      %512 = vmatpush1.bf16.msra.mxu0 0
      %513 = vmatprep.subr.bf16.mxu0 0
      %514 = vmatpush1.bf16.msra.mxu0 0
      %515 = vmatprep.subr.bf16.mxu0 0
      %516 = vmatpush1.bf16.msra.mxu0 0
      %517 = vmatprep.subr.bf16.mxu0 0
      %518 = vmatpush1.bf16.msra.mxu0 0
      %519 = vmatprep.subr.bf16.mxu0 0
      %520 = vmatpush1.bf16.msra.mxu0 0
      %521 = vmatprep.subr.bf16.mxu0 0
      %522 = vmatpush1.bf16.msra.mxu0 0
      %523 = vmatprep.subr.bf16.mxu0 0
      %524 = vmatpush1.bf16.msra.mxu0 0
      %525 = vmatprep.mubr.bf16.mxu0 0
      %526 = vmatmul.mubr.bf16.gmra.mrb[0].mxu0 %v398
      %v527 = vpop.f32.mrb[0].mxu0
      %v528 = vadd.f32 0.0, %v527
      %v529 = vpop.f32.mrb[0].mxu0
      %v530 = vpop.f32.mrb[0].mxu0
      %v531 = vadd.f32 0.0, %v530
      %v532 = vpop.f32.mrb[0].mxu0
      %533 = vmatprep.mubr.bf16.mxu0 0
      %534 = vmatmul.mubr.bf16.gmra.mrb[0].mxu0 %v401
      %v535 = vpop.f32.mrb[0].mxu0
      %v536 = vadd.f32 0.0, %v535
      %v537 = vpop.f32.mrb[0].mxu0
      %v538 = vpop.f32.mrb[0].mxu0
      %v539 = vadd.f32 0.0, %v538
      %v540 = vpop.f32.mrb[0].mxu0
      %541 = vmatprep.mubr.bf16.mxu0 0
      %542 = vmatmul.mubr.bf16.gmra.mrb[0].mxu0 %v404
      %v543 = vpop.f32.mrb[0].mxu0
      %v544 = vadd.f32 0.0, %v543
      %v545 = vpop.f32.mrb[0].mxu0
      %v546 = vpop.f32.mrb[0].mxu0
      %v547 = vadd.f32 0.0, %v546
      %v548 = vpop.f32.mrb[0].mxu0
      %549 = vmatprep.mubr.bf16.mxu0 0
      %550 = vmatmul.mubr.bf16.gmra.mrb[0].mxu0 %v407
      %v551 = vpop.f32.mrb[0].mxu0
      %v552 = vadd.f32 0.0, %v551
      %v553 = vpop.f32.mrb[0].mxu0
      %v554 = vpop.f32.mrb[0].mxu0
      %v555 = vadd.f32 0.0, %v554
      %v556 = vpop.f32.mrb[0].mxu0
      %557 = vmatprep.mubr.bf16.mxu0 0
      %558 = vmatmul.mubr.bf16.gmra.mrb[0].mxu0 %v410
      %v559 = vpop.f32.mrb[0].mxu0
      %v560 = vadd.f32 0.0, %v559
      %v561 = vpop.f32.mrb[0].mxu0
      %v562 = vpop.f32.mrb[0].mxu0
      %v563 = vadd.f32 0.0, %v562
      %v564 = vpop.f32.mrb[0].mxu0
      %565 = vmatprep.mubr.bf16.mxu0 0
      %566 = vmatmul.mubr.bf16.gmra.mrb[0].mxu0 %v413
      %v567 = vpop.f32.mrb[0].mxu0
      %v568 = vadd.f32 0.0, %v567
      %v569 = vpop.f32.mrb[0].mxu0
      %v570 = vpop.f32.mrb[0].mxu0
      %v571 = vadd.f32 0.0, %v570
      %v572 = vpop.f32.mrb[0].mxu0
      %573 = vmatprep.mubr.bf16.mxu0 0
      %574 = vmatmul.mubr.bf16.gmra.mrb[0].mxu0 %v416
      %v575 = vpop.f32.mrb[0].mxu0
      %v576 = vadd.f32 0.0, %v575
      %v577 = vpop.f32.mrb[0].mxu0
      %v578 = vpop.f32.mrb[0].mxu0
      %v579 = vadd.f32 0.0, %v578
      %v580 = vpop.f32.mrb[0].mxu0
      %581 = vmatprep.mubr.bf16.mxu0 0
      %582 = vmatmul.mubr.bf16.gmra.mrb[0].mxu0 %v419
      %v583 = vpop.f32.mrb[0].mxu0
      %v584 = vadd.f32 0.0, %v583
      %v585 = vpop.f32.mrb[0].mxu0
      %v586 = vpop.f32.mrb[0].mxu0
      %v587 = vadd.f32 0.0, %v586
      %v588 = vpop.f32.mrb[0].mxu0
      %589 = vmatprep.mubr.bf16.mxu0 0
      %590 = vmatmul.mubr.bf16.gmra.mrb[0].mxu0 %v422
      %v591 = vpop.f32.mrb[0].mxu0
      %v592 = vadd.f32 0.0, %v591
      %v593 = vpop.f32.mrb[0].mxu0
      %v594 = vpop.f32.mrb[0].mxu0
      %v595 = vadd.f32 0.0, %v594
      %v596 = vpop.f32.mrb[0].mxu0
      %597 = vmatprep.mubr.bf16.mxu0 0
      %598 = vmatmul.mubr.bf16.gmra.mrb[0].mxu0 %v425
      %v599 = vpop.f32.mrb[0].mxu0
      %v600 = vadd.f32 0.0, %v599
      %v601 = vpop.f32.mrb[0].mxu0
      %v602 = vpop.f32.mrb[0].mxu0
      %v603 = vadd.f32 0.0, %v602
      %v604 = vpop.f32.mrb[0].mxu0
      %605 = vmatprep.mubr.bf16.mxu0 0
      %606 = vmatmul.mubr.bf16.gmra.mrb[0].mxu0 %v428
      %v607 = vpop.f32.mrb[0].mxu0
      %v608 = vadd.f32 0.0, %v607
      %v609 = vpop.f32.mrb[0].mxu0
      %v610 = vpop.f32.mrb[0].mxu0
      %v611 = vadd.f32 0.0, %v610
      %v612 = vpop.f32.mrb[0].mxu0
      %613 = vmatprep.mubr.bf16.mxu0 0
      %614 = vmatmul.mubr.bf16.gmra.mrb[0].mxu0 %v431
      %v615 = vpop.f32.mrb[0].mxu0
      %v616 = vadd.f32 0.0, %v615
      %v617 = vpop.f32.mrb[0].mxu0
      %v618 = vpop.f32.mrb[0].mxu0
      %v619 = vadd.f32 0.0, %v618
      %v620 = vpop.f32.mrb[0].mxu0
      %621 = vmatprep.mubr.bf16.mxu0 0
      %622 = vmatmul.mubr.bf16.gmra.mrb[0].mxu0 %v434
      %v623 = vpop.f32.mrb[0].mxu0
      %v624 = vadd.f32 0.0, %v623
      %v625 = vpop.f32.mrb[0].mxu0
      %v626 = vpop.f32.mrb[0].mxu0
      %v627 = vadd.f32 0.0, %v626
      %v628 = vpop.f32.mrb[0].mxu0
      %629 = vmatprep.mubr.bf16.mxu0 0
      %630 = vmatmul.mubr.bf16.gmra.mrb[0].mxu0 %v437
      %v631 = vpop.f32.mrb[0].mxu0
      %v632 = vadd.f32 0.0, %v631
      %v633 = vpop.f32.mrb[0].mxu0
      %v634 = vpop.f32.mrb[0].mxu0
      %v635 = vadd.f32 0.0, %v634
      %v636 = vpop.f32.mrb[0].mxu0
      %637 = vmatprep.mubr.bf16.mxu0 0
      %638 = vmatmul.mubr.bf16.gmra.mrb[0].mxu0 %v440
      %v639 = vpop.f32.mrb[0].mxu0
      %v640 = vadd.f32 0.0, %v639
      %v641 = vpop.f32.mrb[0].mxu0
      %v642 = vpop.f32.mrb[0].mxu0
      %v643 = vadd.f32 0.0, %v642
      %v644 = vpop.f32.mrb[0].mxu0
      %645 = vmatprep.mubr.bf16.mxu0 0
      %646 = vmatmul.mubr.bf16.gmra.mrb[0].mxu0 %v443
      %v647 = vpop.f32.mrb[0].mxu0
      %v648 = vadd.f32 0.0, %v647
      %v649 = vpop.f32.mrb[0].mxu0
      %v650 = vpop.f32.mrb[0].mxu0
      %v651 = vadd.f32 0.0, %v650
      %v652 = vpop.f32.mrb[0].mxu0
      %653 = vmatprep.mubr.bf16.mxu0 0
      %654 = vmatmul.mubr.bf16.gmra.mrb[0].mxu0 %v446
      %v655 = vpop.f32.mrb[0].mxu0
      %v656 = vadd.f32 0.0, %v655
      %v657 = vpop.f32.mrb[0].mxu0
      %v658 = vpop.f32.mrb[0].mxu0
      %v659 = vadd.f32 0.0, %v658
      %v660 = vpop.f32.mrb[0].mxu0
      %661 = vmatprep.mubr.bf16.mxu0 0
      %662 = vmatmul.mubr.bf16.gmra.mrb[0].mxu0 %v449
      %v663 = vpop.f32.mrb[0].mxu0
      %v664 = vadd.f32 0.0, %v663
      %v665 = vpop.f32.mrb[0].mxu0
      %v666 = vpop.f32.mrb[0].mxu0
      %v667 = vadd.f32 0.0, %v666
      %v668 = vpop.f32.mrb[0].mxu0
      %669 = vmatprep.mubr.bf16.mxu0 0
      %670 = vmatmul.mubr.bf16.gmra.mrb[0].mxu0 %v452
      %v671 = vpop.f32.mrb[0].mxu0
      %v672 = vadd.f32 0.0, %v671
      %v673 = vpop.f32.mrb[0].mxu0
      %v674 = vpop.f32.mrb[0].mxu0
      %v675 = vadd.f32 0.0, %v674
      %v676 = vpop.f32.mrb[0].mxu0
      %677 = vmatprep.mubr.bf16.mxu0 0
      %678 = vmatmul.mubr.bf16.gmra.mrb[0].mxu0 %v455
      %v679 = vpop.f32.mrb[0].mxu0
      %v680 = vadd.f32 0.0, %v679
      %v681 = vpop.f32.mrb[0].mxu0
      %v682 = vpop.f32.mrb[0].mxu0
      %v683 = vadd.f32 0.0, %v682
      %v684 = vpop.f32.mrb[0].mxu0
      %685 = vmatprep.mubr.bf16.mxu0 0
      %686 = vmatmul.mubr.bf16.gmra.mrb[0].mxu0 %v458
      %v687 = vpop.f32.mrb[0].mxu0
      %v688 = vadd.f32 0.0, %v687
      %v689 = vpop.f32.mrb[0].mxu0
      %v690 = vpop.f32.mrb[0].mxu0
      %v691 = vadd.f32 0.0, %v690
      %v692 = vpop.f32.mrb[0].mxu0
      %693 = vmatprep.mubr.bf16.mxu0 0
      %694 = vmatmul.mubr.bf16.gmra.mrb[0].mxu0 %v461
      %v695 = vpop.f32.mrb[0].mxu0
      %v696 = vadd.f32 0.0, %v695
      %v697 = vpop.f32.mrb[0].mxu0
      %v698 = vpop.f32.mrb[0].mxu0
      %v699 = vadd.f32 0.0, %v698
      %v700 = vpop.f32.mrb[0].mxu0
      %701 = vmatprep.mubr.bf16.mxu0 0
      %702 = vmatmul.mubr.bf16.gmra.mrb[0].mxu0 %v464
      %v703 = vpop.f32.mrb[0].mxu0
      %v704 = vadd.f32 0.0, %v703
      %v705 = vpop.f32.mrb[0].mxu0
      %v706 = vpop.f32.mrb[0].mxu0
      %v707 = vadd.f32 0.0, %v706
      %v708 = vpop.f32.mrb[0].mxu0
      %709 = vmatprep.mubr.bf16.mxu0 0
      %710 = vmatmul.mubr.bf16.gmra.mrb[0].mxu0 %v467
      %v711 = vpop.f32.mrb[0].mxu0
      %v712 = vadd.f32 0.0, %v711
      %v713 = vpop.f32.mrb[0].mxu0
      %v714 = vpop.f32.mrb[0].mxu0
      %v715 = vadd.f32 0.0, %v714
      %v716 = vpop.f32.mrb[0].mxu0
      %717 = vmatprep.mubr.bf16.mxu0 0
      %718 = vmatmul.mubr.bf16.gmra.mrb[0].mxu0 %v470
      %v719 = vpop.f32.mrb[0].mxu0
      %v720 = vadd.f32 0.0, %v719
      %v721 = vpop.f32.mrb[0].mxu0
      %v722 = vpop.f32.mrb[0].mxu0
      %v723 = vadd.f32 0.0, %v722
      %v724 = vpop.f32.mrb[0].mxu0
      %725 = vmatprep.mubr.bf16.mxu0 0
      %726 = vmatmul.mubr.bf16.gmra.mrb[0].mxu0 %v473
      %v727 = vpop.f32.mrb[0].mxu0
      %v728 = vadd.f32 0.0, %v727
      %v729 = vpop.f32.mrb[0].mxu0
      %v730 = vpop.f32.mrb[0].mxu0
      %v731 = vadd.f32 0.0, %v730
      %v732 = vpop.f32.mrb[0].mxu0
      %733 = vmatprep.mubr.bf16.mxu0 0
      %734 = vmatmul.mubr.bf16.gmra.mrb[0].mxu0 %v476
      %v735 = vpop.f32.mrb[0].mxu0
      %v736 = vadd.f32 0.0, %v735
      %v737 = vpop.f32.mrb[0].mxu0
      %v738 = vpop.f32.mrb[0].mxu0
      %v739 = vadd.f32 0.0, %v738
      %v740 = vpop.f32.mrb[0].mxu0
      %741 = vmatprep.mubr.bf16.mxu0 0
      %742 = vmatmul.mubr.bf16.gmra.mrb[0].mxu0 %v479
      %v743 = vpop.f32.mrb[0].mxu0
      %v744 = vadd.f32 0.0, %v743
      %v745 = vpop.f32.mrb[0].mxu0
      %v746 = vpop.f32.mrb[0].mxu0
      %v747 = vadd.f32 0.0, %v746
      %v748 = vpop.f32.mrb[0].mxu0
      %749 = vmatprep.mubr.bf16.mxu0 0
      %750 = vmatmul.mubr.bf16.gmra.mrb[0].mxu0 %v482
      %v751 = vpop.f32.mrb[0].mxu0
      %v752 = vadd.f32 0.0, %v751
      %v753 = vpop.f32.mrb[0].mxu0
      %v754 = vpop.f32.mrb[0].mxu0
      %v755 = vadd.f32 0.0, %v754
      %v756 = vpop.f32.mrb[0].mxu0
      %757 = vmatprep.mubr.bf16.mxu0 0
      %758 = vmatmul.mubr.bf16.gmra.mrb[0].mxu0 %v485
      %v759 = vpop.f32.mrb[0].mxu0
      %v760 = vadd.f32 0.0, %v759
      %v761 = vpop.f32.mrb[0].mxu0
      %v762 = vpop.f32.mrb[0].mxu0
      %v763 = vadd.f32 0.0, %v762
      %v764 = vpop.f32.mrb[0].mxu0
      %765 = vmatprep.mubr.bf16.mxu0 0
      %766 = vmatmul.mubr.bf16.gmra.mrb[0].mxu0 %v488
      %v767 = vpop.f32.mrb[0].mxu0
      %v768 = vadd.f32 0.0, %v767
      %v769 = vpop.f32.mrb[0].mxu0
      %v770 = vpop.f32.mrb[0].mxu0
      %v771 = vadd.f32 0.0, %v770
      %v772 = vpop.f32.mrb[0].mxu0
      %773 = vmatprep.mubr.bf16.mxu0 0
      %774 = vmatmul.mubr.bf16.gmra.mrb[0].mxu0 %v491
      %v775 = vpop.f32.mrb[0].mxu0
      %v776 = vadd.f32 0.0, %v775
      %v777 = vpop.f32.mrb[0].mxu0
      %v778 = vpop.f32.mrb[0].mxu0
      %v779 = vadd.f32 0.0, %v778
      %v780 = vpop.f32.mrb[0].mxu0
      %781 = vdwg.mxu0
      %vm782 = vcmp.ge.f32.partialorder %v528, 0.0
      %vm783 = vcmp.ge.f32.partialorder %v531, 0.0
      %vm784 = vcmp.ge.f32.partialorder %v536, 0.0
      %vm785 = vcmp.ge.f32.partialorder %v539, 0.0
      %vm786 = vcmp.ge.f32.partialorder %v544, 0.0
      %vm787 = vcmp.ge.f32.partialorder %v547, 0.0
      %vm788 = vcmp.ge.f32.partialorder %v552, 0.0
      %vm789 = vcmp.ge.f32.partialorder %v555, 0.0
      %vm790 = vcmp.ge.f32.partialorder %v560, 0.0
      %vm791 = vcmp.ge.f32.partialorder %v563, 0.0
      %vm792 = vcmp.ge.f32.partialorder %v568, 0.0
      %vm793 = vcmp.ge.f32.partialorder %v571, 0.0
      %vm794 = vcmp.ge.f32.partialorder %v576, 0.0
      %vm795 = vcmp.ge.f32.partialorder %v579, 0.0
      %vm796 = vcmp.ge.f32.partialorder %v584, 0.0
      %vm797 = vcmp.ge.f32.partialorder %v587, 0.0
      %vm798 = vcmp.ge.f32.partialorder %v592, 0.0
      %vm799 = vcmp.ge.f32.partialorder %v595, 0.0
      %vm800 = vcmp.ge.f32.partialorder %v600, 0.0
      %vm801 = vcmp.ge.f32.partialorder %v603, 0.0
      %vm802 = vcmp.ge.f32.partialorder %v608, 0.0
      %vm803 = vcmp.ge.f32.partialorder %v611, 0.0
      %vm804 = vcmp.ge.f32.partialorder %v616, 0.0
      %vm805 = vcmp.ge.f32.partialorder %v619, 0.0
      %vm806 = vcmp.ge.f32.partialorder %v624, 0.0
      %vm807 = vcmp.ge.f32.partialorder %v627, 0.0
      %vm808 = vcmp.ge.f32.partialorder %v632, 0.0
      %vm809 = vcmp.ge.f32.partialorder %v635, 0.0
      %vm810 = vcmp.ge.f32.partialorder %v640, 0.0
      %vm811 = vcmp.ge.f32.partialorder %v643, 0.0
      %vm812 = vcmp.ge.f32.partialorder %v648, 0.0
      %vm813 = vcmp.ge.f32.partialorder %v651, 0.0
      %vm814 = vcmp.ge.f32.partialorder %v656, 0.0
      %vm815 = vcmp.ge.f32.partialorder %v659, 0.0
      %vm816 = vcmp.ge.f32.partialorder %v664, 0.0
      %vm817 = vcmp.ge.f32.partialorder %v667, 0.0
      %vm818 = vcmp.ge.f32.partialorder %v672, 0.0
      %vm819 = vcmp.ge.f32.partialorder %v675, 0.0
      %vm820 = vcmp.ge.f32.partialorder %v680, 0.0
      %vm821 = vcmp.ge.f32.partialorder %v683, 0.0
      %vm822 = vcmp.ge.f32.partialorder %v688, 0.0
      %vm823 = vcmp.ge.f32.partialorder %v691, 0.0
      %vm824 = vcmp.ge.f32.partialorder %v696, 0.0
      %vm825 = vcmp.ge.f32.partialorder %v699, 0.0
      %vm826 = vcmp.ge.f32.partialorder %v704, 0.0
      %vm827 = vcmp.ge.f32.partialorder %v707, 0.0
      %vm828 = vcmp.ge.f32.partialorder %v712, 0.0
      %vm829 = vcmp.ge.f32.partialorder %v715, 0.0
      %vm830 = vcmp.ge.f32.partialorder %v720, 0.0
      %vm831 = vcmp.ge.f32.partialorder %v723, 0.0
      %vm832 = vcmp.ge.f32.partialorder %v728, 0.0
      %vm833 = vcmp.ge.f32.partialorder %v731, 0.0
      %vm834 = vcmp.ge.f32.partialorder %v736, 0.0
      %vm835 = vcmp.ge.f32.partialorder %v739, 0.0
      %vm836 = vcmp.ge.f32.partialorder %v744, 0.0
      %vm837 = vcmp.ge.f32.partialorder %v747, 0.0
      %vm838 = vcmp.ge.f32.partialorder %v752, 0.0
      %vm839 = vcmp.ge.f32.partialorder %v755, 0.0
      %vm840 = vcmp.ge.f32.partialorder %v760, 0.0
      %vm841 = vcmp.ge.f32.partialorder %v763, 0.0
      %vm842 = vcmp.ge.f32.partialorder %v768, 0.0
      %vm843 = vcmp.ge.f32.partialorder %v771, 0.0
      %vm844 = vcmp.ge.f32.partialorder %v776, 0.0
      %vm845 = vcmp.ge.f32.partialorder %v779, 0.0
      %v846 = vmul.f32 %v528, 0.2
      %v847 = vmul.f32 %v531, 0.2
      %v848 = vmul.f32 %v536, 0.2
      %v849 = vmul.f32 %v539, 0.2
      %v850 = vmul.f32 %v544, 0.2
      %v851 = vmul.f32 %v547, 0.2
      %v852 = vmul.f32 %v552, 0.2
      %v853 = vmul.f32 %v555, 0.2
      %v854 = vmul.f32 %v560, 0.2
      %v855 = vmul.f32 %v563, 0.2
      %v856 = vmul.f32 %v568, 0.2
      %v857 = vmul.f32 %v571, 0.2
      %v858 = vmul.f32 %v576, 0.2
      %v859 = vmul.f32 %v579, 0.2
      %v860 = vmul.f32 %v584, 0.2
      %v861 = vmul.f32 %v587, 0.2
      %v862 = vmul.f32 %v592, 0.2
      %v863 = vmul.f32 %v595, 0.2
      %v864 = vmul.f32 %v600, 0.2
      %v865 = vmul.f32 %v603, 0.2
      %v866 = vmul.f32 %v608, 0.2
      %v867 = vmul.f32 %v611, 0.2
      %v868 = vmul.f32 %v616, 0.2
      %v869 = vmul.f32 %v619, 0.2
      %v870 = vmul.f32 %v624, 0.2
      %v871 = vmul.f32 %v627, 0.2
      %v872 = vmul.f32 %v632, 0.2
      %v873 = vmul.f32 %v635, 0.2
      %v874 = vmul.f32 %v640, 0.2
      %v875 = vmul.f32 %v643, 0.2
      %v876 = vmul.f32 %v648, 0.2
      %v877 = vmul.f32 %v651, 0.2
      %v878 = vmul.f32 %v656, 0.2
      %v879 = vmul.f32 %v659, 0.2
      %v880 = vmul.f32 %v664, 0.2
      %v881 = vmul.f32 %v667, 0.2
      %v882 = vmul.f32 %v672, 0.2
      %v883 = vmul.f32 %v675, 0.2
      %v884 = vmul.f32 %v680, 0.2
      %v885 = vmul.f32 %v683, 0.2
      %v886 = vmul.f32 %v688, 0.2
      %v887 = vmul.f32 %v691, 0.2
      %v888 = vmul.f32 %v696, 0.2
      %v889 = vmul.f32 %v699, 0.2
      %v890 = vmul.f32 %v704, 0.2
      %v891 = vmul.f32 %v707, 0.2
      %v892 = vmul.f32 %v712, 0.2
      %v893 = vmul.f32 %v715, 0.2
      %v894 = vmul.f32 %v720, 0.2
      %v895 = vmul.f32 %v723, 0.2
      %v896 = vmul.f32 %v728, 0.2
      %v897 = vmul.f32 %v731, 0.2
      %v898 = vmul.f32 %v736, 0.2
      %v899 = vmul.f32 %v739, 0.2
      %v900 = vmul.f32 %v744, 0.2
      %v901 = vmul.f32 %v747, 0.2
      %v902 = vmul.f32 %v752, 0.2
      %v903 = vmul.f32 %v755, 0.2
      %v904 = vmul.f32 %v760, 0.2
      %v905 = vmul.f32 %v763, 0.2
      %v906 = vmul.f32 %v768, 0.2
      %v907 = vmul.f32 %v771, 0.2
      %v908 = vmul.f32 %v776, 0.2
      %v909 = vmul.f32 %v779, 0.2
      %v910 = vsel %vm782, %v528, %v846
      %v911 = vsel %vm783, %v531, %v847
      %v912 = vsel %vm784, %v536, %v848
      %v913 = vsel %vm785, %v539, %v849
      %v914 = vsel %vm786, %v544, %v850
      %v915 = vsel %vm787, %v547, %v851
      %v916 = vsel %vm788, %v552, %v852
      %v917 = vsel %vm789, %v555, %v853
      %v918 = vsel %vm790, %v560, %v854
      %v919 = vsel %vm791, %v563, %v855
      %v920 = vsel %vm792, %v568, %v856
      %v921 = vsel %vm793, %v571, %v857
      %v922 = vsel %vm794, %v576, %v858
      %v923 = vsel %vm795, %v579, %v859
      %v924 = vsel %vm796, %v584, %v860
      %v925 = vsel %vm797, %v587, %v861
      %v926 = vsel %vm798, %v592, %v862
      %v927 = vsel %vm799, %v595, %v863
      %v928 = vsel %vm800, %v600, %v864
      %v929 = vsel %vm801, %v603, %v865
      %v930 = vsel %vm802, %v608, %v866
      %v931 = vsel %vm803, %v611, %v867
      %v932 = vsel %vm804, %v616, %v868
      %v933 = vsel %vm805, %v619, %v869
      %v934 = vsel %vm806, %v624, %v870
      %v935 = vsel %vm807, %v627, %v871
      %v936 = vsel %vm808, %v632, %v872
      %v937 = vsel %vm809, %v635, %v873
      %v938 = vsel %vm810, %v640, %v874
      %v939 = vsel %vm811, %v643, %v875
      %v940 = vsel %vm812, %v648, %v876
      %v941 = vsel %vm813, %v651, %v877
      %v942 = vsel %vm814, %v656, %v878
      %v943 = vsel %vm815, %v659, %v879
      %v944 = vsel %vm816, %v664, %v880
      %v945 = vsel %vm817, %v667, %v881
      %v946 = vsel %vm818, %v672, %v882
      %v947 = vsel %vm819, %v675, %v883
      %v948 = vsel %vm820, %v680, %v884
      %v949 = vsel %vm821, %v683, %v885
      %v950 = vsel %vm822, %v688, %v886
      %v951 = vsel %vm823, %v691, %v887
      %v952 = vsel %vm824, %v696, %v888
      %v953 = vsel %vm825, %v699, %v889
      %v954 = vsel %vm826, %v704, %v890
      %v955 = vsel %vm827, %v707, %v891
      %v956 = vsel %vm828, %v712, %v892
      %v957 = vsel %vm829, %v715, %v893
      %v958 = vsel %vm830, %v720, %v894
      %v959 = vsel %vm831, %v723, %v895
      %v960 = vsel %vm832, %v728, %v896
      %v961 = vsel %vm833, %v731, %v897
      %v962 = vsel %vm834, %v736, %v898
      %v963 = vsel %vm835, %v739, %v899
      %v964 = vsel %vm836, %v744, %v900
      %v965 = vsel %vm837, %v747, %v901
      %v966 = vsel %vm838, %v752, %v902
      %v967 = vsel %vm839, %v755, %v903
      %v968 = vsel %vm840, %v760, %v904
      %v969 = vsel %vm841, %v763, %v905
      %v970 = vsel %vm842, %v768, %v906
      %v971 = vsel %vm843, %v771, %v907
      %v972 = vsel %vm844, %v776, %v908
      %v973 = vsel %vm845, %v779, %v909
      %v974 = vpack.c.bf16 %v911, %v910
      %v975 = vpack.c.bf16 %v913, %v912
      %v976 = vpack.c.bf16 %v915, %v914
      %v977 = vpack.c.bf16 %v917, %v916
      %v978 = vpack.c.bf16 %v919, %v918
      %v979 = vpack.c.bf16 %v921, %v920
      %v980 = vpack.c.bf16 %v923, %v922
      %v981 = vpack.c.bf16 %v925, %v924
      %v982 = vpack.c.bf16 %v927, %v926
      %v983 = vpack.c.bf16 %v929, %v928
      %v984 = vpack.c.bf16 %v931, %v930
      %v985 = vpack.c.bf16 %v933, %v932
      %v986 = vpack.c.bf16 %v935, %v934
      %v987 = vpack.c.bf16 %v937, %v936
      %v988 = vpack.c.bf16 %v939, %v938
      %v989 = vpack.c.bf16 %v941, %v940
      %v990 = vpack.c.bf16 %v943, %v942
      %v991 = vpack.c.bf16 %v945, %v944
      %v992 = vpack.c.bf16 %v947, %v946
      %v993 = vpack.c.bf16 %v949, %v948
      %v994 = vpack.c.bf16 %v951, %v950
      %v995 = vpack.c.bf16 %v953, %v952
      %v996 = vpack.c.bf16 %v955, %v954
      %v997 = vpack.c.bf16 %v957, %v956
      %v998 = vpack.c.bf16 %v959, %v958
      %v999 = vpack.c.bf16 %v961, %v960
      %v1000 = vpack.c.bf16 %v963, %v962
      %v1001 = vpack.c.bf16 %v965, %v964
      %v1002 = vpack.c.bf16 %v967, %v966
      %v1003 = vpack.c.bf16 %v969, %v968
      %v1004 = vpack.c.bf16 %v971, %v970
      %v1005 = vpack.c.bf16 %v973, %v972
      %v1038 = vunpack.c.l.b16 %v974
      %v1039 = vunpack.c.h.b16 %v974
      %v1040 = vunpack.c.l.b16 %v975
      %v1041 = vunpack.c.h.b16 %v975
      %v1042 = vunpack.c.l.b16 %v976
      %v1043 = vunpack.c.h.b16 %v976
      %v1044 = vunpack.c.l.b16 %v977
      %v1045 = vunpack.c.h.b16 %v977
      %v1046 = vunpack.c.l.b16 %v978
      %v1047 = vunpack.c.h.b16 %v978
      %v1048 = vunpack.c.l.b16 %v979
      %v1049 = vunpack.c.h.b16 %v979
      %v1050 = vunpack.c.l.b16 %v980
      %v1051 = vunpack.c.h.b16 %v980
      %v1052 = vunpack.c.l.b16 %v981
      %v1053 = vunpack.c.h.b16 %v981
      %v1054 = vunpack.c.l.b16 %v982
      %v1055 = vunpack.c.h.b16 %v982
      %v1056 = vunpack.c.l.b16 %v983
      %v1057 = vunpack.c.h.b16 %v983
      %v1058 = vunpack.c.l.b16 %v984
      %v1059 = vunpack.c.h.b16 %v984
      %v1060 = vunpack.c.l.b16 %v985
      %v1061 = vunpack.c.h.b16 %v985
      %v1062 = vunpack.c.l.b16 %v986
      %v1063 = vunpack.c.h.b16 %v986
      %v1064 = vunpack.c.l.b16 %v987
      %v1065 = vunpack.c.h.b16 %v987
      %v1066 = vunpack.c.l.b16 %v988
      %v1067 = vunpack.c.h.b16 %v988
      %v1068 = vunpack.c.l.b16 %v989
      %v1069 = vunpack.c.h.b16 %v989
      %v1070 = vunpack.c.l.b16 %v990
      %v1071 = vunpack.c.h.b16 %v990
      %v1072 = vunpack.c.l.b16 %v991
      %v1073 = vunpack.c.h.b16 %v991
      %v1074 = vunpack.c.l.b16 %v992
      %v1075 = vunpack.c.h.b16 %v992
      %v1076 = vunpack.c.l.b16 %v993
      %v1077 = vunpack.c.h.b16 %v993
      %v1078 = vunpack.c.l.b16 %v994
      %v1079 = vunpack.c.h.b16 %v994
      %v1080 = vunpack.c.l.b16 %v995
      %v1081 = vunpack.c.h.b16 %v995
      %v1082 = vunpack.c.l.b16 %v996
      %v1083 = vunpack.c.h.b16 %v996
      %v1084 = vunpack.c.l.b16 %v997
      %v1085 = vunpack.c.h.b16 %v997
      %v1086 = vunpack.c.l.b16 %v998
      %v1087 = vunpack.c.h.b16 %v998
      %v1088 = vunpack.c.l.b16 %v999
      %v1089 = vunpack.c.h.b16 %v999
      %v1090 = vunpack.c.l.b16 %v1000
      %v1091 = vunpack.c.h.b16 %v1000
      %v1092 = vunpack.c.l.b16 %v1001
      %v1093 = vunpack.c.h.b16 %v1001
      %v1094 = vunpack.c.l.b16 %v1002
      %v1095 = vunpack.c.h.b16 %v1002
      %v1096 = vunpack.c.l.b16 %v1003
      %v1097 = vunpack.c.h.b16 %v1003
      %v1098 = vunpack.c.l.b16 %v1004
      %v1099 = vunpack.c.h.b16 %v1004
      %v1100 = vunpack.c.l.b16 %v1005
      %v1101 = vunpack.c.h.b16 %v1005
      %v1102 = vpack.c.b16 %v1038, %v1038
      %v1103 = vpack.c.b16 %v1039, %v1039
      %v1104 = vpack.c.b16 %v1040, %v1040
      %v1105 = vpack.c.b16 %v1041, %v1041
      %v1106 = vpack.c.b16 %v1042, %v1042
      %v1107 = vpack.c.b16 %v1043, %v1043
      %v1108 = vpack.c.b16 %v1044, %v1044
      %v1109 = vpack.c.b16 %v1045, %v1045
      %v1110 = vpack.c.b16 %v1046, %v1046
      %v1111 = vpack.c.b16 %v1047, %v1047
      %v1112 = vpack.c.b16 %v1048, %v1048
      %v1113 = vpack.c.b16 %v1049, %v1049
      %v1114 = vpack.c.b16 %v1050, %v1050
      %v1115 = vpack.c.b16 %v1051, %v1051
      %v1116 = vpack.c.b16 %v1052, %v1052
      %v1117 = vpack.c.b16 %v1053, %v1053
      %v1118 = vpack.c.b16 %v1054, %v1054
      %v1119 = vpack.c.b16 %v1055, %v1055
      %v1120 = vpack.c.b16 %v1056, %v1056
      %v1121 = vpack.c.b16 %v1057, %v1057
      %v1122 = vpack.c.b16 %v1058, %v1058
      %v1123 = vpack.c.b16 %v1059, %v1059
      %v1124 = vpack.c.b16 %v1060, %v1060
      %v1125 = vpack.c.b16 %v1061, %v1061
      %v1126 = vpack.c.b16 %v1062, %v1062
      %v1127 = vpack.c.b16 %v1063, %v1063
      %v1128 = vpack.c.b16 %v1064, %v1064
      %v1129 = vpack.c.b16 %v1065, %v1065
      %v1130 = vpack.c.b16 %v1066, %v1066
      %v1131 = vpack.c.b16 %v1067, %v1067
      %v1132 = vpack.c.b16 %v1068, %v1068
      %v1133 = vpack.c.b16 %v1069, %v1069
      %v1134 = vpack.c.b16 %v1070, %v1070
      %v1135 = vpack.c.b16 %v1071, %v1071
      %v1136 = vpack.c.b16 %v1072, %v1072
      %v1137 = vpack.c.b16 %v1073, %v1073
      %v1138 = vpack.c.b16 %v1074, %v1074
      %v1139 = vpack.c.b16 %v1075, %v1075
      %v1140 = vpack.c.b16 %v1076, %v1076
      %v1141 = vpack.c.b16 %v1077, %v1077
      %v1142 = vpack.c.b16 %v1078, %v1078
      %v1143 = vpack.c.b16 %v1079, %v1079
      %v1144 = vpack.c.b16 %v1080, %v1080
      %v1145 = vpack.c.b16 %v1081, %v1081
      %v1146 = vpack.c.b16 %v1082, %v1082
      %v1147 = vpack.c.b16 %v1083, %v1083
      %v1148 = vpack.c.b16 %v1084, %v1084
      %v1149 = vpack.c.b16 %v1085, %v1085
      %v1150 = vpack.c.b16 %v1086, %v1086
      %v1151 = vpack.c.b16 %v1087, %v1087
      %v1152 = vpack.c.b16 %v1088, %v1088
      %v1153 = vpack.c.b16 %v1089, %v1089
      %v1154 = vpack.c.b16 %v1090, %v1090
      %v1155 = vpack.c.b16 %v1091, %v1091
      %v1156 = vpack.c.b16 %v1092, %v1092
      %v1157 = vpack.c.b16 %v1093, %v1093
      %v1158 = vpack.c.b16 %v1094, %v1094
      %v1159 = vpack.c.b16 %v1095, %v1095
      %v1160 = vpack.c.b16 %v1096, %v1096
      %v1161 = vpack.c.b16 %v1097, %v1097
      %v1162 = vpack.c.b16 %v1098, %v1098
      %v1163 = vpack.c.b16 %v1099, %v1099
      %v1164 = vpack.c.b16 %v1100, %v1100
      %v1165 = vpack.c.b16 %v1101, %v1101
      %vm1230 = vcmask 125952
      %1231 = vst.msk [vmem:[%s145] sm:$0xf] %vm1230, %v1102
      %1232 = vst.msk [vmem:[%s145 + $0x4] sm:$0xf] %vm1230, %v1103
      %1233 = vst.msk [vmem:[%s145 + $0x8] sm:$0xf] %vm1230, %v1104
      %1234 = vst.msk [vmem:[%s145 + $0xc] sm:$0xf] %vm1230, %v1105
      %1235 = vst.msk [vmem:[%s145 + $0x10] sm:$0xf] %vm1230, %v1106
      %1236 = vst.msk [vmem:[%s145 + $0x14] sm:$0xf] %vm1230, %v1107
      %1237 = vst.msk [vmem:[%s145 + $0x18] sm:$0xf] %vm1230, %v1108
      %1238 = vst.msk [vmem:[%s145 + $0x1c] sm:$0xf] %vm1230, %v1109
      %1239 = vst.msk [vmem:[%s145 + $0x20] sm:$0xf] %vm1230, %v1110
      %1240 = vst.msk [vmem:[%s145 + $0x24] sm:$0xf] %vm1230, %v1111
      %1241 = vst.msk [vmem:[%s145 + $0x28] sm:$0xf] %vm1230, %v1112
      %1242 = vst.msk [vmem:[%s145 + $0x2c] sm:$0xf] %vm1230, %v1113
      %1243 = vst.msk [vmem:[%s145 + $0x30] sm:$0xf] %vm1230, %v1114
      %1244 = vst.msk [vmem:[%s145 + $0x34] sm:$0xf] %vm1230, %v1115
      %1245 = vst.msk [vmem:[%s145 + $0x38] sm:$0xf] %vm1230, %v1116
      %1246 = vst.msk [vmem:[%s145 + $0x3c] sm:$0xf] %vm1230, %v1117
      %1247 = vst.msk [vmem:[%s145 + $0x40] sm:$0xf] %vm1230, %v1118
      %1248 = vst.msk [vmem:[%s145 + $0x44] sm:$0xf] %vm1230, %v1119
      %1249 = vst.msk [vmem:[%s145 + $0x48] sm:$0xf] %vm1230, %v1120
      %1250 = vst.msk [vmem:[%s145 + $0x4c] sm:$0xf] %vm1230, %v1121
      %1251 = vst.msk [vmem:[%s145 + $0x50] sm:$0xf] %vm1230, %v1122
      %1252 = vst.msk [vmem:[%s145 + $0x54] sm:$0xf] %vm1230, %v1123
      %1253 = vst.msk [vmem:[%s145 + $0x58] sm:$0xf] %vm1230, %v1124
      %1254 = vst.msk [vmem:[%s145 + $0x5c] sm:$0xf] %vm1230, %v1125
      %1255 = vst.msk [vmem:[%s145 + $0x60] sm:$0xf] %vm1230, %v1126
      %1256 = vst.msk [vmem:[%s145 + $0x64] sm:$0xf] %vm1230, %v1127
      %1257 = vst.msk [vmem:[%s145 + $0x68] sm:$0xf] %vm1230, %v1128
      %1258 = vst.msk [vmem:[%s145 + $0x6c] sm:$0xf] %vm1230, %v1129
      %1259 = vst.msk [vmem:[%s145 + $0x70] sm:$0xf] %vm1230, %v1130
      %1260 = vst.msk [vmem:[%s145 + $0x74] sm:$0xf] %vm1230, %v1131
      %1261 = vst.msk [vmem:[%s145 + $0x78] sm:$0xf] %vm1230, %v1132
      %1262 = vst.msk [vmem:[%s145 + $0x7c] sm:$0xf] %vm1230, %v1133
      %1263 = vst.msk [vmem:[%s145 + $0x80] sm:$0xf] %vm1230, %v1134
      %1264 = vst.msk [vmem:[%s145 + $0x84] sm:$0xf] %vm1230, %v1135
      %1265 = vst.msk [vmem:[%s145 + $0x88] sm:$0xf] %vm1230, %v1136
      %1266 = vst.msk [vmem:[%s145 + $0x8c] sm:$0xf] %vm1230, %v1137
      %1267 = vst.msk [vmem:[%s145 + $0x90] sm:$0xf] %vm1230, %v1138
      %1268 = vst.msk [vmem:[%s145 + $0x94] sm:$0xf] %vm1230, %v1139
      %1269 = vst.msk [vmem:[%s145 + $0x98] sm:$0xf] %vm1230, %v1140
      %1270 = vst.msk [vmem:[%s145 + $0x9c] sm:$0xf] %vm1230, %v1141
      %1271 = vst.msk [vmem:[%s145 + $0xa0] sm:$0xf] %vm1230, %v1142
      %1272 = vst.msk [vmem:[%s145 + $0xa4] sm:$0xf] %vm1230, %v1143
      %1273 = vst.msk [vmem:[%s145 + $0xa8] sm:$0xf] %vm1230, %v1144
      %1274 = vst.msk [vmem:[%s145 + $0xac] sm:$0xf] %vm1230, %v1145
      %1275 = vst.msk [vmem:[%s145 + $0xb0] sm:$0xf] %vm1230, %v1146
      %1276 = vst.msk [vmem:[%s145 + $0xb4] sm:$0xf] %vm1230, %v1147
      %1277 = vst.msk [vmem:[%s145 + $0xb8] sm:$0xf] %vm1230, %v1148
      %1278 = vst.msk [vmem:[%s145 + $0xbc] sm:$0xf] %vm1230, %v1149
      %1279 = vst.msk [vmem:[%s145 + $0xc0] sm:$0xf] %vm1230, %v1150
      %1280 = vst.msk [vmem:[%s145 + $0xc4] sm:$0xf] %vm1230, %v1151
      %1281 = vst.msk [vmem:[%s145 + $0xc8] sm:$0xf] %vm1230, %v1152
      %1282 = vst.msk [vmem:[%s145 + $0xcc] sm:$0xf] %vm1230, %v1153
      %1283 = vst.msk [vmem:[%s145 + $0xd0] sm:$0xf] %vm1230, %v1154
      %1284 = vst.msk [vmem:[%s145 + $0xd4] sm:$0xf] %vm1230, %v1155
      %1285 = vst.msk [vmem:[%s145 + $0xd8] sm:$0xf] %vm1230, %v1156
      %1286 = vst.msk [vmem:[%s145 + $0xdc] sm:$0xf] %vm1230, %v1157
      %1287 = vst.msk [vmem:[%s145 + $0xe0] sm:$0xf] %vm1230, %v1158
      %1288 = vst.msk [vmem:[%s145 + $0xe4] sm:$0xf] %vm1230, %v1159
      %1289 = vst.msk [vmem:[%s145 + $0xe8] sm:$0xf] %vm1230, %v1160
      %1290 = vst.msk [vmem:[%s145 + $0xec] sm:$0xf] %vm1230, %v1161
      %1291 = vst.msk [vmem:[%s145 + $0xf0] sm:$0xf] %vm1230, %v1162
      %1292 = vst.msk [vmem:[%s145 + $0xf4] sm:$0xf] %vm1230, %v1163
      %1293 = vst.msk [vmem:[%s145 + $0xf8] sm:$0xf] %vm1230, %v1164
      %1294 = vst.msk [vmem:[%s145 + $0xfc] sm:$0xf] %vm1230, %v1165
      %s1295 = smul.u32 64, %s13
      %p1296 = scmp.lt.s32.totalorder %s1295, 255
      %s1297 = scalar_select %p1296, %s1295, 255
      %s1298 = smul.addr %s1297, 4
      %s1299 = scalar_lea.vmem %s2, %s1298
      // Predicated region
      $region29: #{discriminator_forward.5} parent=27 // pred_check
        %p1300 = pneg %p78
      $region30: #{discriminator_forward.5} parent=27 // pred_check_branch
        %1302 = sbr.rel (%p1300) target = $region32
      $region31: #{discriminator_forward.5} parent=27 // pred_region
        %s1303 = smul.u32 64, %s13
      $region32: #{discriminator_forward.5} parent=27 // pred_fallthru
        _
    $region28: #{discriminator_forward.5} parent=5 // pred_fallthru
      _
    %p1304 = scmp.le.s32.totalorder 2, %s8
    // Predicated region
    $region33: #{discriminator_forward.5} parent=5 // pred_check
      %p1305 = pneg %p1304
    $region34: #{discriminator_forward.5} parent=5 // pred_check_branch
      %1307 = sbr.rel (%p1305) target = $region36
    $region35: #{discriminator_forward.5} parent=5 // pred_region
      %s1308 = ssub.s32 %s8, 2
      // Predicated region
      $region37: #{discriminator_forward.5} parent=35 // pred_check
        %p1309 = pneg %p84
      $region38: #{discriminator_forward.5} parent=35 // pred_check_branch
        %1311 = sbr.rel (%p1309) target = $region40
      $region39: #{discriminator_forward.5} parent=35 // pred_region
        %s1312 = smul.u32 64, %s14
        %p1313 = scmp.lt.s32.totalorder %s1312, 255
        %s1314 = scalar_select %p1313, %s1312, 255
        %s1315 = smul.addr %s1314, 4
        %s1316 = scalar_lea.vmem %s2, %s1315
      $region40: #{discriminator_forward.5} parent=35 // pred_fallthru
        _
    $region36: #{discriminator_forward.5} parent=5 // pred_fallthru
      _
  $region6: #{discriminator_forward.5} parent=0 // loop_footer
    %s12 = sadd.s32 1, %s8
  $region7: #{discriminator_forward.5} parent=0 // loop_footer_branch
    %7 = sbr.rel target = $region3
  $region8: #{discriminator_forward.5} parent=0 // loop_exit
    _

// kernel: discriminator_forward.6
$region0: #{discriminator_forward.6}
  #allocation0 [shape = 'u32[]', space=smem, size = 0x4, offset = 0x4, fixed_abs, tag = 'smem constant byte address 0x4 - core index']
  #allocation1 [shape = 'u32[144,128]{1,0:T(1,128)}', space=vmem, size = 0x12000, scoped, tag = 'internal scratch']
  %s0 = inlined_call_operand.vmem [shape: bf16[512,256], index: 0, kind: input, shape index: {}]
  %s1 = inlined_call_operand.vmem [shape: bf16[256,32], index: 1, kind: input, shape index: {}]
  %s2 = inlined_call_operand.vmem [shape: f32[1,32], index: 2, kind: input, shape index: {}]
  %s3 = inlined_call_operand.vmem [shape: f32[1,32], index: 3, kind: input, shape index: {}]
  %s4 = inlined_call_operand.vmem [shape: bf16[512,32], index: 4, kind: output, shape index: {}]
  %s5 = sld [smem:[#allocation0]]
  $region26: #{discriminator_forward.6} parent=0
    _
  %s7 = ssub.s32 1, %s5
  %s8 = scalar_select 0, %s7, %s5
  // Predicated region
  $region2: #{discriminator_forward.6} parent=0 // pred_check
    _
  $region3: #{discriminator_forward.6} parent=0 // pred_check_branch
    %10 = sbr.rel (0) target = $region5
  $region4: #{discriminator_forward.6} parent=0 // pred_region
    _
  $region5: #{discriminator_forward.6} parent=0 // pred_fallthru
    _
  // Predicated region
  $region6: #{discriminator_forward.6} parent=0 // pred_check
    _
  $region7: #{discriminator_forward.6} parent=0 // pred_check_branch
    %12 = sbr.rel (0) target = $region9
  $region8: #{discriminator_forward.6} parent=0 // pred_region
    _
  $region9: #{discriminator_forward.6} parent=0 // pred_fallthru
    _
  // Predicated region
  $region10: #{discriminator_forward.6} parent=0 // pred_check
    _
  $region11: #{discriminator_forward.6} parent=0 // pred_check_branch
    %14 = sbr.rel (0) target = $region13
  $region12: #{discriminator_forward.6} parent=0 // pred_region
    _
  $region13: #{discriminator_forward.6} parent=0 // pred_fallthru
    _
  // Predicated region
  $region14: #{discriminator_forward.6} parent=0 // pred_check
    _
  $region15: #{discriminator_forward.6} parent=0 // pred_check_branch
    %16 = sbr.rel (0) target = $region17
  $region16: #{discriminator_forward.6} parent=0 // pred_region
    _
  $region17: #{discriminator_forward.6} parent=0 // pred_fallthru
    _
  %v18 = vld [vmem:[%s0] sm:$0xff]
  %v19 = vld [vmem:[%s0 + $0x8] sm:$0xff]
  %v20 = vld [vmem:[%s0 + $0x10] sm:$0xff]
  %v21 = vld [vmem:[%s0 + $0x18] sm:$0xff]
  %v22 = vld [vmem:[%s0 + $0x20] sm:$0xff]
  %v23 = vld [vmem:[%s0 + $0x28] sm:$0xff]
  %v24 = vld [vmem:[%s0 + $0x30] sm:$0xff]
  %v25 = vld [vmem:[%s0 + $0x38] sm:$0xff]
  %v26 = vld [vmem:[%s0 + $0x40] sm:$0xff]
  %v27 = vld [vmem:[%s0 + $0x48] sm:$0xff]
  %v28 = vld [vmem:[%s0 + $0x50] sm:$0xff]
  %v29 = vld [vmem:[%s0 + $0x58] sm:$0xff]
  %v30 = vld [vmem:[%s0 + $0x60] sm:$0xff]
  %v31 = vld [vmem:[%s0 + $0x68] sm:$0xff]
  %v32 = vld [vmem:[%s0 + $0x70] sm:$0xff]
  %v33 = vld [vmem:[%s0 + $0x78] sm:$0xff]
  %v34 = vld [vmem:[%s0 + $0x80] sm:$0xff]
  %v35 = vld [vmem:[%s0 + $0x88] sm:$0xff]
  %v36 = vld [vmem:[%s0 + $0x90] sm:$0xff]
  %v37 = vld [vmem:[%s0 + $0x98] sm:$0xff]
  %v38 = vld [vmem:[%s0 + $0xa0] sm:$0xff]
  %v39 = vld [vmem:[%s0 + $0xa8] sm:$0xff]
  %v40 = vld [vmem:[%s0 + $0xb0] sm:$0xff]
  %v41 = vld [vmem:[%s0 + $0xb8] sm:$0xff]
  %v42 = vld [vmem:[%s0 + $0xc0] sm:$0xff]
  %v43 = vld [vmem:[%s0 + $0xc8] sm:$0xff]
  %v44 = vld [vmem:[%s0 + $0xd0] sm:$0xff]
  %v45 = vld [vmem:[%s0 + $0xd8] sm:$0xff]
  %v46 = vld [vmem:[%s0 + $0xe0] sm:$0xff]
  %v47 = vld [vmem:[%s0 + $0xe8] sm:$0xff]
  %v48 = vld [vmem:[%s0 + $0xf0] sm:$0xff]
  %v49 = vld [vmem:[%s0 + $0xf8] sm:$0xff]
  %v50 = vld [vmem:[%s0 + $0x100] sm:$0xff]
  %v51 = vld [vmem:[%s0 + $0x108] sm:$0xff]
  %v52 = vld [vmem:[%s0 + $0x110] sm:$0xff]
  %v53 = vld [vmem:[%s0 + $0x118] sm:$0xff]
  %v54 = vld [vmem:[%s0 + $0x120] sm:$0xff]
  %v55 = vld [vmem:[%s0 + $0x128] sm:$0xff]
  %v56 = vld [vmem:[%s0 + $0x130] sm:$0xff]
  %v57 = vld [vmem:[%s0 + $0x138] sm:$0xff]
  %v58 = vld [vmem:[%s0 + $0x140] sm:$0xff]
  %v59 = vld [vmem:[%s0 + $0x148] sm:$0xff]
  %v60 = vld [vmem:[%s0 + $0x150] sm:$0xff]
  %v61 = vld [vmem:[%s0 + $0x158] sm:$0xff]
  %v62 = vld [vmem:[%s0 + $0x160] sm:$0xff]
  %v63 = vld [vmem:[%s0 + $0x168] sm:$0xff]
  %v64 = vld [vmem:[%s0 + $0x170] sm:$0xff]
  %v65 = vld [vmem:[%s0 + $0x178] sm:$0xff]
  %v66 = vld [vmem:[%s0 + $0x180] sm:$0xff]
  %v67 = vld [vmem:[%s0 + $0x188] sm:$0xff]
  %v68 = vld [vmem:[%s0 + $0x190] sm:$0xff]
  %v69 = vld [vmem:[%s0 + $0x198] sm:$0xff]
  %v70 = vld [vmem:[%s0 + $0x1a0] sm:$0xff]
  %v71 = vld [vmem:[%s0 + $0x1a8] sm:$0xff]
  %v72 = vld [vmem:[%s0 + $0x1b0] sm:$0xff]
  %v73 = vld [vmem:[%s0 + $0x1b8] sm:$0xff]
  %v74 = vld [vmem:[%s0 + $0x1c0] sm:$0xff]
  %v75 = vld [vmem:[%s0 + $0x1c8] sm:$0xff]
  %v76 = vld [vmem:[%s0 + $0x1d0] sm:$0xff]
  %v77 = vld [vmem:[%s0 + $0x1d8] sm:$0xff]
  %v78 = vld [vmem:[%s0 + $0x1e0] sm:$0xff]
  %v79 = vld [vmem:[%s0 + $0x1e8] sm:$0xff]
  %v80 = vld [vmem:[%s0 + $0x1f0] sm:$0xff]
  %v81 = vld [vmem:[%s0 + $0x1f8] sm:$0xff]
  %v82 = vld [vmem:[%s1] sm:$0xf]
  %v83 = vld [vmem:[%s1 + $0x4] sm:$0xf]
  %v84 = vld [vmem:[%s1 + $0x8] sm:$0xf]
  %v85 = vld [vmem:[%s1 + $0xc] sm:$0xf]
  %v86 = vld [vmem:[%s1 + $0x10] sm:$0xf]
  %v87 = vld [vmem:[%s1 + $0x14] sm:$0xf]
  %v88 = vld [vmem:[%s1 + $0x18] sm:$0xf]
  %v89 = vld [vmem:[%s1 + $0x1c] sm:$0xf]
  %v90 = vld [vmem:[%s1 + $0x20] sm:$0xf]
  %v91 = vld [vmem:[%s1 + $0x24] sm:$0xf]
  %v92 = vld [vmem:[%s1 + $0x28] sm:$0xf]
  %v93 = vld [vmem:[%s1 + $0x2c] sm:$0xf]
  %v94 = vld [vmem:[%s1 + $0x30] sm:$0xf]
  %v95 = vld [vmem:[%s1 + $0x34] sm:$0xf]
  %v96 = vld [vmem:[%s1 + $0x38] sm:$0xf]
  %v97 = vld [vmem:[%s1 + $0x3c] sm:$0xf]
  %v98 = vld [vmem:[%s1 + $0x40] sm:$0xf]
  %v99 = vld [vmem:[%s1 + $0x44] sm:$0xf]
  %v100 = vld [vmem:[%s1 + $0x48] sm:$0xf]
  %v101 = vld [vmem:[%s1 + $0x4c] sm:$0xf]
  %v102 = vld [vmem:[%s1 + $0x50] sm:$0xf]
  %v103 = vld [vmem:[%s1 + $0x54] sm:$0xf]
  %v104 = vld [vmem:[%s1 + $0x58] sm:$0xf]
  %v105 = vld [vmem:[%s1 + $0x5c] sm:$0xf]
  %v106 = vld [vmem:[%s1 + $0x60] sm:$0xf]
  %v107 = vld [vmem:[%s1 + $0x64] sm:$0xf]
  %v108 = vld [vmem:[%s1 + $0x68] sm:$0xf]
  %v109 = vld [vmem:[%s1 + $0x6c] sm:$0xf]
  %v110 = vld [vmem:[%s1 + $0x70] sm:$0xf]
  %v111 = vld [vmem:[%s1 + $0x74] sm:$0xf]
  %v112 = vld [vmem:[%s1 + $0x78] sm:$0xf]
  %v113 = vld [vmem:[%s1 + $0x7c] sm:$0xf]
  %v178 = vunpack.c.l.b16 %v18
  %v179 = vunpack.c.h.b16 %v18
  %v180 = vunpack.c.l.b16 %v19
  %v181 = vunpack.c.h.b16 %v19
  %v182 = vunpack.c.l.b16 %v20
  %v183 = vunpack.c.h.b16 %v20
  %v184 = vunpack.c.l.b16 %v21
  %v185 = vunpack.c.h.b16 %v21
  %v186 = vunpack.c.l.b16 %v22
  %v187 = vunpack.c.h.b16 %v22
  %v188 = vunpack.c.l.b16 %v23
  %v189 = vunpack.c.h.b16 %v23
  %v190 = vunpack.c.l.b16 %v24
  %v191 = vunpack.c.h.b16 %v24
  %v192 = vunpack.c.l.b16 %v25
  %v193 = vunpack.c.h.b16 %v25
  %v194 = vunpack.c.l.b16 %v26
  %v195 = vunpack.c.h.b16 %v26
  %v196 = vunpack.c.l.b16 %v27
  %v197 = vunpack.c.h.b16 %v27
  %v198 = vunpack.c.l.b16 %v28
  %v199 = vunpack.c.h.b16 %v28
  %v200 = vunpack.c.l.b16 %v29
  %v201 = vunpack.c.h.b16 %v29
  %v202 = vunpack.c.l.b16 %v30
  %v203 = vunpack.c.h.b16 %v30
  %v204 = vunpack.c.l.b16 %v31
  %v205 = vunpack.c.h.b16 %v31
  %v206 = vunpack.c.l.b16 %v32
  %v207 = vunpack.c.h.b16 %v32
  %v208 = vunpack.c.l.b16 %v33
  %v209 = vunpack.c.h.b16 %v33
  %v210 = vunpack.c.l.b16 %v34
  %v211 = vunpack.c.h.b16 %v34
  %v212 = vunpack.c.l.b16 %v35
  %v213 = vunpack.c.h.b16 %v35
  %v214 = vunpack.c.l.b16 %v36
  %v215 = vunpack.c.h.b16 %v36
  %v216 = vunpack.c.l.b16 %v37
  %v217 = vunpack.c.h.b16 %v37
  %v218 = vunpack.c.l.b16 %v38
  %v219 = vunpack.c.h.b16 %v38
  %v220 = vunpack.c.l.b16 %v39
  %v221 = vunpack.c.h.b16 %v39
  %v222 = vunpack.c.l.b16 %v40
  %v223 = vunpack.c.h.b16 %v40
  %v224 = vunpack.c.l.b16 %v41
  %v225 = vunpack.c.h.b16 %v41
  %v226 = vunpack.c.l.b16 %v42
  %v227 = vunpack.c.h.b16 %v42
  %v228 = vunpack.c.l.b16 %v43
  %v229 = vunpack.c.h.b16 %v43
  %v230 = vunpack.c.l.b16 %v44
  %v231 = vunpack.c.h.b16 %v44
  %v232 = vunpack.c.l.b16 %v45
  %v233 = vunpack.c.h.b16 %v45
  %v234 = vunpack.c.l.b16 %v46
  %v235 = vunpack.c.h.b16 %v46
  %v236 = vunpack.c.l.b16 %v47
  %v237 = vunpack.c.h.b16 %v47
  %v238 = vunpack.c.l.b16 %v48
  %v239 = vunpack.c.h.b16 %v48
  %v240 = vunpack.c.l.b16 %v49
  %v241 = vunpack.c.h.b16 %v49
  %v242 = vunpack.c.l.b16 %v50
  %v243 = vunpack.c.h.b16 %v50
  %v244 = vunpack.c.l.b16 %v51
  %v245 = vunpack.c.h.b16 %v51
  %v246 = vunpack.c.l.b16 %v52
  %v247 = vunpack.c.h.b16 %v52
  %v248 = vunpack.c.l.b16 %v53
  %v249 = vunpack.c.h.b16 %v53
  %v250 = vunpack.c.l.b16 %v54
  %v251 = vunpack.c.h.b16 %v54
  %v252 = vunpack.c.l.b16 %v55
  %v253 = vunpack.c.h.b16 %v55
  %v254 = vunpack.c.l.b16 %v56
  %v255 = vunpack.c.h.b16 %v56
  %v256 = vunpack.c.l.b16 %v57
  %v257 = vunpack.c.h.b16 %v57
  %v258 = vunpack.c.l.b16 %v58
  %v259 = vunpack.c.h.b16 %v58
  %v260 = vunpack.c.l.b16 %v59
  %v261 = vunpack.c.h.b16 %v59
  %v262 = vunpack.c.l.b16 %v60
  %v263 = vunpack.c.h.b16 %v60
  %v264 = vunpack.c.l.b16 %v61
  %v265 = vunpack.c.h.b16 %v61
  %v266 = vunpack.c.l.b16 %v62
  %v267 = vunpack.c.h.b16 %v62
  %v268 = vunpack.c.l.b16 %v63
  %v269 = vunpack.c.h.b16 %v63
  %v270 = vunpack.c.l.b16 %v64
  %v271 = vunpack.c.h.b16 %v64
  %v272 = vunpack.c.l.b16 %v65
  %v273 = vunpack.c.h.b16 %v65
  %v274 = vunpack.c.l.b16 %v66
  %v275 = vunpack.c.h.b16 %v66
  %v276 = vunpack.c.l.b16 %v67
  %v277 = vunpack.c.h.b16 %v67
  %v278 = vunpack.c.l.b16 %v68
  %v279 = vunpack.c.h.b16 %v68
  %v280 = vunpack.c.l.b16 %v69
  %v281 = vunpack.c.h.b16 %v69
  %v282 = vunpack.c.l.b16 %v70
  %v283 = vunpack.c.h.b16 %v70
  %v284 = vunpack.c.l.b16 %v71
  %v285 = vunpack.c.h.b16 %v71
  %v286 = vunpack.c.l.b16 %v72
  %v287 = vunpack.c.h.b16 %v72
  %v288 = vunpack.c.l.b16 %v73
  %v289 = vunpack.c.h.b16 %v73
  %v290 = vunpack.c.l.b16 %v74
  %v291 = vunpack.c.h.b16 %v74
  %v292 = vunpack.c.l.b16 %v75
  %v293 = vunpack.c.h.b16 %v75
  %v294 = vunpack.c.l.b16 %v76
  %v295 = vunpack.c.h.b16 %v76
  %v296 = vunpack.c.l.b16 %v77
  %v297 = vunpack.c.h.b16 %v77
  %v298 = vunpack.c.l.b16 %v78
  %v299 = vunpack.c.h.b16 %v78
  %v300 = vunpack.c.l.b16 %v79
  %v301 = vunpack.c.h.b16 %v79
  %v302 = vunpack.c.l.b16 %v80
  %v303 = vunpack.c.h.b16 %v80
  %v304 = vunpack.c.l.b16 %v81
  %v305 = vunpack.c.h.b16 %v81
  %v306 = vpack.c.b16 %v180, %v178
  %v307 = vpack.c.b16 %v181, %v179
  %v308 = vpack.c.b16 %v184, %v182
  %v309 = vpack.c.b16 %v185, %v183
  %v310 = vpack.c.b16 %v188, %v186
  %v311 = vpack.c.b16 %v189, %v187
  %v312 = vpack.c.b16 %v192, %v190
  %v313 = vpack.c.b16 %v193, %v191
  %v314 = vpack.c.b16 %v196, %v194
  %v315 = vpack.c.b16 %v197, %v195
  %v316 = vpack.c.b16 %v200, %v198
  %v317 = vpack.c.b16 %v201, %v199
  %v318 = vpack.c.b16 %v204, %v202
  %v319 = vpack.c.b16 %v205, %v203
  %v320 = vpack.c.b16 %v208, %v206
  %v321 = vpack.c.b16 %v209, %v207
  %v322 = vpack.c.b16 %v212, %v210
  %v323 = vpack.c.b16 %v213, %v211
  %v324 = vpack.c.b16 %v216, %v214
  %v325 = vpack.c.b16 %v217, %v215
  %v326 = vpack.c.b16 %v220, %v218
  %v327 = vpack.c.b16 %v221, %v219
  %v328 = vpack.c.b16 %v224, %v222
  %v329 = vpack.c.b16 %v225, %v223
  %v330 = vpack.c.b16 %v228, %v226
  %v331 = vpack.c.b16 %v229, %v227
  %v332 = vpack.c.b16 %v232, %v230
  %v333 = vpack.c.b16 %v233, %v231
  %v334 = vpack.c.b16 %v236, %v234
  %v335 = vpack.c.b16 %v237, %v235
  %v336 = vpack.c.b16 %v240, %v238
  %v337 = vpack.c.b16 %v241, %v239
  %v338 = vpack.c.b16 %v244, %v242
  %v339 = vpack.c.b16 %v245, %v243
  %v340 = vpack.c.b16 %v248, %v246
  %v341 = vpack.c.b16 %v249, %v247
  %v342 = vpack.c.b16 %v252, %v250
  %v343 = vpack.c.b16 %v253, %v251
  %v344 = vpack.c.b16 %v256, %v254
  %v345 = vpack.c.b16 %v257, %v255
  %v346 = vpack.c.b16 %v260, %v258
  %v347 = vpack.c.b16 %v261, %v259
  %v348 = vpack.c.b16 %v264, %v262
  %v349 = vpack.c.b16 %v265, %v263
  %v350 = vpack.c.b16 %v268, %v266
  %v351 = vpack.c.b16 %v269, %v267
  %v352 = vpack.c.b16 %v272, %v270
  %v353 = vpack.c.b16 %v273, %v271
  %v354 = vpack.c.b16 %v276, %v274
  %v355 = vpack.c.b16 %v277, %v275
  %v356 = vpack.c.b16 %v280, %v278
  %v357 = vpack.c.b16 %v281, %v279
  %v358 = vpack.c.b16 %v284, %v282
  %v359 = vpack.c.b16 %v285, %v283
  %v360 = vpack.c.b16 %v288, %v286
  %v361 = vpack.c.b16 %v289, %v287
  %v362 = vpack.c.b16 %v292, %v290
  %v363 = vpack.c.b16 %v293, %v291
  %v364 = vpack.c.b16 %v296, %v294
  %v365 = vpack.c.b16 %v297, %v295
  %v366 = vpack.c.b16 %v300, %v298
  %v367 = vpack.c.b16 %v301, %v299
  %v368 = vpack.c.b16 %v304, %v302
  %v369 = vpack.c.b16 %v305, %v303
  %v466 = vunpack.c.l.b16 %v82
  %v467 = vunpack.c.l.b16 %v83
  %v468 = vunpack.c.l.b16 %v84
  %v469 = vunpack.c.l.b16 %v85
  %v470 = vunpack.c.l.b16 %v86
  %v471 = vunpack.c.l.b16 %v87
  %v472 = vunpack.c.l.b16 %v88
  %v473 = vunpack.c.l.b16 %v89
  %v474 = vunpack.c.l.b16 %v90
  %v475 = vunpack.c.l.b16 %v91
  %v476 = vunpack.c.l.b16 %v92
  %v477 = vunpack.c.l.b16 %v93
  %v478 = vunpack.c.l.b16 %v94
  %v479 = vunpack.c.l.b16 %v95
  %v480 = vunpack.c.l.b16 %v96
  %v481 = vunpack.c.l.b16 %v97
  %v482 = vunpack.c.l.b16 %v98
  %v483 = vunpack.c.l.b16 %v99
  %v484 = vunpack.c.l.b16 %v100
  %v485 = vunpack.c.l.b16 %v101
  %v486 = vunpack.c.l.b16 %v102
  %v487 = vunpack.c.l.b16 %v103
  %v488 = vunpack.c.l.b16 %v104
  %v489 = vunpack.c.l.b16 %v105
  %v490 = vunpack.c.l.b16 %v106
  %v491 = vunpack.c.l.b16 %v107
  %v492 = vunpack.c.l.b16 %v108
  %v493 = vunpack.c.l.b16 %v109
  %v494 = vunpack.c.l.b16 %v110
  %v495 = vunpack.c.l.b16 %v111
  %v496 = vunpack.c.l.b16 %v112
  %v497 = vunpack.c.l.b16 %v113
  %v498 = vpack.c.b16 %v467, %v466
  %v499 = vpack.c.b16 %v469, %v468
  %v500 = vpack.c.b16 %v471, %v470
  %v501 = vpack.c.b16 %v473, %v472
  %v502 = vpack.c.b16 %v475, %v474
  %v503 = vpack.c.b16 %v477, %v476
  %v504 = vpack.c.b16 %v479, %v478
  %v505 = vpack.c.b16 %v481, %v480
  %v506 = vpack.c.b16 %v483, %v482
  %v507 = vpack.c.b16 %v485, %v484
  %v508 = vpack.c.b16 %v487, %v486
  %v509 = vpack.c.b16 %v489, %v488
  %v510 = vpack.c.b16 %v491, %v490
  %v511 = vpack.c.b16 %v493, %v492
  %v512 = vpack.c.b16 %v495, %v494
  %v513 = vpack.c.b16 %v497, %v496
  %530 = vmatprep.subr.bf16.mxu0 0
  %531 = vmatpush1.bf16.msra.mxu0 %v498
  %532 = vmatprep.subr.bf16.mxu0 0
  %533 = vmatpush1.bf16.msra.mxu0 %v499
  %534 = vmatprep.subr.bf16.mxu0 0
  %535 = vmatpush1.bf16.msra.mxu0 %v500
  %536 = vmatprep.subr.bf16.mxu0 0
  %537 = vmatpush1.bf16.msra.mxu0 %v501
  %538 = vmatprep.subr.bf16.mxu0 0
  %539 = vmatpush1.bf16.msra.mxu0 %v502
  %540 = vmatprep.subr.bf16.mxu0 0
  %541 = vmatpush1.bf16.msra.mxu0 %v503
  %542 = vmatprep.subr.bf16.mxu0 0
  %543 = vmatpush1.bf16.msra.mxu0 %v504
  %544 = vmatprep.subr.bf16.mxu0 0
  %545 = vmatpush1.bf16.msra.mxu0 %v505
  %546 = vmatprep.subr.bf16.mxu0 0
  %547 = vmatpush1.bf16.msra.mxu0 %v506
  %548 = vmatprep.subr.bf16.mxu0 0
  %549 = vmatpush1.bf16.msra.mxu0 %v507
  %550 = vmatprep.subr.bf16.mxu0 0
  %551 = vmatpush1.bf16.msra.mxu0 %v508
  %552 = vmatprep.subr.bf16.mxu0 0
  %553 = vmatpush1.bf16.msra.mxu0 %v509
  %554 = vmatprep.subr.bf16.mxu0 0
  %555 = vmatpush1.bf16.msra.mxu0 %v510
  %556 = vmatprep.subr.bf16.mxu0 0
  %557 = vmatpush1.bf16.msra.mxu0 %v511
  %558 = vmatprep.subr.bf16.mxu0 0
  %559 = vmatpush1.bf16.msra.mxu0 %v512
  %560 = vmatprep.subr.bf16.mxu0 0
  %561 = vmatpush1.bf16.msra.mxu0 %v513
  %562 = vmatprep.mubr.bf16.mxu0 %v307
  %563 = vmatmul.mubr.bf16.gmra.mrb[0].mxu0 %v306
  %v564 = vpop.f32.mrb[0].mxu0
  %v565 = vadd.f32 0.0, %v564
  %v566 = vpop.f32.mrb[0].mxu0
  %v567 = vpop.f32.mrb[0].mxu0
  %v568 = vadd.f32 0.0, %v567
  %v569 = vpop.f32.mrb[0].mxu0
  %570 = vmatprep.mubr.bf16.mxu0 %v309
  %571 = vmatmul.mubr.bf16.gmra.mrb[0].mxu0 %v308
  %v572 = vpop.f32.mrb[0].mxu0
  %v573 = vadd.f32 0.0, %v572
  %v574 = vpop.f32.mrb[0].mxu0
  %v575 = vpop.f32.mrb[0].mxu0
  %v576 = vadd.f32 0.0, %v575
  %v577 = vpop.f32.mrb[0].mxu0
  %578 = vmatprep.mubr.bf16.mxu0 %v311
  %579 = vmatmul.mubr.bf16.gmra.mrb[0].mxu0 %v310
  %v580 = vpop.f32.mrb[0].mxu0
  %v581 = vadd.f32 0.0, %v580
  %v582 = vpop.f32.mrb[0].mxu0
  %v583 = vpop.f32.mrb[0].mxu0
  %v584 = vadd.f32 0.0, %v583
  %v585 = vpop.f32.mrb[0].mxu0
  %586 = vmatprep.mubr.bf16.mxu0 %v313
  %587 = vmatmul.mubr.bf16.gmra.mrb[0].mxu0 %v312
  %v588 = vpop.f32.mrb[0].mxu0
  %v589 = vadd.f32 0.0, %v588
  %v590 = vpop.f32.mrb[0].mxu0
  %v591 = vpop.f32.mrb[0].mxu0
  %v592 = vadd.f32 0.0, %v591
  %v593 = vpop.f32.mrb[0].mxu0
  %594 = vmatprep.mubr.bf16.mxu0 %v315
  %595 = vmatmul.mubr.bf16.gmra.mrb[0].mxu0 %v314
  %v596 = vpop.f32.mrb[0].mxu0
  %v597 = vadd.f32 0.0, %v596
  %v598 = vpop.f32.mrb[0].mxu0
  %v599 = vpop.f32.mrb[0].mxu0
  %v600 = vadd.f32 0.0, %v599
  %v601 = vpop.f32.mrb[0].mxu0
  %602 = vmatprep.mubr.bf16.mxu0 %v317
  %603 = vmatmul.mubr.bf16.gmra.mrb[0].mxu0 %v316
  %v604 = vpop.f32.mrb[0].mxu0
  %v605 = vadd.f32 0.0, %v604
  %v606 = vpop.f32.mrb[0].mxu0
  %v607 = vpop.f32.mrb[0].mxu0
  %v608 = vadd.f32 0.0, %v607
  %v609 = vpop.f32.mrb[0].mxu0
  %610 = vmatprep.mubr.bf16.mxu0 %v319
  %611 = vmatmul.mubr.bf16.gmra.mrb[0].mxu0 %v318
  %v612 = vpop.f32.mrb[0].mxu0
  %v613 = vadd.f32 0.0, %v612
  %v614 = vpop.f32.mrb[0].mxu0
  %v615 = vpop.f32.mrb[0].mxu0
  %v616 = vadd.f32 0.0, %v615
  %v617 = vpop.f32.mrb[0].mxu0
  %618 = vmatprep.mubr.bf16.mxu0 %v321
  %619 = vmatmul.mubr.bf16.gmra.mrb[0].mxu0 %v320
  %v620 = vpop.f32.mrb[0].mxu0
  %v621 = vadd.f32 0.0, %v620
  %v622 = vpop.f32.mrb[0].mxu0
  %v623 = vpop.f32.mrb[0].mxu0
  %v624 = vadd.f32 0.0, %v623
  %v625 = vpop.f32.mrb[0].mxu0
  %626 = vmatprep.mubr.bf16.mxu0 %v323
  %627 = vmatmul.mubr.bf16.gmra.mrb[0].mxu0 %v322
  %v628 = vpop.f32.mrb[0].mxu0
  %v629 = vadd.f32 0.0, %v628
  %v630 = vpop.f32.mrb[0].mxu0
  %v631 = vpop.f32.mrb[0].mxu0
  %v632 = vadd.f32 0.0, %v631
  %v633 = vpop.f32.mrb[0].mxu0
  %634 = vmatprep.mubr.bf16.mxu0 %v325
  %635 = vmatmul.mubr.bf16.gmra.mrb[0].mxu0 %v324
  %v636 = vpop.f32.mrb[0].mxu0
  %v637 = vadd.f32 0.0, %v636
  %v638 = vpop.f32.mrb[0].mxu0
  %v639 = vpop.f32.mrb[0].mxu0
  %v640 = vadd.f32 0.0, %v639
  %v641 = vpop.f32.mrb[0].mxu0
  %642 = vmatprep.mubr.bf16.mxu0 %v327
  %643 = vmatmul.mubr.bf16.gmra.mrb[0].mxu0 %v326
  %v644 = vpop.f32.mrb[0].mxu0
  %v645 = vadd.f32 0.0, %v644
  %v646 = vpop.f32.mrb[0].mxu0
  %v647 = vpop.f32.mrb[0].mxu0
  %v648 = vadd.f32 0.0, %v647
  %v649 = vpop.f32.mrb[0].mxu0
  %650 = vmatprep.mubr.bf16.mxu0 %v329
  %651 = vmatmul.mubr.bf16.gmra.mrb[0].mxu0 %v328
  %v652 = vpop.f32.mrb[0].mxu0
  %v653 = vadd.f32 0.0, %v652
  %v654 = vpop.f32.mrb[0].mxu0
  %v655 = vpop.f32.mrb[0].mxu0
  %v656 = vadd.f32 0.0, %v655
  %v657 = vpop.f32.mrb[0].mxu0
  %658 = vmatprep.mubr.bf16.mxu0 %v331
  %659 = vmatmul.mubr.bf16.gmra.mrb[0].mxu0 %v330
  %v660 = vpop.f32.mrb[0].mxu0
  %v661 = vadd.f32 0.0, %v660
  %v662 = vpop.f32.mrb[0].mxu0
  %v663 = vpop.f32.mrb[0].mxu0
  %v664 = vadd.f32 0.0, %v663
  %v665 = vpop.f32.mrb[0].mxu0
  %666 = vmatprep.mubr.bf16.mxu0 %v333
  %667 = vmatmul.mubr.bf16.gmra.mrb[0].mxu0 %v332
  %v668 = vpop.f32.mrb[0].mxu0
  %v669 = vadd.f32 0.0, %v668
  %v670 = vpop.f32.mrb[0].mxu0
  %v671 = vpop.f32.mrb[0].mxu0
  %v672 = vadd.f32 0.0, %v671
  %v673 = vpop.f32.mrb[0].mxu0
  %674 = vmatprep.mubr.bf16.mxu0 %v335
  %675 = vmatmul.mubr.bf16.gmra.mrb[0].mxu0 %v334
  %v676 = vpop.f32.mrb[0].mxu0
  %v677 = vadd.f32 0.0, %v676
  %v678 = vpop.f32.mrb[0].mxu0
  %v679 = vpop.f32.mrb[0].mxu0
  %v680 = vadd.f32 0.0, %v679
  %v681 = vpop.f32.mrb[0].mxu0
  %682 = vmatprep.mubr.bf16.mxu0 %v337
  %683 = vmatmul.mubr.bf16.gmra.mrb[0].mxu0 %v336
  %v684 = vpop.f32.mrb[0].mxu0
  %v685 = vadd.f32 0.0, %v684
  %v686 = vpop.f32.mrb[0].mxu0
  %v687 = vpop.f32.mrb[0].mxu0
  %v688 = vadd.f32 0.0, %v687
  %v689 = vpop.f32.mrb[0].mxu0
  %690 = vmatprep.mubr.bf16.mxu0 %v339
  %691 = vmatmul.mubr.bf16.gmra.mrb[0].mxu0 %v338
  %v692 = vpop.f32.mrb[0].mxu0
  %v693 = vadd.f32 0.0, %v692
  %v694 = vpop.f32.mrb[0].mxu0
  %v695 = vpop.f32.mrb[0].mxu0
  %v696 = vadd.f32 0.0, %v695
  %v697 = vpop.f32.mrb[0].mxu0
  %698 = vmatprep.mubr.bf16.mxu0 %v341
  %699 = vmatmul.mubr.bf16.gmra.mrb[0].mxu0 %v340
  %v700 = vpop.f32.mrb[0].mxu0
  %v701 = vadd.f32 0.0, %v700
  %v702 = vpop.f32.mrb[0].mxu0
  %v703 = vpop.f32.mrb[0].mxu0
  %v704 = vadd.f32 0.0, %v703
  %v705 = vpop.f32.mrb[0].mxu0
  %706 = vmatprep.mubr.bf16.mxu0 %v343
  %707 = vmatmul.mubr.bf16.gmra.mrb[0].mxu0 %v342
  %v708 = vpop.f32.mrb[0].mxu0
  %v709 = vadd.f32 0.0, %v708
  %v710 = vpop.f32.mrb[0].mxu0
  %v711 = vpop.f32.mrb[0].mxu0
  %v712 = vadd.f32 0.0, %v711
  %v713 = vpop.f32.mrb[0].mxu0
  %714 = vmatprep.mubr.bf16.mxu0 %v345
  %715 = vmatmul.mubr.bf16.gmra.mrb[0].mxu0 %v344
  %v716 = vpop.f32.mrb[0].mxu0
  %v717 = vadd.f32 0.0, %v716
  %v718 = vpop.f32.mrb[0].mxu0
  %v719 = vpop.f32.mrb[0].mxu0
  %v720 = vadd.f32 0.0, %v719
  %v721 = vpop.f32.mrb[0].mxu0
  %722 = vmatprep.mubr.bf16.mxu0 %v347
  %723 = vmatmul.mubr.bf16.gmra.mrb[0].mxu0 %v346
  %v724 = vpop.f32.mrb[0].mxu0
  %v725 = vadd.f32 0.0, %v724
  %v726 = vpop.f32.mrb[0].mxu0
  %v727 = vpop.f32.mrb[0].mxu0
  %v728 = vadd.f32 0.0, %v727
  %v729 = vpop.f32.mrb[0].mxu0
  %730 = vmatprep.mubr.bf16.mxu0 %v349
  %731 = vmatmul.mubr.bf16.gmra.mrb[0].mxu0 %v348
  %v732 = vpop.f32.mrb[0].mxu0
  %v733 = vadd.f32 0.0, %v732
  %v734 = vpop.f32.mrb[0].mxu0
  %v735 = vpop.f32.mrb[0].mxu0
  %v736 = vadd.f32 0.0, %v735
  %v737 = vpop.f32.mrb[0].mxu0
  %738 = vmatprep.mubr.bf16.mxu0 %v351
  %739 = vmatmul.mubr.bf16.gmra.mrb[0].mxu0 %v350
  %v740 = vpop.f32.mrb[0].mxu0
  %v741 = vadd.f32 0.0, %v740
  %v742 = vpop.f32.mrb[0].mxu0
  %v743 = vpop.f32.mrb[0].mxu0
  %v744 = vadd.f32 0.0, %v743
  %v745 = vpop.f32.mrb[0].mxu0
  %746 = vmatprep.mubr.bf16.mxu0 %v353
  %747 = vmatmul.mubr.bf16.gmra.mrb[0].mxu0 %v352
  %v748 = vpop.f32.mrb[0].mxu0
  %v749 = vadd.f32 0.0, %v748
  %v750 = vpop.f32.mrb[0].mxu0
  %v751 = vpop.f32.mrb[0].mxu0
  %v752 = vadd.f32 0.0, %v751
  %v753 = vpop.f32.mrb[0].mxu0
  %754 = vmatprep.mubr.bf16.mxu0 %v355
  %755 = vmatmul.mubr.bf16.gmra.mrb[0].mxu0 %v354
  %v756 = vpop.f32.mrb[0].mxu0
  %v757 = vadd.f32 0.0, %v756
  %v758 = vpop.f32.mrb[0].mxu0
  %v759 = vpop.f32.mrb[0].mxu0
  %v760 = vadd.f32 0.0, %v759
  %v761 = vpop.f32.mrb[0].mxu0
  %762 = vmatprep.mubr.bf16.mxu0 %v357
  %763 = vmatmul.mubr.bf16.gmra.mrb[0].mxu0 %v356
  %v764 = vpop.f32.mrb[0].mxu0
  %v765 = vadd.f32 0.0, %v764
  %v766 = vpop.f32.mrb[0].mxu0
  %v767 = vpop.f32.mrb[0].mxu0
  %v768 = vadd.f32 0.0, %v767
  %v769 = vpop.f32.mrb[0].mxu0
  %770 = vmatprep.mubr.bf16.mxu0 %v359
  %771 = vmatmul.mubr.bf16.gmra.mrb[0].mxu0 %v358
  %v772 = vpop.f32.mrb[0].mxu0
  %v773 = vadd.f32 0.0, %v772
  %v774 = vpop.f32.mrb[0].mxu0
  %v775 = vpop.f32.mrb[0].mxu0
  %v776 = vadd.f32 0.0, %v775
  %v777 = vpop.f32.mrb[0].mxu0
  %778 = vmatprep.mubr.bf16.mxu0 %v361
  %779 = vmatmul.mubr.bf16.gmra.mrb[0].mxu0 %v360
  %v780 = vpop.f32.mrb[0].mxu0
  %v781 = vadd.f32 0.0, %v780
  %v782 = vpop.f32.mrb[0].mxu0
  %v783 = vpop.f32.mrb[0].mxu0
  %v784 = vadd.f32 0.0, %v783
  %v785 = vpop.f32.mrb[0].mxu0
  %786 = vmatprep.mubr.bf16.mxu0 %v363
  %787 = vmatmul.mubr.bf16.gmra.mrb[0].mxu0 %v362
  %v788 = vpop.f32.mrb[0].mxu0
  %v789 = vadd.f32 0.0, %v788
  %v790 = vpop.f32.mrb[0].mxu0
  %v791 = vpop.f32.mrb[0].mxu0
  %v792 = vadd.f32 0.0, %v791
  %v793 = vpop.f32.mrb[0].mxu0
  %794 = vmatprep.mubr.bf16.mxu0 %v365
  %795 = vmatmul.mubr.bf16.gmra.mrb[0].mxu0 %v364
  %v796 = vpop.f32.mrb[0].mxu0
  %v797 = vadd.f32 0.0, %v796
  %v798 = vpop.f32.mrb[0].mxu0
  %v799 = vpop.f32.mrb[0].mxu0
  %v800 = vadd.f32 0.0, %v799
  %v801 = vpop.f32.mrb[0].mxu0
  %802 = vmatprep.mubr.bf16.mxu0 %v367
  %803 = vmatmul.mubr.bf16.gmra.mrb[0].mxu0 %v366
  %v804 = vpop.f32.mrb[0].mxu0
  %v805 = vadd.f32 0.0, %v804
  %v806 = vpop.f32.mrb[0].mxu0
  %v807 = vpop.f32.mrb[0].mxu0
  %v808 = vadd.f32 0.0, %v807
  %v809 = vpop.f32.mrb[0].mxu0
  %810 = vmatprep.mubr.bf16.mxu0 %v369
  %811 = vmatmul.mubr.bf16.gmra.mrb[0].mxu0 %v368
  %v812 = vpop.f32.mrb[0].mxu0
  %v813 = vadd.f32 0.0, %v812
  %v814 = vpop.f32.mrb[0].mxu0
  %v815 = vpop.f32.mrb[0].mxu0
  %v816 = vadd.f32 0.0, %v815
  %v817 = vpop.f32.mrb[0].mxu0
  %818 = vdwg.mxu0
  %vm819 = vcmask 261120
  %v820 = vsel %vm819, %v565, 0.0
  %v821 = vsel %vm819, %v568, 0.0
  %v822 = vadd.f32 %v820, %v821
  %v823 = vsel %vm819, %v573, 0.0
  %v824 = vadd.f32 %v822, %v823
  %v825 = vsel %vm819, %v576, 0.0
  %v826 = vadd.f32 %v824, %v825
  %v827 = vsel %vm819, %v581, 0.0
  %v828 = vadd.f32 %v826, %v827
  %v829 = vsel %vm819, %v584, 0.0
  %v830 = vadd.f32 %v828, %v829
  %v831 = vsel %vm819, %v589, 0.0
  %v832 = vadd.f32 %v830, %v831
  %v833 = vsel %vm819, %v592, 0.0
  %v834 = vadd.f32 %v832, %v833
  %v835 = vsel %vm819, %v597, 0.0
  %v836 = vadd.f32 %v834, %v835
  %v837 = vsel %vm819, %v600, 0.0
  %v838 = vadd.f32 %v836, %v837
  %v839 = vsel %vm819, %v605, 0.0
  %v840 = vadd.f32 %v838, %v839
  %v841 = vsel %vm819, %v608, 0.0
  %v842 = vadd.f32 %v840, %v841
  %v843 = vsel %vm819, %v613, 0.0
  %v844 = vadd.f32 %v842, %v843
  %v845 = vsel %vm819, %v616, 0.0
  %v846 = vadd.f32 %v844, %v845
  %v847 = vsel %vm819, %v621, 0.0
  %v848 = vadd.f32 %v846, %v847
  %v849 = vsel %vm819, %v624, 0.0
  %v850 = vadd.f32 %v848, %v849
  %v851 = vsel %vm819, %v629, 0.0
  %v852 = vadd.f32 %v850, %v851
  %v853 = vsel %vm819, %v632, 0.0
  %v854 = vadd.f32 %v852, %v853
  %v855 = vsel %vm819, %v637, 0.0
  %v856 = vadd.f32 %v854, %v855
  %v857 = vsel %vm819, %v640, 0.0
  %v858 = vadd.f32 %v856, %v857
  %v859 = vsel %vm819, %v645, 0.0
  %v860 = vadd.f32 %v858, %v859
  %v861 = vsel %vm819, %v648, 0.0
  %v862 = vadd.f32 %v860, %v861
  %v863 = vsel %vm819, %v653, 0.0
  %v864 = vadd.f32 %v862, %v863
  %v865 = vsel %vm819, %v656, 0.0
  %v866 = vadd.f32 %v864, %v865
  %v867 = vsel %vm819, %v661, 0.0
  %v868 = vadd.f32 %v866, %v867
  %v869 = vsel %vm819, %v664, 0.0
  %v870 = vadd.f32 %v868, %v869
  %v871 = vsel %vm819, %v669, 0.0
  %v872 = vadd.f32 %v870, %v871
  %v873 = vsel %vm819, %v672, 0.0
  %v874 = vadd.f32 %v872, %v873
  %v875 = vsel %vm819, %v677, 0.0
  %v876 = vadd.f32 %v874, %v875
  %v877 = vsel %vm819, %v680, 0.0
  %v878 = vadd.f32 %v876, %v877
  %v879 = vsel %vm819, %v685, 0.0
  %v880 = vadd.f32 %v878, %v879
  %v881 = vsel %vm819, %v688, 0.0
  %v882 = vadd.f32 %v880, %v881
  %v883 = vsel %vm819, %v693, 0.0
  %v884 = vadd.f32 %v882, %v883
  %v885 = vsel %vm819, %v696, 0.0
  %v886 = vadd.f32 %v884, %v885
  %v887 = vsel %vm819, %v701, 0.0
  %v888 = vadd.f32 %v886, %v887
  %v889 = vsel %vm819, %v704, 0.0
  %v890 = vadd.f32 %v888, %v889
  %v891 = vsel %vm819, %v709, 0.0
  %v892 = vadd.f32 %v890, %v891
  %v893 = vsel %vm819, %v712, 0.0
  %v894 = vadd.f32 %v892, %v893
  %v895 = vsel %vm819, %v717, 0.0
  %v896 = vadd.f32 %v894, %v895
  %v897 = vsel %vm819, %v720, 0.0
  %v898 = vadd.f32 %v896, %v897
  %v899 = vsel %vm819, %v725, 0.0
  %v900 = vadd.f32 %v898, %v899
  %v901 = vsel %vm819, %v728, 0.0
  %v902 = vadd.f32 %v900, %v901
  %v903 = vsel %vm819, %v733, 0.0
  %v904 = vadd.f32 %v902, %v903
  %v905 = vsel %vm819, %v736, 0.0
  %v906 = vadd.f32 %v904, %v905
  %v907 = vsel %vm819, %v741, 0.0
  %v908 = vadd.f32 %v906, %v907
  %v909 = vsel %vm819, %v744, 0.0
  %v910 = vadd.f32 %v908, %v909
  %v911 = vsel %vm819, %v749, 0.0
  %v912 = vadd.f32 %v910, %v911
  %v913 = vsel %vm819, %v752, 0.0
  %v914 = vadd.f32 %v912, %v913
  %v915 = vsel %vm819, %v757, 0.0
  %v916 = vadd.f32 %v914, %v915
  %v917 = vsel %vm819, %v760, 0.0
  %v918 = vadd.f32 %v916, %v917
  %v919 = vsel %vm819, %v765, 0.0
  %v920 = vadd.f32 %v918, %v919
  %v921 = vsel %vm819, %v768, 0.0
  %v922 = vadd.f32 %v920, %v921
  %v923 = vsel %vm819, %v773, 0.0
  %v924 = vadd.f32 %v922, %v923
  %v925 = vsel %vm819, %v776, 0.0
  %v926 = vadd.f32 %v924, %v925
  %v927 = vsel %vm819, %v781, 0.0
  %v928 = vadd.f32 %v926, %v927
  %v929 = vsel %vm819, %v784, 0.0
  %v930 = vadd.f32 %v928, %v929
  %v931 = vsel %vm819, %v789, 0.0
  %v932 = vadd.f32 %v930, %v931
  %v933 = vsel %vm819, %v792, 0.0
  %v934 = vadd.f32 %v932, %v933
  %v935 = vsel %vm819, %v797, 0.0
  %v936 = vadd.f32 %v934, %v935
  %v937 = vsel %vm819, %v800, 0.0
  %v938 = vadd.f32 %v936, %v937
  %v939 = vsel %vm819, %v805, 0.0
  %v940 = vadd.f32 %v938, %v939
  %v941 = vsel %vm819, %v808, 0.0
  %v942 = vadd.f32 %v940, %v941
  %v943 = vsel %vm819, %v813, 0.0
  %v944 = vadd.f32 %v942, %v943
  %v945 = vsel %vm819, %v816, 0.0
  %v946 = vadd.f32 %v944, %v945
  %v947 = vrot.slane %v946, 4
  %v948 = vadd.f32 %v946, %v947
  %v949 = vrot.slane %v948, 2
  %v950 = vadd.f32 %v948, %v949
  %v951 = vrot.slane %v950, 1
  %v952 = vadd.f32 %v950, %v951
  %v953 = vrcp.pop 512.0
  %v954 = vmul.f32 %v952, %v953
  %v955 = vsub.f32 %v565, %v954
  %v956 = vsub.f32 %v568, %v954
  %v957 = vsub.f32 %v573, %v954
  %v958 = vsub.f32 %v576, %v954
  %v959 = vsub.f32 %v581, %v954
  %v960 = vsub.f32 %v584, %v954
  %v961 = vsub.f32 %v589, %v954
  %v962 = vsub.f32 %v592, %v954
  %v963 = vsub.f32 %v597, %v954
  %v964 = vsub.f32 %v600, %v954
  %v965 = vsub.f32 %v605, %v954
  %v966 = vsub.f32 %v608, %v954
  %v967 = vsub.f32 %v613, %v954
  %v968 = vsub.f32 %v616, %v954
  %v969 = vsub.f32 %v621, %v954
  %v970 = vsub.f32 %v624, %v954
  %v971 = vsub.f32 %v629, %v954
  %v972 = vsub.f32 %v632, %v954
  %v973 = vsub.f32 %v637, %v954
  %v974 = vsub.f32 %v640, %v954
  %v975 = vsub.f32 %v645, %v954
  %v976 = vsub.f32 %v648, %v954
  %v977 = vsub.f32 %v653, %v954
  %v978 = vsub.f32 %v656, %v954
  %v979 = vsub.f32 %v661, %v954
  %v980 = vsub.f32 %v664, %v954
  %v981 = vsub.f32 %v669, %v954
  %v982 = vsub.f32 %v672, %v954
  %v983 = vsub.f32 %v677, %v954
  %v984 = vsub.f32 %v680, %v954
  %v985 = vsub.f32 %v685, %v954
  %v986 = vsub.f32 %v688, %v954
  %v987 = vsub.f32 %v693, %v954
  %v988 = vsub.f32 %v696, %v954
  %v989 = vsub.f32 %v701, %v954
  %v990 = vsub.f32 %v704, %v954
  %v991 = vsub.f32 %v709, %v954
  %v992 = vsub.f32 %v712, %v954
  %v993 = vsub.f32 %v717, %v954
  %v994 = vsub.f32 %v720, %v954
  %v995 = vsub.f32 %v725, %v954
  %v996 = vsub.f32 %v728, %v954
  %v997 = vsub.f32 %v733, %v954
  %v998 = vsub.f32 %v736, %v954
  %v999 = vsub.f32 %v741, %v954
  %v1000 = vsub.f32 %v744, %v954
  %v1001 = vsub.f32 %v749, %v954
  %v1002 = vsub.f32 %v752, %v954
  %v1003 = vsub.f32 %v757, %v954
  %v1004 = vsub.f32 %v760, %v954
  %v1005 = vsub.f32 %v765, %v954
  %v1006 = vsub.f32 %v768, %v954
  %v1007 = vsub.f32 %v773, %v954
  %v1008 = vsub.f32 %v776, %v954
  %v1009 = vsub.f32 %v781, %v954
  %v1010 = vsub.f32 %v784, %v954
  %v1011 = vsub.f32 %v789, %v954
  %v1012 = vsub.f32 %v792, %v954
  %v1013 = vsub.f32 %v797, %v954
  %v1014 = vsub.f32 %v800, %v954
  %v1015 = vsub.f32 %v805, %v954
  %v1016 = vsub.f32 %v808, %v954
  %v1017 = vsub.f32 %v813, %v954
  %v1018 = vsub.f32 %v816, %v954
  %v1019 = vmul.f32 %v955, %v955
  %v1020 = vmul.f32 %v956, %v956
  %v1021 = vmul.f32 %v957, %v957
  %v1022 = vmul.f32 %v958, %v958
  %v1023 = vmul.f32 %v959, %v959
  %v1024 = vmul.f32 %v960, %v960
  %v1025 = vmul.f32 %v961, %v961
  %v1026 = vmul.f32 %v962, %v962
  %v1027 = vmul.f32 %v963, %v963
  %v1028 = vmul.f32 %v964, %v964
  %v1029 = vmul.f32 %v965, %v965
  %v1030 = vmul.f32 %v966, %v966
  %v1031 = vmul.f32 %v967, %v967
  %v1032 = vmul.f32 %v968, %v968
  %v1033 = vmul.f32 %v969, %v969
  %v1034 = vmul.f32 %v970, %v970
  %v1035 = vmul.f32 %v971, %v971
  %v1036 = vmul.f32 %v972, %v972
  %v1037 = vmul.f32 %v973, %v973
  %v1038 = vmul.f32 %v974, %v974
  %v1039 = vmul.f32 %v975, %v975
  %v1040 = vmul.f32 %v976, %v976
  %v1041 = vmul.f32 %v977, %v977
  %v1042 = vmul.f32 %v978, %v978
  %v1043 = vmul.f32 %v979, %v979
  %v1044 = vmul.f32 %v980, %v980
  %v1045 = vmul.f32 %v981, %v981
  %v1046 = vmul.f32 %v982, %v982
  %v1047 = vmul.f32 %v983, %v983
  %v1048 = vmul.f32 %v984, %v984
  %v1049 = vmul.f32 %v985, %v985
  %v1050 = vmul.f32 %v986, %v986
  %v1051 = vmul.f32 %v987, %v987
  %v1052 = vmul.f32 %v988, %v988
  %v1053 = vmul.f32 %v989, %v989
  %v1054 = vmul.f32 %v990, %v990
  %v1055 = vmul.f32 %v991, %v991
  %v1056 = vmul.f32 %v992, %v992
  %v1057 = vmul.f32 %v993, %v993
  %v1058 = vmul.f32 %v994, %v994
  %v1059 = vmul.f32 %v995, %v995
  %v1060 = vmul.f32 %v996, %v996
  %v1061 = vmul.f32 %v997, %v997
  %v1062 = vmul.f32 %v998, %v998
  %v1063 = vmul.f32 %v999, %v999
  %v1064 = vmul.f32 %v1000, %v1000
  %v1065 = vmul.f32 %v1001, %v1001
  %v1066 = vmul.f32 %v1002, %v1002
  %v1067 = vmul.f32 %v1003, %v1003
  %v1068 = vmul.f32 %v1004, %v1004
  %v1069 = vmul.f32 %v1005, %v1005
  %v1070 = vmul.f32 %v1006, %v1006
  %v1071 = vmul.f32 %v1007, %v1007
  %v1072 = vmul.f32 %v1008, %v1008
  %v1073 = vmul.f32 %v1009, %v1009
  %v1074 = vmul.f32 %v1010, %v1010
  %v1075 = vmul.f32 %v1011, %v1011
  %v1076 = vmul.f32 %v1012, %v1012
  %v1077 = vmul.f32 %v1013, %v1013
  %v1078 = vmul.f32 %v1014, %v1014
  %v1079 = vmul.f32 %v1015, %v1015
  %v1080 = vmul.f32 %v1016, %v1016
  %v1081 = vmul.f32 %v1017, %v1017
  %v1082 = vmul.f32 %v1018, %v1018
  %v1083 = vsel %vm819, %v1019, 0.0
  %v1084 = vsel %vm819, %v1020, 0.0
  %v1085 = vadd.f32 %v1083, %v1084
  %v1086 = vsel %vm819, %v1021, 0.0
  %v1087 = vadd.f32 %v1085, %v1086
  %v1088 = vsel %vm819, %v1022, 0.0
  %v1089 = vadd.f32 %v1087, %v1088
  %v1090 = vsel %vm819, %v1023, 0.0
  %v1091 = vadd.f32 %v1089, %v1090
  %v1092 = vsel %vm819, %v1024, 0.0
  %v1093 = vadd.f32 %v1091, %v1092
  %v1094 = vsel %vm819, %v1025, 0.0
  %v1095 = vadd.f32 %v1093, %v1094
  %v1096 = vsel %vm819, %v1026, 0.0
  %v1097 = vadd.f32 %v1095, %v1096
  %v1098 = vsel %vm819, %v1027, 0.0
  %v1099 = vadd.f32 %v1097, %v1098
  %v1100 = vsel %vm819, %v1028, 0.0
  %v1101 = vadd.f32 %v1099, %v1100
  %v1102 = vsel %vm819, %v1029, 0.0
  %v1103 = vadd.f32 %v1101, %v1102
  %v1104 = vsel %vm819, %v1030, 0.0
  %v1105 = vadd.f32 %v1103, %v1104
  %v1106 = vsel %vm819, %v1031, 0.0
  %v1107 = vadd.f32 %v1105, %v1106
  %v1108 = vsel %vm819, %v1032, 0.0
  %v1109 = vadd.f32 %v1107, %v1108
  %v1110 = vsel %vm819, %v1033, 0.0
  %v1111 = vadd.f32 %v1109, %v1110
  %v1112 = vsel %vm819, %v1034, 0.0
  %v1113 = vadd.f32 %v1111, %v1112
  %v1114 = vsel %vm819, %v1035, 0.0
  %v1115 = vadd.f32 %v1113, %v1114
  %v1116 = vsel %vm819, %v1036, 0.0
  %v1117 = vadd.f32 %v1115, %v1116
  %v1118 = vsel %vm819, %v1037, 0.0
  %v1119 = vadd.f32 %v1117, %v1118
  %v1120 = vsel %vm819, %v1038, 0.0
  %v1121 = vadd.f32 %v1119, %v1120
  %v1122 = vsel %vm819, %v1039, 0.0
  %v1123 = vadd.f32 %v1121, %v1122
  %v1124 = vsel %vm819, %v1040, 0.0
  %v1125 = vadd.f32 %v1123, %v1124
  %v1126 = vsel %vm819, %v1041, 0.0
  %v1127 = vadd.f32 %v1125, %v1126
  %v1128 = vsel %vm819, %v1042, 0.0
  %v1129 = vadd.f32 %v1127, %v1128
  %v1130 = vsel %vm819, %v1043, 0.0
  %v1131 = vadd.f32 %v1129, %v1130
  %v1132 = vsel %vm819, %v1044, 0.0
  %v1133 = vadd.f32 %v1131, %v1132
  %v1134 = vsel %vm819, %v1045, 0.0
  %v1135 = vadd.f32 %v1133, %v1134
  %v1136 = vsel %vm819, %v1046, 0.0
  %v1137 = vadd.f32 %v1135, %v1136
  %v1138 = vsel %vm819, %v1047, 0.0
  %v1139 = vadd.f32 %v1137, %v1138
  %v1140 = vsel %vm819, %v1048, 0.0
  %v1141 = vadd.f32 %v1139, %v1140
  %v1142 = vsel %vm819, %v1049, 0.0
  %v1143 = vadd.f32 %v1141, %v1142
  %v1144 = vsel %vm819, %v1050, 0.0
  %v1145 = vadd.f32 %v1143, %v1144
  %v1146 = vsel %vm819, %v1051, 0.0
  %v1147 = vadd.f32 %v1145, %v1146
  %v1148 = vsel %vm819, %v1052, 0.0
  %v1149 = vadd.f32 %v1147, %v1148
  %v1150 = vsel %vm819, %v1053, 0.0
  %v1151 = vadd.f32 %v1149, %v1150
  %v1152 = vsel %vm819, %v1054, 0.0
  %v1153 = vadd.f32 %v1151, %v1152
  %v1154 = vsel %vm819, %v1055, 0.0
  %v1155 = vadd.f32 %v1153, %v1154
  %v1156 = vsel %vm819, %v1056, 0.0
  %v1157 = vadd.f32 %v1155, %v1156
  %v1158 = vsel %vm819, %v1057, 0.0
  %v1159 = vadd.f32 %v1157, %v1158
  %v1160 = vsel %vm819, %v1058, 0.0
  %v1161 = vadd.f32 %v1159, %v1160
  %v1162 = vsel %vm819, %v1059, 0.0
  %v1163 = vadd.f32 %v1161, %v1162
  %v1164 = vsel %vm819, %v1060, 0.0
  %v1165 = vadd.f32 %v1163, %v1164
  %v1166 = vsel %vm819, %v1061, 0.0
  %v1167 = vadd.f32 %v1165, %v1166
  %v1168 = vsel %vm819, %v1062, 0.0
  %v1169 = vadd.f32 %v1167, %v1168
  %v1170 = vsel %vm819, %v1063, 0.0
  %v1171 = vadd.f32 %v1169, %v1170
  %v1172 = vsel %vm819, %v1064, 0.0
  %v1173 = vadd.f32 %v1171, %v1172
  %v1174 = vsel %vm819, %v1065, 0.0
  %v1175 = vadd.f32 %v1173, %v1174
  %v1176 = vsel %vm819, %v1066, 0.0
  %v1177 = vadd.f32 %v1175, %v1176
  %v1178 = vsel %vm819, %v1067, 0.0
  %v1179 = vadd.f32 %v1177, %v1178
  %v1180 = vsel %vm819, %v1068, 0.0
  %v1181 = vadd.f32 %v1179, %v1180
  %v1182 = vsel %vm819, %v1069, 0.0
  %v1183 = vadd.f32 %v1181, %v1182
  %v1184 = vsel %vm819, %v1070, 0.0
  %v1185 = vadd.f32 %v1183, %v1184
  %v1186 = vsel %vm819, %v1071, 0.0
  %v1187 = vadd.f32 %v1185, %v1186
  %v1188 = vsel %vm819, %v1072, 0.0
  %v1189 = vadd.f32 %v1187, %v1188
  %v1190 = vsel %vm819, %v1073, 0.0
  %v1191 = vadd.f32 %v1189, %v1190
  %v1192 = vsel %vm819, %v1074, 0.0
  %v1193 = vadd.f32 %v1191, %v1192
  %v1194 = vsel %vm819, %v1075, 0.0
  %v1195 = vadd.f32 %v1193, %v1194
  %v1196 = vsel %vm819, %v1076, 0.0
  %v1197 = vadd.f32 %v1195, %v1196
  %v1198 = vsel %vm819, %v1077, 0.0
  %v1199 = vadd.f32 %v1197, %v1198
  %v1200 = vsel %vm819, %v1078, 0.0
  %v1201 = vadd.f32 %v1199, %v1200
  %v1202 = vsel %vm819, %v1079, 0.0
  %v1203 = vadd.f32 %v1201, %v1202
  %v1204 = vsel %vm819, %v1080, 0.0
  %v1205 = vadd.f32 %v1203, %v1204
  %v1206 = vsel %vm819, %v1081, 0.0
  %v1207 = vadd.f32 %v1205, %v1206
  %v1208 = vsel %vm819, %v1082, 0.0
  %v1209 = vadd.f32 %v1207, %v1208
  %v1210 = vrot.slane %v1209, 4
  %v1211 = vadd.f32 %v1209, %v1210
  %v1212 = vrot.slane %v1211, 2
  %v1213 = vadd.f32 %v1211, %v1212
  %v1214 = vrot.slane %v1213, 1
  %v1215 = vadd.f32 %v1213, %v1214
  %v1216 = vmul.f32 %v1215, %v953
  %v1217 = vadd.f32 %v1216, 1e-05
  %v1218 = vrsqrt.pop %v1217
  %v1219 = vmul.f32 %v955, %v1218
  %v1220 = vmul.f32 %v956, %v1218
  %v1221 = vmul.f32 %v957, %v1218
  %v1222 = vmul.f32 %v958, %v1218
  %v1223 = vmul.f32 %v959, %v1218
  %v1224 = vmul.f32 %v960, %v1218
  %v1225 = vmul.f32 %v961, %v1218
  %v1226 = vmul.f32 %v962, %v1218
  %v1227 = vmul.f32 %v963, %v1218
  %v1228 = vmul.f32 %v964, %v1218
  %v1229 = vmul.f32 %v965, %v1218
  %v1230 = vmul.f32 %v966, %v1218
  %v1231 = vmul.f32 %v967, %v1218
  %v1232 = vmul.f32 %v968, %v1218
  %v1233 = vmul.f32 %v969, %v1218
  %v1234 = vmul.f32 %v970, %v1218
  %v1235 = vmul.f32 %v971, %v1218
  %v1236 = vmul.f32 %v972, %v1218
  %v1237 = vmul.f32 %v973, %v1218
  %v1238 = vmul.f32 %v974, %v1218
  %v1239 = vmul.f32 %v975, %v1218
  %v1240 = vmul.f32 %v976, %v1218
  %v1241 = vmul.f32 %v977, %v1218
  %v1242 = vmul.f32 %v978, %v1218
  %v1243 = vmul.f32 %v979, %v1218
  %v1244 = vmul.f32 %v980, %v1218
  %v1245 = vmul.f32 %v981, %v1218
  %v1246 = vmul.f32 %v982, %v1218
  %v1247 = vmul.f32 %v983, %v1218
  %v1248 = vmul.f32 %v984, %v1218
  %v1249 = vmul.f32 %v985, %v1218
  %v1250 = vmul.f32 %v986, %v1218
  %v1251 = vmul.f32 %v987, %v1218
  %v1252 = vmul.f32 %v988, %v1218
  %v1253 = vmul.f32 %v989, %v1218
  %v1254 = vmul.f32 %v990, %v1218
  %v1255 = vmul.f32 %v991, %v1218
  %v1256 = vmul.f32 %v992, %v1218
  %v1257 = vmul.f32 %v993, %v1218
  %v1258 = vmul.f32 %v994, %v1218
  %v1259 = vmul.f32 %v995, %v1218
  %v1260 = vmul.f32 %v996, %v1218
  %v1261 = vmul.f32 %v997, %v1218
  %v1262 = vmul.f32 %v998, %v1218
  %v1263 = vmul.f32 %v999, %v1218
  %v1264 = vmul.f32 %v1000, %v1218
  %v1265 = vmul.f32 %v1001, %v1218
  %v1266 = vmul.f32 %v1002, %v1218
  %v1267 = vmul.f32 %v1003, %v1218
  %v1268 = vmul.f32 %v1004, %v1218
  %v1269 = vmul.f32 %v1005, %v1218
  %v1270 = vmul.f32 %v1006, %v1218
  %v1271 = vmul.f32 %v1007, %v1218
  %v1272 = vmul.f32 %v1008, %v1218
  %v1273 = vmul.f32 %v1009, %v1218
  %v1274 = vmul.f32 %v1010, %v1218
  %v1275 = vmul.f32 %v1011, %v1218
  %v1276 = vmul.f32 %v1012, %v1218
  %v1277 = vmul.f32 %v1013, %v1218
  %v1278 = vmul.f32 %v1014, %v1218
  %v1279 = vmul.f32 %v1015, %v1218
  %v1280 = vmul.f32 %v1016, %v1218
  %v1281 = vmul.f32 %v1017, %v1218
  %v1282 = vmul.f32 %v1018, %v1218
  %v1283 = vld [vmem:[%s2] sm:$0x1]
  %v1285 = vlaneseq
  %v1286 = vshrl.u32 %v1285, 7
  %v1287 = vsub.s32 0, %v1286
  %v1288 = vrot.slane %v1283, %v1287
  %v1290 = vmul.f32 %v1219, %v1288
  %v1291 = vmul.f32 %v1220, %v1288
  %v1292 = vmul.f32 %v1221, %v1288
  %v1293 = vmul.f32 %v1222, %v1288
  %v1294 = vmul.f32 %v1223, %v1288
  %v1295 = vmul.f32 %v1224, %v1288
  %v1296 = vmul.f32 %v1225, %v1288
  %v1297 = vmul.f32 %v1226, %v1288
  %v1298 = vmul.f32 %v1227, %v1288
  %v1299 = vmul.f32 %v1228, %v1288
  %v1300 = vmul.f32 %v1229, %v1288
  %v1301 = vmul.f32 %v1230, %v1288
  %v1302 = vmul.f32 %v1231, %v1288
  %v1303 = vmul.f32 %v1232, %v1288
  %v1304 = vmul.f32 %v1233, %v1288
  %v1305 = vmul.f32 %v1234, %v1288
  %v1306 = vmul.f32 %v1235, %v1288
  %v1307 = vmul.f32 %v1236, %v1288
  %v1308 = vmul.f32 %v1237, %v1288
  %v1309 = vmul.f32 %v1238, %v1288
  %v1310 = vmul.f32 %v1239, %v1288
  %v1311 = vmul.f32 %v1240, %v1288
  %v1312 = vmul.f32 %v1241, %v1288
  %v1313 = vmul.f32 %v1242, %v1288
  %v1314 = vmul.f32 %v1243, %v1288
  %v1315 = vmul.f32 %v1244, %v1288
  %v1316 = vmul.f32 %v1245, %v1288
  %v1317 = vmul.f32 %v1246, %v1288
  %v1318 = vmul.f32 %v1247, %v1288
  %v1319 = vmul.f32 %v1248, %v1288
  %v1320 = vmul.f32 %v1249, %v1288
  %v1321 = vmul.f32 %v1250, %v1288
  %v1322 = vmul.f32 %v1251, %v1288
  %v1323 = vmul.f32 %v1252, %v1288
  %v1324 = vmul.f32 %v1253, %v1288
  %v1325 = vmul.f32 %v1254, %v1288
  %v1326 = vmul.f32 %v1255, %v1288
  %v1327 = vmul.f32 %v1256, %v1288
  %v1328 = vmul.f32 %v1257, %v1288
  %v1329 = vmul.f32 %v1258, %v1288
  %v1330 = vmul.f32 %v1259, %v1288
  %v1331 = vmul.f32 %v1260, %v1288
  %v1332 = vmul.f32 %v1261, %v1288
  %v1333 = vmul.f32 %v1262, %v1288
  %v1334 = vmul.f32 %v1263, %v1288
  %v1335 = vmul.f32 %v1264, %v1288
  %v1336 = vmul.f32 %v1265, %v1288
  %v1337 = vmul.f32 %v1266, %v1288
  %v1338 = vmul.f32 %v1267, %v1288
  %v1339 = vmul.f32 %v1268, %v1288
  %v1340 = vmul.f32 %v1269, %v1288
  %v1341 = vmul.f32 %v1270, %v1288
  %v1342 = vmul.f32 %v1271, %v1288
  %v1343 = vmul.f32 %v1272, %v1288
  %v1344 = vmul.f32 %v1273, %v1288
  %v1345 = vmul.f32 %v1274, %v1288
  %v1346 = vmul.f32 %v1275, %v1288
  %v1347 = vmul.f32 %v1276, %v1288
  %v1348 = vmul.f32 %v1277, %v1288
  %v1349 = vmul.f32 %v1278, %v1288
  %v1350 = vmul.f32 %v1279, %v1288
  %v1351 = vmul.f32 %v1280, %v1288
  %v1352 = vmul.f32 %v1281, %v1288
  %v1353 = vmul.f32 %v1282, %v1288
  %v1354 = vld [vmem:[%s3] sm:$0x1]
  %v1356 = vlaneseq
  %v1357 = vshrl.u32 %v1356, 7
  %v1358 = vsub.s32 0, %v1357
  %v1359 = vrot.slane %v1354, %v1358
  %v1361 = vadd.f32 %v1290, %v1359
  %v1362 = vadd.f32 %v1291, %v1359
  %v1363 = vadd.f32 %v1292, %v1359
  %v1364 = vadd.f32 %v1293, %v1359
  %v1365 = vadd.f32 %v1294, %v1359
  %v1366 = vadd.f32 %v1295, %v1359
  %v1367 = vadd.f32 %v1296, %v1359
  %v1368 = vadd.f32 %v1297, %v1359
  %v1369 = vadd.f32 %v1298, %v1359
  %v1370 = vadd.f32 %v1299, %v1359
  %v1371 = vadd.f32 %v1300, %v1359
  %v1372 = vadd.f32 %v1301, %v1359
  %v1373 = vadd.f32 %v1302, %v1359
  %v1374 = vadd.f32 %v1303, %v1359
  %v1375 = vadd.f32 %v1304, %v1359
  %v1376 = vadd.f32 %v1305, %v1359
  %v1377 = vadd.f32 %v1306, %v1359
  %v1378 = vadd.f32 %v1307, %v1359
  %v1379 = vadd.f32 %v1308, %v1359
  %v1380 = vadd.f32 %v1309, %v1359
  %v1381 = vadd.f32 %v1310, %v1359
  %v1382 = vadd.f32 %v1311, %v1359
  %v1383 = vadd.f32 %v1312, %v1359
  %v1384 = vadd.f32 %v1313, %v1359
  %v1385 = vadd.f32 %v1314, %v1359
  %v1386 = vadd.f32 %v1315, %v1359
  %v1387 = vadd.f32 %v1316, %v1359
  %v1388 = vadd.f32 %v1317, %v1359
  %v1389 = vadd.f32 %v1318, %v1359
  %v1390 = vadd.f32 %v1319, %v1359
  %v1391 = vadd.f32 %v1320, %v1359
  %v1392 = vadd.f32 %v1321, %v1359
  %v1393 = vadd.f32 %v1322, %v1359
  %v1394 = vadd.f32 %v1323, %v1359
  %v1395 = vadd.f32 %v1324, %v1359
  %v1396 = vadd.f32 %v1325, %v1359
  %v1397 = vadd.f32 %v1326, %v1359
  %v1398 = vadd.f32 %v1327, %v1359
  %v1399 = vadd.f32 %v1328, %v1359
  %v1400 = vadd.f32 %v1329, %v1359
  %v1401 = vadd.f32 %v1330, %v1359
  %v1402 = vadd.f32 %v1331, %v1359
  %v1403 = vadd.f32 %v1332, %v1359
  %v1404 = vadd.f32 %v1333, %v1359
  %v1405 = vadd.f32 %v1334, %v1359
  %v1406 = vadd.f32 %v1335, %v1359
  %v1407 = vadd.f32 %v1336, %v1359
  %v1408 = vadd.f32 %v1337, %v1359
  %v1409 = vadd.f32 %v1338, %v1359
  %v1410 = vadd.f32 %v1339, %v1359
  %v1411 = vadd.f32 %v1340, %v1359
  %v1412 = vadd.f32 %v1341, %v1359
  %v1413 = vadd.f32 %v1342, %v1359
  %v1414 = vadd.f32 %v1343, %v1359
  %v1415 = vadd.f32 %v1344, %v1359
  %v1416 = vadd.f32 %v1345, %v1359
  %v1417 = vadd.f32 %v1346, %v1359
  %v1418 = vadd.f32 %v1347, %v1359
  %v1419 = vadd.f32 %v1348, %v1359
  %v1420 = vadd.f32 %v1349, %v1359
  %v1421 = vadd.f32 %v1350, %v1359
  %v1422 = vadd.f32 %v1351, %v1359
  %v1423 = vadd.f32 %v1352, %v1359
  %v1424 = vadd.f32 %v1353, %v1359
  %vm1425 = vcmp.ge.f32.partialorder %v1361, 0.0
  %vm1426 = vcmp.ge.f32.partialorder %v1362, 0.0
  %vm1427 = vcmp.ge.f32.partialorder %v1363, 0.0
  %vm1428 = vcmp.ge.f32.partialorder %v1364, 0.0
  %vm1429 = vcmp.ge.f32.partialorder %v1365, 0.0
  %vm1430 = vcmp.ge.f32.partialorder %v1366, 0.0
  %vm1431 = vcmp.ge.f32.partialorder %v1367, 0.0
  %vm1432 = vcmp.ge.f32.partialorder %v1368, 0.0
  %vm1433 = vcmp.ge.f32.partialorder %v1369, 0.0
  %vm1434 = vcmp.ge.f32.partialorder %v1370, 0.0
  %vm1435 = vcmp.ge.f32.partialorder %v1371, 0.0
  %vm1436 = vcmp.ge.f32.partialorder %v1372, 0.0
  %vm1437 = vcmp.ge.f32.partialorder %v1373, 0.0
  %vm1438 = vcmp.ge.f32.partialorder %v1374, 0.0
  %vm1439 = vcmp.ge.f32.partialorder %v1375, 0.0
  %vm1440 = vcmp.ge.f32.partialorder %v1376, 0.0
  %vm1441 = vcmp.ge.f32.partialorder %v1377, 0.0
  %vm1442 = vcmp.ge.f32.partialorder %v1378, 0.0
  %vm1443 = vcmp.ge.f32.partialorder %v1379, 0.0
  %vm1444 = vcmp.ge.f32.partialorder %v1380, 0.0
  %vm1445 = vcmp.ge.f32.partialorder %v1381, 0.0
  %vm1446 = vcmp.ge.f32.partialorder %v1382, 0.0
  %vm1447 = vcmp.ge.f32.partialorder %v1383, 0.0
  %vm1448 = vcmp.ge.f32.partialorder %v1384, 0.0
  %vm1449 = vcmp.ge.f32.partialorder %v1385, 0.0
  %vm1450 = vcmp.ge.f32.partialorder %v1386, 0.0
  %vm1451 = vcmp.ge.f32.partialorder %v1387, 0.0
  %vm1452 = vcmp.ge.f32.partialorder %v1388, 0.0
  %vm1453 = vcmp.ge.f32.partialorder %v1389, 0.0
  %vm1454 = vcmp.ge.f32.partialorder %v1390, 0.0
  %vm1455 = vcmp.ge.f32.partialorder %v1391, 0.0
  %vm1456 = vcmp.ge.f32.partialorder %v1392, 0.0
  %vm1457 = vcmp.ge.f32.partialorder %v1393, 0.0
  %vm1458 = vcmp.ge.f32.partialorder %v1394, 0.0
  %vm1459 = vcmp.ge.f32.partialorder %v1395, 0.0
  %vm1460 = vcmp.ge.f32.partialorder %v1396, 0.0
  %vm1461 = vcmp.ge.f32.partialorder %v1397, 0.0
  %vm1462 = vcmp.ge.f32.partialorder %v1398, 0.0
  %vm1463 = vcmp.ge.f32.partialorder %v1399, 0.0
  %vm1464 = vcmp.ge.f32.partialorder %v1400, 0.0
  %vm1465 = vcmp.ge.f32.partialorder %v1401, 0.0
  %vm1466 = vcmp.ge.f32.partialorder %v1402, 0.0
  %vm1467 = vcmp.ge.f32.partialorder %v1403, 0.0
  %vm1468 = vcmp.ge.f32.partialorder %v1404, 0.0
  %vm1469 = vcmp.ge.f32.partialorder %v1405, 0.0
  %vm1470 = vcmp.ge.f32.partialorder %v1406, 0.0
  %vm1471 = vcmp.ge.f32.partialorder %v1407, 0.0
  %vm1472 = vcmp.ge.f32.partialorder %v1408, 0.0
  %vm1473 = vcmp.ge.f32.partialorder %v1409, 0.0
  %vm1474 = vcmp.ge.f32.partialorder %v1410, 0.0
  %vm1475 = vcmp.ge.f32.partialorder %v1411, 0.0
  %vm1476 = vcmp.ge.f32.partialorder %v1412, 0.0
  %vm1477 = vcmp.ge.f32.partialorder %v1413, 0.0
  %vm1478 = vcmp.ge.f32.partialorder %v1414, 0.0
  %vm1479 = vcmp.ge.f32.partialorder %v1415, 0.0
  %vm1480 = vcmp.ge.f32.partialorder %v1416, 0.0
  %vm1481 = vcmp.ge.f32.partialorder %v1417, 0.0
  %vm1482 = vcmp.ge.f32.partialorder %v1418, 0.0
  %vm1483 = vcmp.ge.f32.partialorder %v1419, 0.0
  %vm1484 = vcmp.ge.f32.partialorder %v1420, 0.0
  %vm1485 = vcmp.ge.f32.partialorder %v1421, 0.0
  %vm1486 = vcmp.ge.f32.partialorder %v1422, 0.0
  %vm1487 = vcmp.ge.f32.partialorder %v1423, 0.0
  %vm1488 = vcmp.ge.f32.partialorder %v1424, 0.0
  %v1489 = vmul.f32 %v1361, 0.2
  %v1490 = vmul.f32 %v1362, 0.2
  %v1491 = vmul.f32 %v1363, 0.2
  %v1492 = vmul.f32 %v1364, 0.2
  %v1493 = vmul.f32 %v1365, 0.2
  %v1494 = vmul.f32 %v1366, 0.2
  %v1495 = vmul.f32 %v1367, 0.2
  %v1496 = vmul.f32 %v1368, 0.2
  %v1497 = vmul.f32 %v1369, 0.2
  %v1498 = vmul.f32 %v1370, 0.2
  %v1499 = vmul.f32 %v1371, 0.2
  %v1500 = vmul.f32 %v1372, 0.2
  %v1501 = vmul.f32 %v1373, 0.2
  %v1502 = vmul.f32 %v1374, 0.2
  %v1503 = vmul.f32 %v1375, 0.2
  %v1504 = vmul.f32 %v1376, 0.2
  %v1505 = vmul.f32 %v1377, 0.2
  %v1506 = vmul.f32 %v1378, 0.2
  %v1507 = vmul.f32 %v1379, 0.2
  %v1508 = vmul.f32 %v1380, 0.2
  %v1509 = vmul.f32 %v1381, 0.2
  %v1510 = vmul.f32 %v1382, 0.2
  %v1511 = vmul.f32 %v1383, 0.2
  %v1512 = vmul.f32 %v1384, 0.2
  %v1513 = vmul.f32 %v1385, 0.2
  %v1514 = vmul.f32 %v1386, 0.2
  %v1515 = vmul.f32 %v1387, 0.2
  %v1516 = vmul.f32 %v1388, 0.2
  %v1517 = vmul.f32 %v1389, 0.2
  %v1518 = vmul.f32 %v1390, 0.2
  %v1519 = vmul.f32 %v1391, 0.2
  %v1520 = vmul.f32 %v1392, 0.2
  %v1521 = vmul.f32 %v1393, 0.2
  %v1522 = vmul.f32 %v1394, 0.2
  %v1523 = vmul.f32 %v1395, 0.2
  %v1524 = vmul.f32 %v1396, 0.2
  %v1525 = vmul.f32 %v1397, 0.2
  %v1526 = vmul.f32 %v1398, 0.2
  %v1527 = vmul.f32 %v1399, 0.2
  %v1528 = vmul.f32 %v1400, 0.2
  %v1529 = vmul.f32 %v1401, 0.2
  %v1530 = vmul.f32 %v1402, 0.2
  %v1531 = vmul.f32 %v1403, 0.2
  %v1532 = vmul.f32 %v1404, 0.2
  %v1533 = vmul.f32 %v1405, 0.2
  %v1534 = vmul.f32 %v1406, 0.2
  %v1535 = vmul.f32 %v1407, 0.2
  %v1536 = vmul.f32 %v1408, 0.2
  %v1537 = vmul.f32 %v1409, 0.2
  %v1538 = vmul.f32 %v1410, 0.2
  %v1539 = vmul.f32 %v1411, 0.2
  %v1540 = vmul.f32 %v1412, 0.2
  %v1541 = vmul.f32 %v1413, 0.2
  %v1542 = vmul.f32 %v1414, 0.2
  %v1543 = vmul.f32 %v1415, 0.2
  %v1544 = vmul.f32 %v1416, 0.2
  %v1545 = vmul.f32 %v1417, 0.2
  %v1546 = vmul.f32 %v1418, 0.2
  %v1547 = vmul.f32 %v1419, 0.2
  %v1548 = vmul.f32 %v1420, 0.2
  %v1549 = vmul.f32 %v1421, 0.2
  %v1550 = vmul.f32 %v1422, 0.2
  %v1551 = vmul.f32 %v1423, 0.2
  %v1552 = vmul.f32 %v1424, 0.2
  %v1553 = vsel %vm1425, %v1361, %v1489
  %v1554 = vsel %vm1426, %v1362, %v1490
  %v1555 = vsel %vm1427, %v1363, %v1491
  %v1556 = vsel %vm1428, %v1364, %v1492
  %v1557 = vsel %vm1429, %v1365, %v1493
  %v1558 = vsel %vm1430, %v1366, %v1494
  %v1559 = vsel %vm1431, %v1367, %v1495
  %v1560 = vsel %vm1432, %v1368, %v1496
  %v1561 = vsel %vm1433, %v1369, %v1497
  %v1562 = vsel %vm1434, %v1370, %v1498
  %v1563 = vsel %vm1435, %v1371, %v1499
  %v1564 = vsel %vm1436, %v1372, %v1500
  %v1565 = vsel %vm1437, %v1373, %v1501
  %v1566 = vsel %vm1438, %v1374, %v1502
  %v1567 = vsel %vm1439, %v1375, %v1503
  %v1568 = vsel %vm1440, %v1376, %v1504
  %v1569 = vsel %vm1441, %v1377, %v1505
  %v1570 = vsel %vm1442, %v1378, %v1506
  %v1571 = vsel %vm1443, %v1379, %v1507
  %v1572 = vsel %vm1444, %v1380, %v1508
  %v1573 = vsel %vm1445, %v1381, %v1509
  %v1574 = vsel %vm1446, %v1382, %v1510
  %v1575 = vsel %vm1447, %v1383, %v1511
  %v1576 = vsel %vm1448, %v1384, %v1512
  %v1577 = vsel %vm1449, %v1385, %v1513
  %v1578 = vsel %vm1450, %v1386, %v1514
  %v1579 = vsel %vm1451, %v1387, %v1515
  %v1580 = vsel %vm1452, %v1388, %v1516
  %v1581 = vsel %vm1453, %v1389, %v1517
  %v1582 = vsel %vm1454, %v1390, %v1518
  %v1583 = vsel %vm1455, %v1391, %v1519
  %v1584 = vsel %vm1456, %v1392, %v1520
  %v1585 = vsel %vm1457, %v1393, %v1521
  %v1586 = vsel %vm1458, %v1394, %v1522
  %v1587 = vsel %vm1459, %v1395, %v1523
  %v1588 = vsel %vm1460, %v1396, %v1524
  %v1589 = vsel %vm1461, %v1397, %v1525
  %v1590 = vsel %vm1462, %v1398, %v1526
  %v1591 = vsel %vm1463, %v1399, %v1527
  %v1592 = vsel %vm1464, %v1400, %v1528
  %v1593 = vsel %vm1465, %v1401, %v1529
  %v1594 = vsel %vm1466, %v1402, %v1530
  %v1595 = vsel %vm1467, %v1403, %v1531
  %v1596 = vsel %vm1468, %v1404, %v1532
  %v1597 = vsel %vm1469, %v1405, %v1533
  %v1598 = vsel %vm1470, %v1406, %v1534
  %v1599 = vsel %vm1471, %v1407, %v1535
  %v1600 = vsel %vm1472, %v1408, %v1536
  %v1601 = vsel %vm1473, %v1409, %v1537
  %v1602 = vsel %vm1474, %v1410, %v1538
  %v1603 = vsel %vm1475, %v1411, %v1539
  %v1604 = vsel %vm1476, %v1412, %v1540
  %v1605 = vsel %vm1477, %v1413, %v1541
  %v1606 = vsel %vm1478, %v1414, %v1542
  %v1607 = vsel %vm1479, %v1415, %v1543
  %v1608 = vsel %vm1480, %v1416, %v1544
  %v1609 = vsel %vm1481, %v1417, %v1545
  %v1610 = vsel %vm1482, %v1418, %v1546
  %v1611 = vsel %vm1483, %v1419, %v1547
  %v1612 = vsel %vm1484, %v1420, %v1548
  %v1613 = vsel %vm1485, %v1421, %v1549
  %v1614 = vsel %vm1486, %v1422, %v1550
  %v1615 = vsel %vm1487, %v1423, %v1551
  %v1616 = vsel %vm1488, %v1424, %v1552
  %v1617 = vpack.c.bf16 %v1554, %v1553
  %v1618 = vpack.c.bf16 %v1556, %v1555
  %v1619 = vpack.c.bf16 %v1558, %v1557
  %v1620 = vpack.c.bf16 %v1560, %v1559
  %v1621 = vpack.c.bf16 %v1562, %v1561
  %v1622 = vpack.c.bf16 %v1564, %v1563
  %v1623 = vpack.c.bf16 %v1566, %v1565
  %v1624 = vpack.c.bf16 %v1568, %v1567
  %v1625 = vpack.c.bf16 %v1570, %v1569
  %v1626 = vpack.c.bf16 %v1572, %v1571
  %v1627 = vpack.c.bf16 %v1574, %v1573
  %v1628 = vpack.c.bf16 %v1576, %v1575
  %v1629 = vpack.c.bf16 %v1578, %v1577
  %v1630 = vpack.c.bf16 %v1580, %v1579
  %v1631 = vpack.c.bf16 %v1582, %v1581
  %v1632 = vpack.c.bf16 %v1584, %v1583
  %v1633 = vpack.c.bf16 %v1586, %v1585
  %v1634 = vpack.c.bf16 %v1588, %v1587
  %v1635 = vpack.c.bf16 %v1590, %v1589
  %v1636 = vpack.c.bf16 %v1592, %v1591
  %v1637 = vpack.c.bf16 %v1594, %v1593
  %v1638 = vpack.c.bf16 %v1596, %v1595
  %v1639 = vpack.c.bf16 %v1598, %v1597
  %v1640 = vpack.c.bf16 %v1600, %v1599
  %v1641 = vpack.c.bf16 %v1602, %v1601
  %v1642 = vpack.c.bf16 %v1604, %v1603
  %v1643 = vpack.c.bf16 %v1606, %v1605
  %v1644 = vpack.c.bf16 %v1608, %v1607
  %v1645 = vpack.c.bf16 %v1610, %v1609
  %v1646 = vpack.c.bf16 %v1612, %v1611
  %v1647 = vpack.c.bf16 %v1614, %v1613
  %v1648 = vpack.c.bf16 %v1616, %v1615
  %v1681 = vunpack.c.l.b16 %v1617
  %v1682 = vunpack.c.h.b16 %v1617
  %v1683 = vunpack.c.l.b16 %v1618
  %v1684 = vunpack.c.h.b16 %v1618
  %v1685 = vunpack.c.l.b16 %v1619
  %v1686 = vunpack.c.h.b16 %v1619
  %v1687 = vunpack.c.l.b16 %v1620
  %v1688 = vunpack.c.h.b16 %v1620
  %v1689 = vunpack.c.l.b16 %v1621
  %v1690 = vunpack.c.h.b16 %v1621
  %v1691 = vunpack.c.l.b16 %v1622
  %v1692 = vunpack.c.h.b16 %v1622
  %v1693 = vunpack.c.l.b16 %v1623
  %v1694 = vunpack.c.h.b16 %v1623
  %v1695 = vunpack.c.l.b16 %v1624
  %v1696 = vunpack.c.h.b16 %v1624
  %v1697 = vunpack.c.l.b16 %v1625
  %v1698 = vunpack.c.h.b16 %v1625
  %v1699 = vunpack.c.l.b16 %v1626
  %v1700 = vunpack.c.h.b16 %v1626
  %v1701 = vunpack.c.l.b16 %v1627
  %v1702 = vunpack.c.h.b16 %v1627
  %v1703 = vunpack.c.l.b16 %v1628
  %v1704 = vunpack.c.h.b16 %v1628
  %v1705 = vunpack.c.l.b16 %v1629
  %v1706 = vunpack.c.h.b16 %v1629
  %v1707 = vunpack.c.l.b16 %v1630
  %v1708 = vunpack.c.h.b16 %v1630
  %v1709 = vunpack.c.l.b16 %v1631
  %v1710 = vunpack.c.h.b16 %v1631
  %v1711 = vunpack.c.l.b16 %v1632
  %v1712 = vunpack.c.h.b16 %v1632
  %v1713 = vunpack.c.l.b16 %v1633
  %v1714 = vunpack.c.h.b16 %v1633
  %v1715 = vunpack.c.l.b16 %v1634
  %v1716 = vunpack.c.h.b16 %v1634
  %v1717 = vunpack.c.l.b16 %v1635
  %v1718 = vunpack.c.h.b16 %v1635
  %v1719 = vunpack.c.l.b16 %v1636
  %v1720 = vunpack.c.h.b16 %v1636
  %v1721 = vunpack.c.l.b16 %v1637
  %v1722 = vunpack.c.h.b16 %v1637
  %v1723 = vunpack.c.l.b16 %v1638
  %v1724 = vunpack.c.h.b16 %v1638
  %v1725 = vunpack.c.l.b16 %v1639
  %v1726 = vunpack.c.h.b16 %v1639
  %v1727 = vunpack.c.l.b16 %v1640
  %v1728 = vunpack.c.h.b16 %v1640
  %v1729 = vunpack.c.l.b16 %v1641
  %v1730 = vunpack.c.h.b16 %v1641
  %v1731 = vunpack.c.l.b16 %v1642
  %v1732 = vunpack.c.h.b16 %v1642
  %v1733 = vunpack.c.l.b16 %v1643
  %v1734 = vunpack.c.h.b16 %v1643
  %v1735 = vunpack.c.l.b16 %v1644
  %v1736 = vunpack.c.h.b16 %v1644
  %v1737 = vunpack.c.l.b16 %v1645
  %v1738 = vunpack.c.h.b16 %v1645
  %v1739 = vunpack.c.l.b16 %v1646
  %v1740 = vunpack.c.h.b16 %v1646
  %v1741 = vunpack.c.l.b16 %v1647
  %v1742 = vunpack.c.h.b16 %v1647
  %v1743 = vunpack.c.l.b16 %v1648
  %v1744 = vunpack.c.h.b16 %v1648
  %v1745 = vpack.c.b16 %v1681, %v1681
  %v1746 = vpack.c.b16 %v1682, %v1682
  %v1747 = vpack.c.b16 %v1683, %v1683
  %v1748 = vpack.c.b16 %v1684, %v1684
  %v1749 = vpack.c.b16 %v1685, %v1685
  %v1750 = vpack.c.b16 %v1686, %v1686
  %v1751 = vpack.c.b16 %v1687, %v1687
  %v1752 = vpack.c.b16 %v1688, %v1688
  %v1753 = vpack.c.b16 %v1689, %v1689
  %v1754 = vpack.c.b16 %v1690, %v1690
  %v1755 = vpack.c.b16 %v1691, %v1691
  %v1756 = vpack.c.b16 %v1692, %v1692
  %v1757 = vpack.c.b16 %v1693, %v1693
  %v1758 = vpack.c.b16 %v1694, %v1694
  %v1759 = vpack.c.b16 %v1695, %v1695
  %v1760 = vpack.c.b16 %v1696, %v1696
  %v1761 = vpack.c.b16 %v1697, %v1697
  %v1762 = vpack.c.b16 %v1698, %v1698
  %v1763 = vpack.c.b16 %v1699, %v1699
  %v1764 = vpack.c.b16 %v1700, %v1700
  %v1765 = vpack.c.b16 %v1701, %v1701
  %v1766 = vpack.c.b16 %v1702, %v1702
  %v1767 = vpack.c.b16 %v1703, %v1703
  %v1768 = vpack.c.b16 %v1704, %v1704
  %v1769 = vpack.c.b16 %v1705, %v1705
  %v1770 = vpack.c.b16 %v1706, %v1706
  %v1771 = vpack.c.b16 %v1707, %v1707
  %v1772 = vpack.c.b16 %v1708, %v1708
  %v1773 = vpack.c.b16 %v1709, %v1709
  %v1774 = vpack.c.b16 %v1710, %v1710
  %v1775 = vpack.c.b16 %v1711, %v1711
  %v1776 = vpack.c.b16 %v1712, %v1712
  %v1777 = vpack.c.b16 %v1713, %v1713
  %v1778 = vpack.c.b16 %v1714, %v1714
  %v1779 = vpack.c.b16 %v1715, %v1715
  %v1780 = vpack.c.b16 %v1716, %v1716
  %v1781 = vpack.c.b16 %v1717, %v1717
  %v1782 = vpack.c.b16 %v1718, %v1718
  %v1783 = vpack.c.b16 %v1719, %v1719
  %v1784 = vpack.c.b16 %v1720, %v1720
  %v1785 = vpack.c.b16 %v1721, %v1721
  %v1786 = vpack.c.b16 %v1722, %v1722
  %v1787 = vpack.c.b16 %v1723, %v1723
  %v1788 = vpack.c.b16 %v1724, %v1724
  %v1789 = vpack.c.b16 %v1725, %v1725
  %v1790 = vpack.c.b16 %v1726, %v1726
  %v1791 = vpack.c.b16 %v1727, %v1727
  %v1792 = vpack.c.b16 %v1728, %v1728
  %v1793 = vpack.c.b16 %v1729, %v1729
  %v1794 = vpack.c.b16 %v1730, %v1730
  %v1795 = vpack.c.b16 %v1731, %v1731
  %v1796 = vpack.c.b16 %v1732, %v1732
  %v1797 = vpack.c.b16 %v1733, %v1733
  %v1798 = vpack.c.b16 %v1734, %v1734
  %v1799 = vpack.c.b16 %v1735, %v1735
  %v1800 = vpack.c.b16 %v1736, %v1736
  %v1801 = vpack.c.b16 %v1737, %v1737
  %v1802 = vpack.c.b16 %v1738, %v1738
  %v1803 = vpack.c.b16 %v1739, %v1739
  %v1804 = vpack.c.b16 %v1740, %v1740
  %v1805 = vpack.c.b16 %v1741, %v1741
  %v1806 = vpack.c.b16 %v1742, %v1742
  %v1807 = vpack.c.b16 %v1743, %v1743
  %v1808 = vpack.c.b16 %v1744, %v1744
  %vm1873 = vcmask 257024
  %1874 = vst.msk [vmem:[%s4] sm:$0xf] %vm1873, %v1745
  %1875 = vst.msk [vmem:[%s4 + $0x4] sm:$0xf] %vm1873, %v1746
  %1876 = vst.msk [vmem:[%s4 + $0x8] sm:$0xf] %vm1873, %v1747
  %1877 = vst.msk [vmem:[%s4 + $0xc] sm:$0xf] %vm1873, %v1748
  %1878 = vst.msk [vmem:[%s4 + $0x10] sm:$0xf] %vm1873, %v1749
  %1879 = vst.msk [vmem:[%s4 + $0x14] sm:$0xf] %vm1873, %v1750
  %1880 = vst.msk [vmem:[%s4 + $0x18] sm:$0xf] %vm1873, %v1751
  %1881 = vst.msk [vmem:[%s4 + $0x1c] sm:$0xf] %vm1873, %v1752
  %1882 = vst.msk [vmem:[%s4 + $0x20] sm:$0xf] %vm1873, %v1753
  %1883 = vst.msk [vmem:[%s4 + $0x24] sm:$0xf] %vm1873, %v1754
  %1884 = vst.msk [vmem:[%s4 + $0x28] sm:$0xf] %vm1873, %v1755
  %1885 = vst.msk [vmem:[%s4 + $0x2c] sm:$0xf] %vm1873, %v1756
  %1886 = vst.msk [vmem:[%s4 + $0x30] sm:$0xf] %vm1873, %v1757
  %1887 = vst.msk [vmem:[%s4 + $0x34] sm:$0xf] %vm1873, %v1758
  %1888 = vst.msk [vmem:[%s4 + $0x38] sm:$0xf] %vm1873, %v1759
  %1889 = vst.msk [vmem:[%s4 + $0x3c] sm:$0xf] %vm1873, %v1760
  %1890 = vst.msk [vmem:[%s4 + $0x40] sm:$0xf] %vm1873, %v1761
  %1891 = vst.msk [vmem:[%s4 + $0x44] sm:$0xf] %vm1873, %v1762
  %1892 = vst.msk [vmem:[%s4 + $0x48] sm:$0xf] %vm1873, %v1763
  %1893 = vst.msk [vmem:[%s4 + $0x4c] sm:$0xf] %vm1873, %v1764
  %1894 = vst.msk [vmem:[%s4 + $0x50] sm:$0xf] %vm1873, %v1765
  %1895 = vst.msk [vmem:[%s4 + $0x54] sm:$0xf] %vm1873, %v1766
  %1896 = vst.msk [vmem:[%s4 + $0x58] sm:$0xf] %vm1873, %v1767
  %1897 = vst.msk [vmem:[%s4 + $0x5c] sm:$0xf] %vm1873, %v1768
  %1898 = vst.msk [vmem:[%s4 + $0x60] sm:$0xf] %vm1873, %v1769
  %1899 = vst.msk [vmem:[%s4 + $0x64] sm:$0xf] %vm1873, %v1770
  %1900 = vst.msk [vmem:[%s4 + $0x68] sm:$0xf] %vm1873, %v1771
  %1901 = vst.msk [vmem:[%s4 + $0x6c] sm:$0xf] %vm1873, %v1772
  %1902 = vst.msk [vmem:[%s4 + $0x70] sm:$0xf] %vm1873, %v1773
  %1903 = vst.msk [vmem:[%s4 + $0x74] sm:$0xf] %vm1873, %v1774
  %1904 = vst.msk [vmem:[%s4 + $0x78] sm:$0xf] %vm1873, %v1775
  %1905 = vst.msk [vmem:[%s4 + $0x7c] sm:$0xf] %vm1873, %v1776
  %1906 = vst.msk [vmem:[%s4 + $0x80] sm:$0xf] %vm1873, %v1777
  %1907 = vst.msk [vmem:[%s4 + $0x84] sm:$0xf] %vm1873, %v1778
  %1908 = vst.msk [vmem:[%s4 + $0x88] sm:$0xf] %vm1873, %v1779
  %1909 = vst.msk [vmem:[%s4 + $0x8c] sm:$0xf] %vm1873, %v1780
  %1910 = vst.msk [vmem:[%s4 + $0x90] sm:$0xf] %vm1873, %v1781
  %1911 = vst.msk [vmem:[%s4 + $0x94] sm:$0xf] %vm1873, %v1782
  %1912 = vst.msk [vmem:[%s4 + $0x98] sm:$0xf] %vm1873, %v1783
  %1913 = vst.msk [vmem:[%s4 + $0x9c] sm:$0xf] %vm1873, %v1784
  %1914 = vst.msk [vmem:[%s4 + $0xa0] sm:$0xf] %vm1873, %v1785
  %1915 = vst.msk [vmem:[%s4 + $0xa4] sm:$0xf] %vm1873, %v1786
  %1916 = vst.msk [vmem:[%s4 + $0xa8] sm:$0xf] %vm1873, %v1787
  %1917 = vst.msk [vmem:[%s4 + $0xac] sm:$0xf] %vm1873, %v1788
  %1918 = vst.msk [vmem:[%s4 + $0xb0] sm:$0xf] %vm1873, %v1789
  %1919 = vst.msk [vmem:[%s4 + $0xb4] sm:$0xf] %vm1873, %v1790
  %1920 = vst.msk [vmem:[%s4 + $0xb8] sm:$0xf] %vm1873, %v1791
  %1921 = vst.msk [vmem:[%s4 + $0xbc] sm:$0xf] %vm1873, %v1792
  %1922 = vst.msk [vmem:[%s4 + $0xc0] sm:$0xf] %vm1873, %v1793
  %1923 = vst.msk [vmem:[%s4 + $0xc4] sm:$0xf] %vm1873, %v1794
  %1924 = vst.msk [vmem:[%s4 + $0xc8] sm:$0xf] %vm1873, %v1795
  %1925 = vst.msk [vmem:[%s4 + $0xcc] sm:$0xf] %vm1873, %v1796
  %1926 = vst.msk [vmem:[%s4 + $0xd0] sm:$0xf] %vm1873, %v1797
  %1927 = vst.msk [vmem:[%s4 + $0xd4] sm:$0xf] %vm1873, %v1798
  %1928 = vst.msk [vmem:[%s4 + $0xd8] sm:$0xf] %vm1873, %v1799
  %1929 = vst.msk [vmem:[%s4 + $0xdc] sm:$0xf] %vm1873, %v1800
  %1930 = vst.msk [vmem:[%s4 + $0xe0] sm:$0xf] %vm1873, %v1801
  %1931 = vst.msk [vmem:[%s4 + $0xe4] sm:$0xf] %vm1873, %v1802
  %1932 = vst.msk [vmem:[%s4 + $0xe8] sm:$0xf] %vm1873, %v1803
  %1933 = vst.msk [vmem:[%s4 + $0xec] sm:$0xf] %vm1873, %v1804
  %1934 = vst.msk [vmem:[%s4 + $0xf0] sm:$0xf] %vm1873, %v1805
  %1935 = vst.msk [vmem:[%s4 + $0xf4] sm:$0xf] %vm1873, %v1806
  %1936 = vst.msk [vmem:[%s4 + $0xf8] sm:$0xf] %vm1873, %v1807
  %1937 = vst.msk [vmem:[%s4 + $0xfc] sm:$0xf] %vm1873, %v1808
  // Predicated region
  $region18: #{discriminator_forward.6} parent=0 // pred_check
    _
  $region19: #{discriminator_forward.6} parent=0 // pred_check_branch
    %1939 = sbr.rel (0) target = $region21
  $region20: #{discriminator_forward.6} parent=0 // pred_region
    _
  $region21: #{discriminator_forward.6} parent=0 // pred_fallthru
    _
  // Predicated region
  $region22: #{discriminator_forward.6} parent=0 // pred_check
    _
  $region23: #{discriminator_forward.6} parent=0 // pred_check_branch
    %1941 = sbr.rel (0) target = $region25
  $region24: #{discriminator_forward.6} parent=0 // pred_region
    _
  $region25: #{discriminator_forward.6} parent=0 // pred_fallthru
    _

// kernel: discriminator_forward.7
$region0: #{discriminator_forward.7}
  #allocation0 [shape = 'u32[]', space=smem, size = 0x4, offset = 0x4, fixed_abs, tag = 'smem constant byte address 0x4 - core index']
  #allocation1 [shape = 'u32[144,128]{1,0:T(1,128)}', space=vmem, size = 0x12000, scoped, tag = 'internal scratch']
  %s0 = inlined_call_operand.vmem [shape: bf16[128,512], index: 0, kind: input, shape index: {}]
  %s1 = inlined_call_operand.vmem [shape: bf16[512,64], index: 1, kind: input, shape index: {}]
  %s2 = inlined_call_operand.vmem [shape: f32[1,64], index: 2, kind: input, shape index: {}]
  %s3 = inlined_call_operand.vmem [shape: f32[1,64], index: 3, kind: input, shape index: {}]
  %s4 = inlined_call_operand.vmem [shape: bf16[128,64], index: 4, kind: output, shape index: {}]
  %s5 = sld [smem:[#allocation0]]
  $region26: #{discriminator_forward.7} parent=0
    _
  %s7 = ssub.s32 1, %s5
  %s8 = scalar_select 0, %s7, %s5
  // Predicated region
  $region2: #{discriminator_forward.7} parent=0 // pred_check
    _
  $region3: #{discriminator_forward.7} parent=0 // pred_check_branch
    %10 = sbr.rel (0) target = $region5
  $region4: #{discriminator_forward.7} parent=0 // pred_region
    _
  $region5: #{discriminator_forward.7} parent=0 // pred_fallthru
    _
  // Predicated region
  $region6: #{discriminator_forward.7} parent=0 // pred_check
    _
  $region7: #{discriminator_forward.7} parent=0 // pred_check_branch
    %12 = sbr.rel (0) target = $region9
  $region8: #{discriminator_forward.7} parent=0 // pred_region
    _
  $region9: #{discriminator_forward.7} parent=0 // pred_fallthru
    _
  // Predicated region
  $region10: #{discriminator_forward.7} parent=0 // pred_check
    _
  $region11: #{discriminator_forward.7} parent=0 // pred_check_branch
    %14 = sbr.rel (0) target = $region13
  $region12: #{discriminator_forward.7} parent=0 // pred_region
    _
  $region13: #{discriminator_forward.7} parent=0 // pred_fallthru
    _
  // Predicated region
  $region14: #{discriminator_forward.7} parent=0 // pred_check
    _
  $region15: #{discriminator_forward.7} parent=0 // pred_check_branch
    %16 = sbr.rel (0) target = $region17
  $region16: #{discriminator_forward.7} parent=0 // pred_region
    _
  $region17: #{discriminator_forward.7} parent=0 // pred_fallthru
    _
  %v18 = vld [vmem:[%s0] sm:$0xff]
  %v19 = vld [vmem:[%s0 + $0x8] sm:$0xff]
  %v20 = vld [vmem:[%s0 + $0x10] sm:$0xff]
  %v21 = vld [vmem:[%s0 + $0x18] sm:$0xff]
  %v22 = vld [vmem:[%s0 + $0x20] sm:$0xff]
  %v23 = vld [vmem:[%s0 + $0x28] sm:$0xff]
  %v24 = vld [vmem:[%s0 + $0x30] sm:$0xff]
  %v25 = vld [vmem:[%s0 + $0x38] sm:$0xff]
  %v26 = vld [vmem:[%s0 + $0x40] sm:$0xff]
  %v27 = vld [vmem:[%s0 + $0x48] sm:$0xff]
  %v28 = vld [vmem:[%s0 + $0x50] sm:$0xff]
  %v29 = vld [vmem:[%s0 + $0x58] sm:$0xff]
  %v30 = vld [vmem:[%s0 + $0x60] sm:$0xff]
  %v31 = vld [vmem:[%s0 + $0x68] sm:$0xff]
  %v32 = vld [vmem:[%s0 + $0x70] sm:$0xff]
  %v33 = vld [vmem:[%s0 + $0x78] sm:$0xff]
  %v34 = vld [vmem:[%s0 + $0x80] sm:$0xff]
  %v35 = vld [vmem:[%s0 + $0x88] sm:$0xff]
  %v36 = vld [vmem:[%s0 + $0x90] sm:$0xff]
  %v37 = vld [vmem:[%s0 + $0x98] sm:$0xff]
  %v38 = vld [vmem:[%s0 + $0xa0] sm:$0xff]
  %v39 = vld [vmem:[%s0 + $0xa8] sm:$0xff]
  %v40 = vld [vmem:[%s0 + $0xb0] sm:$0xff]
  %v41 = vld [vmem:[%s0 + $0xb8] sm:$0xff]
  %v42 = vld [vmem:[%s0 + $0xc0] sm:$0xff]
  %v43 = vld [vmem:[%s0 + $0xc8] sm:$0xff]
  %v44 = vld [vmem:[%s0 + $0xd0] sm:$0xff]
  %v45 = vld [vmem:[%s0 + $0xd8] sm:$0xff]
  %v46 = vld [vmem:[%s0 + $0xe0] sm:$0xff]
  %v47 = vld [vmem:[%s0 + $0xe8] sm:$0xff]
  %v48 = vld [vmem:[%s0 + $0xf0] sm:$0xff]
  %v49 = vld [vmem:[%s0 + $0xf8] sm:$0xff]
  %v50 = vld [vmem:[%s1] sm:$0xf]
  %v51 = vld [vmem:[%s1 + $0x4] sm:$0xf]
  %v52 = vld [vmem:[%s1 + $0x8] sm:$0xf]
  %v53 = vld [vmem:[%s1 + $0xc] sm:$0xf]
  %v54 = vld [vmem:[%s1 + $0x10] sm:$0xf]
  %v55 = vld [vmem:[%s1 + $0x14] sm:$0xf]
  %v56 = vld [vmem:[%s1 + $0x18] sm:$0xf]
  %v57 = vld [vmem:[%s1 + $0x1c] sm:$0xf]
  %v58 = vld [vmem:[%s1 + $0x20] sm:$0xf]
  %v59 = vld [vmem:[%s1 + $0x24] sm:$0xf]
  %v60 = vld [vmem:[%s1 + $0x28] sm:$0xf]
  %v61 = vld [vmem:[%s1 + $0x2c] sm:$0xf]
  %v62 = vld [vmem:[%s1 + $0x30] sm:$0xf]
  %v63 = vld [vmem:[%s1 + $0x34] sm:$0xf]
  %v64 = vld [vmem:[%s1 + $0x38] sm:$0xf]
  %v65 = vld [vmem:[%s1 + $0x3c] sm:$0xf]
  %v66 = vld [vmem:[%s1 + $0x40] sm:$0xf]
  %v67 = vld [vmem:[%s1 + $0x44] sm:$0xf]
  %v68 = vld [vmem:[%s1 + $0x48] sm:$0xf]
  %v69 = vld [vmem:[%s1 + $0x4c] sm:$0xf]
  %v70 = vld [vmem:[%s1 + $0x50] sm:$0xf]
  %v71 = vld [vmem:[%s1 + $0x54] sm:$0xf]
  %v72 = vld [vmem:[%s1 + $0x58] sm:$0xf]
  %v73 = vld [vmem:[%s1 + $0x5c] sm:$0xf]
  %v74 = vld [vmem:[%s1 + $0x60] sm:$0xf]
  %v75 = vld [vmem:[%s1 + $0x64] sm:$0xf]
  %v76 = vld [vmem:[%s1 + $0x68] sm:$0xf]
  %v77 = vld [vmem:[%s1 + $0x6c] sm:$0xf]
  %v78 = vld [vmem:[%s1 + $0x70] sm:$0xf]
  %v79 = vld [vmem:[%s1 + $0x74] sm:$0xf]
  %v80 = vld [vmem:[%s1 + $0x78] sm:$0xf]
  %v81 = vld [vmem:[%s1 + $0x7c] sm:$0xf]
  %v82 = vld [vmem:[%s1 + $0x80] sm:$0xf]
  %v83 = vld [vmem:[%s1 + $0x84] sm:$0xf]
  %v84 = vld [vmem:[%s1 + $0x88] sm:$0xf]
  %v85 = vld [vmem:[%s1 + $0x8c] sm:$0xf]
  %v86 = vld [vmem:[%s1 + $0x90] sm:$0xf]
  %v87 = vld [vmem:[%s1 + $0x94] sm:$0xf]
  %v88 = vld [vmem:[%s1 + $0x98] sm:$0xf]
  %v89 = vld [vmem:[%s1 + $0x9c] sm:$0xf]
  %v90 = vld [vmem:[%s1 + $0xa0] sm:$0xf]
  %v91 = vld [vmem:[%s1 + $0xa4] sm:$0xf]
  %v92 = vld [vmem:[%s1 + $0xa8] sm:$0xf]
  %v93 = vld [vmem:[%s1 + $0xac] sm:$0xf]
  %v94 = vld [vmem:[%s1 + $0xb0] sm:$0xf]
  %v95 = vld [vmem:[%s1 + $0xb4] sm:$0xf]
  %v96 = vld [vmem:[%s1 + $0xb8] sm:$0xf]
  %v97 = vld [vmem:[%s1 + $0xbc] sm:$0xf]
  %v98 = vld [vmem:[%s1 + $0xc0] sm:$0xf]
  %v99 = vld [vmem:[%s1 + $0xc4] sm:$0xf]
  %v100 = vld [vmem:[%s1 + $0xc8] sm:$0xf]
  %v101 = vld [vmem:[%s1 + $0xcc] sm:$0xf]
  %v102 = vld [vmem:[%s1 + $0xd0] sm:$0xf]
  %v103 = vld [vmem:[%s1 + $0xd4] sm:$0xf]
  %v104 = vld [vmem:[%s1 + $0xd8] sm:$0xf]
  %v105 = vld [vmem:[%s1 + $0xdc] sm:$0xf]
  %v106 = vld [vmem:[%s1 + $0xe0] sm:$0xf]
  %v107 = vld [vmem:[%s1 + $0xe4] sm:$0xf]
  %v108 = vld [vmem:[%s1 + $0xe8] sm:$0xf]
  %v109 = vld [vmem:[%s1 + $0xec] sm:$0xf]
  %v110 = vld [vmem:[%s1 + $0xf0] sm:$0xf]
  %v111 = vld [vmem:[%s1 + $0xf4] sm:$0xf]
  %v112 = vld [vmem:[%s1 + $0xf8] sm:$0xf]
  %v113 = vld [vmem:[%s1 + $0xfc] sm:$0xf]
  %v146 = vunpack.c.l.b16 %v18
  %v147 = vunpack.c.h.b16 %v18
  %v148 = vunpack.c.l.b16 %v19
  %v149 = vunpack.c.h.b16 %v19
  %v150 = vunpack.c.l.b16 %v20
  %v151 = vunpack.c.h.b16 %v20
  %v152 = vunpack.c.l.b16 %v21
  %v153 = vunpack.c.h.b16 %v21
  %v154 = vunpack.c.l.b16 %v22
  %v155 = vunpack.c.h.b16 %v22
  %v156 = vunpack.c.l.b16 %v23
  %v157 = vunpack.c.h.b16 %v23
  %v158 = vunpack.c.l.b16 %v24
  %v159 = vunpack.c.h.b16 %v24
  %v160 = vunpack.c.l.b16 %v25
  %v161 = vunpack.c.h.b16 %v25
  %v162 = vunpack.c.l.b16 %v26
  %v163 = vunpack.c.h.b16 %v26
  %v164 = vunpack.c.l.b16 %v27
  %v165 = vunpack.c.h.b16 %v27
  %v166 = vunpack.c.l.b16 %v28
  %v167 = vunpack.c.h.b16 %v28
  %v168 = vunpack.c.l.b16 %v29
  %v169 = vunpack.c.h.b16 %v29
  %v170 = vunpack.c.l.b16 %v30
  %v171 = vunpack.c.h.b16 %v30
  %v172 = vunpack.c.l.b16 %v31
  %v173 = vunpack.c.h.b16 %v31
  %v174 = vunpack.c.l.b16 %v32
  %v175 = vunpack.c.h.b16 %v32
  %v176 = vunpack.c.l.b16 %v33
  %v177 = vunpack.c.h.b16 %v33
  %v178 = vunpack.c.l.b16 %v34
  %v179 = vunpack.c.h.b16 %v34
  %v180 = vunpack.c.l.b16 %v35
  %v181 = vunpack.c.h.b16 %v35
  %v182 = vunpack.c.l.b16 %v36
  %v183 = vunpack.c.h.b16 %v36
  %v184 = vunpack.c.l.b16 %v37
  %v185 = vunpack.c.h.b16 %v37
  %v186 = vunpack.c.l.b16 %v38
  %v187 = vunpack.c.h.b16 %v38
  %v188 = vunpack.c.l.b16 %v39
  %v189 = vunpack.c.h.b16 %v39
  %v190 = vunpack.c.l.b16 %v40
  %v191 = vunpack.c.h.b16 %v40
  %v192 = vunpack.c.l.b16 %v41
  %v193 = vunpack.c.h.b16 %v41
  %v194 = vunpack.c.l.b16 %v42
  %v195 = vunpack.c.h.b16 %v42
  %v196 = vunpack.c.l.b16 %v43
  %v197 = vunpack.c.h.b16 %v43
  %v198 = vunpack.c.l.b16 %v44
  %v199 = vunpack.c.h.b16 %v44
  %v200 = vunpack.c.l.b16 %v45
  %v201 = vunpack.c.h.b16 %v45
  %v202 = vunpack.c.l.b16 %v46
  %v203 = vunpack.c.h.b16 %v46
  %v204 = vunpack.c.l.b16 %v47
  %v205 = vunpack.c.h.b16 %v47
  %v206 = vunpack.c.l.b16 %v48
  %v207 = vunpack.c.h.b16 %v48
  %v208 = vunpack.c.l.b16 %v49
  %v209 = vunpack.c.h.b16 %v49
  %v210 = vpack.c.b16 %v150, %v146
  %v211 = vpack.c.b16 %v151, %v147
  %v212 = vpack.c.b16 %v152, %v148
  %v213 = vpack.c.b16 %v153, %v149
  %v214 = vpack.c.b16 %v158, %v154
  %v215 = vpack.c.b16 %v159, %v155
  %v216 = vpack.c.b16 %v160, %v156
  %v217 = vpack.c.b16 %v161, %v157
  %v218 = vpack.c.b16 %v166, %v162
  %v219 = vpack.c.b16 %v167, %v163
  %v220 = vpack.c.b16 %v168, %v164
  %v221 = vpack.c.b16 %v169, %v165
  %v222 = vpack.c.b16 %v174, %v170
  %v223 = vpack.c.b16 %v175, %v171
  %v224 = vpack.c.b16 %v176, %v172
  %v225 = vpack.c.b16 %v177, %v173
  %v226 = vpack.c.b16 %v182, %v178
  %v227 = vpack.c.b16 %v183, %v179
  %v228 = vpack.c.b16 %v184, %v180
  %v229 = vpack.c.b16 %v185, %v181
  %v230 = vpack.c.b16 %v190, %v186
  %v231 = vpack.c.b16 %v191, %v187
  %v232 = vpack.c.b16 %v192, %v188
  %v233 = vpack.c.b16 %v193, %v189
  %v234 = vpack.c.b16 %v198, %v194
  %v235 = vpack.c.b16 %v199, %v195
  %v236 = vpack.c.b16 %v200, %v196
  %v237 = vpack.c.b16 %v201, %v197
  %v238 = vpack.c.b16 %v206, %v202
  %v239 = vpack.c.b16 %v207, %v203
  %v240 = vpack.c.b16 %v208, %v204
  %v241 = vpack.c.b16 %v209, %v205
  %v338 = vunpack.c.l.b16 %v50
  %v339 = vunpack.c.l.b16 %v51
  %v340 = vunpack.c.l.b16 %v52
  %v341 = vunpack.c.l.b16 %v53
  %v342 = vunpack.c.l.b16 %v54
  %v343 = vunpack.c.l.b16 %v55
  %v344 = vunpack.c.l.b16 %v56
  %v345 = vunpack.c.l.b16 %v57
  %v346 = vunpack.c.l.b16 %v58
  %v347 = vunpack.c.l.b16 %v59
  %v348 = vunpack.c.l.b16 %v60
  %v349 = vunpack.c.l.b16 %v61
  %v350 = vunpack.c.l.b16 %v62
  %v351 = vunpack.c.l.b16 %v63
  %v352 = vunpack.c.l.b16 %v64
  %v353 = vunpack.c.l.b16 %v65
  %v354 = vunpack.c.l.b16 %v66
  %v355 = vunpack.c.l.b16 %v67
  %v356 = vunpack.c.l.b16 %v68
  %v357 = vunpack.c.l.b16 %v69
  %v358 = vunpack.c.l.b16 %v70
  %v359 = vunpack.c.l.b16 %v71
  %v360 = vunpack.c.l.b16 %v72
  %v361 = vunpack.c.l.b16 %v73
  %v362 = vunpack.c.l.b16 %v74
  %v363 = vunpack.c.l.b16 %v75
  %v364 = vunpack.c.l.b16 %v76
  %v365 = vunpack.c.l.b16 %v77
  %v366 = vunpack.c.l.b16 %v78
  %v367 = vunpack.c.l.b16 %v79
  %v368 = vunpack.c.l.b16 %v80
  %v369 = vunpack.c.l.b16 %v81
  %v370 = vunpack.c.l.b16 %v82
  %v371 = vunpack.c.l.b16 %v83
  %v372 = vunpack.c.l.b16 %v84
  %v373 = vunpack.c.l.b16 %v85
  %v374 = vunpack.c.l.b16 %v86
  %v375 = vunpack.c.l.b16 %v87
  %v376 = vunpack.c.l.b16 %v88
  %v377 = vunpack.c.l.b16 %v89
  %v378 = vunpack.c.l.b16 %v90
  %v379 = vunpack.c.l.b16 %v91
  %v380 = vunpack.c.l.b16 %v92
  %v381 = vunpack.c.l.b16 %v93
  %v382 = vunpack.c.l.b16 %v94
  %v383 = vunpack.c.l.b16 %v95
  %v384 = vunpack.c.l.b16 %v96
  %v385 = vunpack.c.l.b16 %v97
  %v386 = vunpack.c.l.b16 %v98
  %v387 = vunpack.c.l.b16 %v99
  %v388 = vunpack.c.l.b16 %v100
  %v389 = vunpack.c.l.b16 %v101
  %v390 = vunpack.c.l.b16 %v102
  %v391 = vunpack.c.l.b16 %v103
  %v392 = vunpack.c.l.b16 %v104
  %v393 = vunpack.c.l.b16 %v105
  %v394 = vunpack.c.l.b16 %v106
  %v395 = vunpack.c.l.b16 %v107
  %v396 = vunpack.c.l.b16 %v108
  %v397 = vunpack.c.l.b16 %v109
  %v398 = vunpack.c.l.b16 %v110
  %v399 = vunpack.c.l.b16 %v111
  %v400 = vunpack.c.l.b16 %v112
  %v401 = vunpack.c.l.b16 %v113
  %v402 = vpack.c.b16 %v339, %v338
  %v403 = vpack.c.b16 %v341, %v340
  %v404 = vpack.c.b16 %v343, %v342
  %v405 = vpack.c.b16 %v345, %v344
  %v406 = vpack.c.b16 %v347, %v346
  %v407 = vpack.c.b16 %v349, %v348
  %v408 = vpack.c.b16 %v351, %v350
  %v409 = vpack.c.b16 %v353, %v352
  %v410 = vpack.c.b16 %v355, %v354
  %v411 = vpack.c.b16 %v357, %v356
  %v412 = vpack.c.b16 %v359, %v358
  %v413 = vpack.c.b16 %v361, %v360
  %v414 = vpack.c.b16 %v363, %v362
  %v415 = vpack.c.b16 %v365, %v364
  %v416 = vpack.c.b16 %v367, %v366
  %v417 = vpack.c.b16 %v369, %v368
  %v418 = vpack.c.b16 %v371, %v370
  %v419 = vpack.c.b16 %v373, %v372
  %v420 = vpack.c.b16 %v375, %v374
  %v421 = vpack.c.b16 %v377, %v376
  %v422 = vpack.c.b16 %v379, %v378
  %v423 = vpack.c.b16 %v381, %v380
  %v424 = vpack.c.b16 %v383, %v382
  %v425 = vpack.c.b16 %v385, %v384
  %v426 = vpack.c.b16 %v387, %v386
  %v427 = vpack.c.b16 %v389, %v388
  %v428 = vpack.c.b16 %v391, %v390
  %v429 = vpack.c.b16 %v393, %v392
  %v430 = vpack.c.b16 %v395, %v394
  %v431 = vpack.c.b16 %v397, %v396
  %v432 = vpack.c.b16 %v399, %v398
  %v433 = vpack.c.b16 %v401, %v400
  %466 = vmatprep.subr.bf16.mxu0 0
  %467 = vmatpush1.bf16.msra.mxu0 %v402
  %468 = vmatprep.subr.bf16.mxu0 0
  %469 = vmatpush1.bf16.msra.mxu0 %v403
  %470 = vmatprep.subr.bf16.mxu0 0
  %471 = vmatpush1.bf16.msra.mxu0 %v404
  %472 = vmatprep.subr.bf16.mxu0 0
  %473 = vmatpush1.bf16.msra.mxu0 %v405
  %474 = vmatprep.subr.bf16.mxu0 0
  %475 = vmatpush1.bf16.msra.mxu0 %v406
  %476 = vmatprep.subr.bf16.mxu0 0
  %477 = vmatpush1.bf16.msra.mxu0 %v407
  %478 = vmatprep.subr.bf16.mxu0 0
  %479 = vmatpush1.bf16.msra.mxu0 %v408
  %480 = vmatprep.subr.bf16.mxu0 0
  %481 = vmatpush1.bf16.msra.mxu0 %v409
  %482 = vmatprep.subr.bf16.mxu0 0
  %483 = vmatpush1.bf16.msra.mxu0 %v410
  %484 = vmatprep.subr.bf16.mxu0 0
  %485 = vmatpush1.bf16.msra.mxu0 %v411
  %486 = vmatprep.subr.bf16.mxu0 0
  %487 = vmatpush1.bf16.msra.mxu0 %v412
  %488 = vmatprep.subr.bf16.mxu0 0
  %489 = vmatpush1.bf16.msra.mxu0 %v413
  %490 = vmatprep.subr.bf16.mxu0 0
  %491 = vmatpush1.bf16.msra.mxu0 %v414
  %492 = vmatprep.subr.bf16.mxu0 0
  %493 = vmatpush1.bf16.msra.mxu0 %v415
  %494 = vmatprep.subr.bf16.mxu0 0
  %495 = vmatpush1.bf16.msra.mxu0 %v416
  %496 = vmatprep.subr.bf16.mxu0 0
  %497 = vmatpush1.bf16.msra.mxu0 %v417
  %498 = vmatprep.mubr.bf16.mxu0 %v211
  %499 = vmatmul.mubr.bf16.gmra.mrb[0].mxu0 %v210
  %v500 = vpop.f32.mrb[0].mxu0
  %v501 = vadd.f32 0.0, %v500
  %v502 = vpop.f32.mrb[0].mxu0
  %v503 = vpop.f32.mrb[0].mxu0
  %v504 = vadd.f32 0.0, %v503
  %v505 = vpop.f32.mrb[0].mxu0
  %506 = vmatprep.mubr.bf16.mxu0 %v215
  %507 = vmatmul.mubr.bf16.gmra.mrb[0].mxu0 %v214
  %v508 = vpop.f32.mrb[0].mxu0
  %v509 = vadd.f32 0.0, %v508
  %v510 = vpop.f32.mrb[0].mxu0
  %v511 = vpop.f32.mrb[0].mxu0
  %v512 = vadd.f32 0.0, %v511
  %v513 = vpop.f32.mrb[0].mxu0
  %514 = vmatprep.mubr.bf16.mxu0 %v219
  %515 = vmatmul.mubr.bf16.gmra.mrb[0].mxu0 %v218
  %v516 = vpop.f32.mrb[0].mxu0
  %v517 = vadd.f32 0.0, %v516
  %v518 = vpop.f32.mrb[0].mxu0
  %v519 = vpop.f32.mrb[0].mxu0
  %v520 = vadd.f32 0.0, %v519
  %v521 = vpop.f32.mrb[0].mxu0
  %522 = vmatprep.mubr.bf16.mxu0 %v223
  %523 = vmatmul.mubr.bf16.gmra.mrb[0].mxu0 %v222
  %v524 = vpop.f32.mrb[0].mxu0
  %v525 = vadd.f32 0.0, %v524
  %v526 = vpop.f32.mrb[0].mxu0
  %v527 = vpop.f32.mrb[0].mxu0
  %v528 = vadd.f32 0.0, %v527
  %v529 = vpop.f32.mrb[0].mxu0
  %530 = vmatprep.mubr.bf16.mxu0 %v227
  %531 = vmatmul.mubr.bf16.gmra.mrb[0].mxu0 %v226
  %v532 = vpop.f32.mrb[0].mxu0
  %v533 = vadd.f32 0.0, %v532
  %v534 = vpop.f32.mrb[0].mxu0
  %v535 = vpop.f32.mrb[0].mxu0
  %v536 = vadd.f32 0.0, %v535
  %v537 = vpop.f32.mrb[0].mxu0
  %538 = vmatprep.mubr.bf16.mxu0 %v231
  %539 = vmatmul.mubr.bf16.gmra.mrb[0].mxu0 %v230
  %v540 = vpop.f32.mrb[0].mxu0
  %v541 = vadd.f32 0.0, %v540
  %v542 = vpop.f32.mrb[0].mxu0
  %v543 = vpop.f32.mrb[0].mxu0
  %v544 = vadd.f32 0.0, %v543
  %v545 = vpop.f32.mrb[0].mxu0
  %546 = vmatprep.mubr.bf16.mxu0 %v235
  %547 = vmatmul.mubr.bf16.gmra.mrb[0].mxu0 %v234
  %v548 = vpop.f32.mrb[0].mxu0
  %v549 = vadd.f32 0.0, %v548
  %v550 = vpop.f32.mrb[0].mxu0
  %v551 = vpop.f32.mrb[0].mxu0
  %v552 = vadd.f32 0.0, %v551
  %v553 = vpop.f32.mrb[0].mxu0
  %554 = vmatprep.mubr.bf16.mxu0 %v239
  %555 = vmatmul.mubr.bf16.gmra.mrb[0].mxu0 %v238
  %v556 = vpop.f32.mrb[0].mxu0
  %v557 = vadd.f32 0.0, %v556
  %v558 = vpop.f32.mrb[0].mxu0
  %v559 = vpop.f32.mrb[0].mxu0
  %v560 = vadd.f32 0.0, %v559
  %v561 = vpop.f32.mrb[0].mxu0
  %562 = vdwg.mxu0
  %563 = vmatprep.subr.bf16.mxu0 0
  %564 = vmatpush1.bf16.msra.mxu0 %v418
  %565 = vmatprep.subr.bf16.mxu0 0
  %566 = vmatpush1.bf16.msra.mxu0 %v419
  %567 = vmatprep.subr.bf16.mxu0 0
  %568 = vmatpush1.bf16.msra.mxu0 %v420
  %569 = vmatprep.subr.bf16.mxu0 0
  %570 = vmatpush1.bf16.msra.mxu0 %v421
  %571 = vmatprep.subr.bf16.mxu0 0
  %572 = vmatpush1.bf16.msra.mxu0 %v422
  %573 = vmatprep.subr.bf16.mxu0 0
  %574 = vmatpush1.bf16.msra.mxu0 %v423
  %575 = vmatprep.subr.bf16.mxu0 0
  %576 = vmatpush1.bf16.msra.mxu0 %v424
  %577 = vmatprep.subr.bf16.mxu0 0
  %578 = vmatpush1.bf16.msra.mxu0 %v425
  %579 = vmatprep.subr.bf16.mxu0 0
  %580 = vmatpush1.bf16.msra.mxu0 %v426
  %581 = vmatprep.subr.bf16.mxu0 0
  %582 = vmatpush1.bf16.msra.mxu0 %v427
  %583 = vmatprep.subr.bf16.mxu0 0
  %584 = vmatpush1.bf16.msra.mxu0 %v428
  %585 = vmatprep.subr.bf16.mxu0 0
  %586 = vmatpush1.bf16.msra.mxu0 %v429
  %587 = vmatprep.subr.bf16.mxu0 0
  %588 = vmatpush1.bf16.msra.mxu0 %v430
  %589 = vmatprep.subr.bf16.mxu0 0
  %590 = vmatpush1.bf16.msra.mxu0 %v431
  %591 = vmatprep.subr.bf16.mxu0 0
  %592 = vmatpush1.bf16.msra.mxu0 %v432
  %593 = vmatprep.subr.bf16.mxu0 0
  %594 = vmatpush1.bf16.msra.mxu0 %v433
  %595 = vmatprep.mubr.bf16.mxu0 %v213
  %596 = vmatmul.mubr.bf16.gmra.mrb[0].mxu0 %v212
  %v597 = vpop.f32.mrb[0].mxu0
  %v598 = vadd.f32 %v501, %v597
  %v599 = vpop.f32.mrb[0].mxu0
  %v600 = vpop.f32.mrb[0].mxu0
  %v601 = vadd.f32 %v504, %v600
  %v602 = vpop.f32.mrb[0].mxu0
  %603 = vmatprep.mubr.bf16.mxu0 %v217
  %604 = vmatmul.mubr.bf16.gmra.mrb[0].mxu0 %v216
  %v605 = vpop.f32.mrb[0].mxu0
  %v606 = vadd.f32 %v509, %v605
  %v607 = vpop.f32.mrb[0].mxu0
  %v608 = vpop.f32.mrb[0].mxu0
  %v609 = vadd.f32 %v512, %v608
  %v610 = vpop.f32.mrb[0].mxu0
  %611 = vmatprep.mubr.bf16.mxu0 %v221
  %612 = vmatmul.mubr.bf16.gmra.mrb[0].mxu0 %v220
  %v613 = vpop.f32.mrb[0].mxu0
  %v614 = vadd.f32 %v517, %v613
  %v615 = vpop.f32.mrb[0].mxu0
  %v616 = vpop.f32.mrb[0].mxu0
  %v617 = vadd.f32 %v520, %v616
  %v618 = vpop.f32.mrb[0].mxu0
  %619 = vmatprep.mubr.bf16.mxu0 %v225
  %620 = vmatmul.mubr.bf16.gmra.mrb[0].mxu0 %v224
  %v621 = vpop.f32.mrb[0].mxu0
  %v622 = vadd.f32 %v525, %v621
  %v623 = vpop.f32.mrb[0].mxu0
  %v624 = vpop.f32.mrb[0].mxu0
  %v625 = vadd.f32 %v528, %v624
  %v626 = vpop.f32.mrb[0].mxu0
  %627 = vmatprep.mubr.bf16.mxu0 %v229
  %628 = vmatmul.mubr.bf16.gmra.mrb[0].mxu0 %v228
  %v629 = vpop.f32.mrb[0].mxu0
  %v630 = vadd.f32 %v533, %v629
  %v631 = vpop.f32.mrb[0].mxu0
  %v632 = vpop.f32.mrb[0].mxu0
  %v633 = vadd.f32 %v536, %v632
  %v634 = vpop.f32.mrb[0].mxu0
  %635 = vmatprep.mubr.bf16.mxu0 %v233
  %636 = vmatmul.mubr.bf16.gmra.mrb[0].mxu0 %v232
  %v637 = vpop.f32.mrb[0].mxu0
  %v638 = vadd.f32 %v541, %v637
  %v639 = vpop.f32.mrb[0].mxu0
  %v640 = vpop.f32.mrb[0].mxu0
  %v641 = vadd.f32 %v544, %v640
  %v642 = vpop.f32.mrb[0].mxu0
  %643 = vmatprep.mubr.bf16.mxu0 %v237
  %644 = vmatmul.mubr.bf16.gmra.mrb[0].mxu0 %v236
  %v645 = vpop.f32.mrb[0].mxu0
  %v646 = vadd.f32 %v549, %v645
  %v647 = vpop.f32.mrb[0].mxu0
  %v648 = vpop.f32.mrb[0].mxu0
  %v649 = vadd.f32 %v552, %v648
  %v650 = vpop.f32.mrb[0].mxu0
  %651 = vmatprep.mubr.bf16.mxu0 %v241
  %652 = vmatmul.mubr.bf16.gmra.mrb[0].mxu0 %v240
  %v653 = vpop.f32.mrb[0].mxu0
  %v654 = vadd.f32 %v557, %v653
  %v655 = vpop.f32.mrb[0].mxu0
  %v656 = vpop.f32.mrb[0].mxu0
  %v657 = vadd.f32 %v560, %v656
  %v658 = vpop.f32.mrb[0].mxu0
  %659 = vdwg.mxu0
  %vm660 = vcmask 523264
  %v661 = vsel %vm660, %v598, 0.0
  %v662 = vsel %vm660, %v601, 0.0
  %v663 = vadd.f32 %v661, %v662
  %v664 = vsel %vm660, %v606, 0.0
  %v665 = vadd.f32 %v663, %v664
  %v666 = vsel %vm660, %v609, 0.0
  %v667 = vadd.f32 %v665, %v666
  %v668 = vsel %vm660, %v614, 0.0
  %v669 = vadd.f32 %v667, %v668
  %v670 = vsel %vm660, %v617, 0.0
  %v671 = vadd.f32 %v669, %v670
  %v672 = vsel %vm660, %v622, 0.0
  %v673 = vadd.f32 %v671, %v672
  %v674 = vsel %vm660, %v625, 0.0
  %v675 = vadd.f32 %v673, %v674
  %v676 = vsel %vm660, %v630, 0.0
  %v677 = vadd.f32 %v675, %v676
  %v678 = vsel %vm660, %v633, 0.0
  %v679 = vadd.f32 %v677, %v678
  %v680 = vsel %vm660, %v638, 0.0
  %v681 = vadd.f32 %v679, %v680
  %v682 = vsel %vm660, %v641, 0.0
  %v683 = vadd.f32 %v681, %v682
  %v684 = vsel %vm660, %v646, 0.0
  %v685 = vadd.f32 %v683, %v684
  %v686 = vsel %vm660, %v649, 0.0
  %v687 = vadd.f32 %v685, %v686
  %v688 = vsel %vm660, %v654, 0.0
  %v689 = vadd.f32 %v687, %v688
  %v690 = vsel %vm660, %v657, 0.0
  %v691 = vadd.f32 %v689, %v690
  %v692 = vrot.slane %v691, 4
  %v693 = vadd.f32 %v691, %v692
  %v694 = vrot.slane %v693, 2
  %v695 = vadd.f32 %v693, %v694
  %v696 = vrot.slane %v695, 1
  %v697 = vadd.f32 %v695, %v696
  %v698 = vrcp.pop 128.0
  %v699 = vmul.f32 %v697, %v698
  %v700 = vsub.f32 %v598, %v699
  %v701 = vsub.f32 %v601, %v699
  %v702 = vsub.f32 %v606, %v699
  %v703 = vsub.f32 %v609, %v699
  %v704 = vsub.f32 %v614, %v699
  %v705 = vsub.f32 %v617, %v699
  %v706 = vsub.f32 %v622, %v699
  %v707 = vsub.f32 %v625, %v699
  %v708 = vsub.f32 %v630, %v699
  %v709 = vsub.f32 %v633, %v699
  %v710 = vsub.f32 %v638, %v699
  %v711 = vsub.f32 %v641, %v699
  %v712 = vsub.f32 %v646, %v699
  %v713 = vsub.f32 %v649, %v699
  %v714 = vsub.f32 %v654, %v699
  %v715 = vsub.f32 %v657, %v699
  %v716 = vmul.f32 %v700, %v700
  %v717 = vmul.f32 %v701, %v701
  %v718 = vmul.f32 %v702, %v702
  %v719 = vmul.f32 %v703, %v703
  %v720 = vmul.f32 %v704, %v704
  %v721 = vmul.f32 %v705, %v705
  %v722 = vmul.f32 %v706, %v706
  %v723 = vmul.f32 %v707, %v707
  %v724 = vmul.f32 %v708, %v708
  %v725 = vmul.f32 %v709, %v709
  %v726 = vmul.f32 %v710, %v710
  %v727 = vmul.f32 %v711, %v711
  %v728 = vmul.f32 %v712, %v712
  %v729 = vmul.f32 %v713, %v713
  %v730 = vmul.f32 %v714, %v714
  %v731 = vmul.f32 %v715, %v715
  %v732 = vsel %vm660, %v716, 0.0
  %v733 = vsel %vm660, %v717, 0.0
  %v734 = vadd.f32 %v732, %v733
  %v735 = vsel %vm660, %v718, 0.0
  %v736 = vadd.f32 %v734, %v735
  %v737 = vsel %vm660, %v719, 0.0
  %v738 = vadd.f32 %v736, %v737
  %v739 = vsel %vm660, %v720, 0.0
  %v740 = vadd.f32 %v738, %v739
  %v741 = vsel %vm660, %v721, 0.0
  %v742 = vadd.f32 %v740, %v741
  %v743 = vsel %vm660, %v722, 0.0
  %v744 = vadd.f32 %v742, %v743
  %v745 = vsel %vm660, %v723, 0.0
  %v746 = vadd.f32 %v744, %v745
  %v747 = vsel %vm660, %v724, 0.0
  %v748 = vadd.f32 %v746, %v747
  %v749 = vsel %vm660, %v725, 0.0
  %v750 = vadd.f32 %v748, %v749
  %v751 = vsel %vm660, %v726, 0.0
  %v752 = vadd.f32 %v750, %v751
  %v753 = vsel %vm660, %v727, 0.0
  %v754 = vadd.f32 %v752, %v753
  %v755 = vsel %vm660, %v728, 0.0
  %v756 = vadd.f32 %v754, %v755
  %v757 = vsel %vm660, %v729, 0.0
  %v758 = vadd.f32 %v756, %v757
  %v759 = vsel %vm660, %v730, 0.0
  %v760 = vadd.f32 %v758, %v759
  %v761 = vsel %vm660, %v731, 0.0
  %v762 = vadd.f32 %v760, %v761
  %v763 = vrot.slane %v762, 4
  %v764 = vadd.f32 %v762, %v763
  %v765 = vrot.slane %v764, 2
  %v766 = vadd.f32 %v764, %v765
  %v767 = vrot.slane %v766, 1
  %v768 = vadd.f32 %v766, %v767
  %v769 = vmul.f32 %v768, %v698
  %v770 = vadd.f32 %v769, 1e-05
  %v771 = vrsqrt.pop %v770
  %v772 = vmul.f32 %v700, %v771
  %v773 = vmul.f32 %v701, %v771
  %v774 = vmul.f32 %v702, %v771
  %v775 = vmul.f32 %v703, %v771
  %v776 = vmul.f32 %v704, %v771
  %v777 = vmul.f32 %v705, %v771
  %v778 = vmul.f32 %v706, %v771
  %v779 = vmul.f32 %v707, %v771
  %v780 = vmul.f32 %v708, %v771
  %v781 = vmul.f32 %v709, %v771
  %v782 = vmul.f32 %v710, %v771
  %v783 = vmul.f32 %v711, %v771
  %v784 = vmul.f32 %v712, %v771
  %v785 = vmul.f32 %v713, %v771
  %v786 = vmul.f32 %v714, %v771
  %v787 = vmul.f32 %v715, %v771
  %v788 = vld [vmem:[%s2] sm:$0x1]
  %v790 = vlaneseq
  %v791 = vshrl.u32 %v790, 7
  %v792 = vsub.s32 0, %v791
  %v793 = vrot.slane %v788, %v792
  %v795 = vmul.f32 %v772, %v793
  %v796 = vmul.f32 %v773, %v793
  %v797 = vmul.f32 %v774, %v793
  %v798 = vmul.f32 %v775, %v793
  %v799 = vmul.f32 %v776, %v793
  %v800 = vmul.f32 %v777, %v793
  %v801 = vmul.f32 %v778, %v793
  %v802 = vmul.f32 %v779, %v793
  %v803 = vmul.f32 %v780, %v793
  %v804 = vmul.f32 %v781, %v793
  %v805 = vmul.f32 %v782, %v793
  %v806 = vmul.f32 %v783, %v793
  %v807 = vmul.f32 %v784, %v793
  %v808 = vmul.f32 %v785, %v793
  %v809 = vmul.f32 %v786, %v793
  %v810 = vmul.f32 %v787, %v793
  %v811 = vld [vmem:[%s3] sm:$0x1]
  %v813 = vlaneseq
  %v814 = vshrl.u32 %v813, 7
  %v815 = vsub.s32 0, %v814
  %v816 = vrot.slane %v811, %v815
  %v818 = vadd.f32 %v795, %v816
  %v819 = vadd.f32 %v796, %v816
  %v820 = vadd.f32 %v797, %v816
  %v821 = vadd.f32 %v798, %v816
  %v822 = vadd.f32 %v799, %v816
  %v823 = vadd.f32 %v800, %v816
  %v824 = vadd.f32 %v801, %v816
  %v825 = vadd.f32 %v802, %v816
  %v826 = vadd.f32 %v803, %v816
  %v827 = vadd.f32 %v804, %v816
  %v828 = vadd.f32 %v805, %v816
  %v829 = vadd.f32 %v806, %v816
  %v830 = vadd.f32 %v807, %v816
  %v831 = vadd.f32 %v808, %v816
  %v832 = vadd.f32 %v809, %v816
  %v833 = vadd.f32 %v810, %v816
  %vm834 = vcmp.ge.f32.partialorder %v818, 0.0
  %vm835 = vcmp.ge.f32.partialorder %v819, 0.0
  %vm836 = vcmp.ge.f32.partialorder %v820, 0.0
  %vm837 = vcmp.ge.f32.partialorder %v821, 0.0
  %vm838 = vcmp.ge.f32.partialorder %v822, 0.0
  %vm839 = vcmp.ge.f32.partialorder %v823, 0.0
  %vm840 = vcmp.ge.f32.partialorder %v824, 0.0
  %vm841 = vcmp.ge.f32.partialorder %v825, 0.0
  %vm842 = vcmp.ge.f32.partialorder %v826, 0.0
  %vm843 = vcmp.ge.f32.partialorder %v827, 0.0
  %vm844 = vcmp.ge.f32.partialorder %v828, 0.0
  %vm845 = vcmp.ge.f32.partialorder %v829, 0.0
  %vm846 = vcmp.ge.f32.partialorder %v830, 0.0
  %vm847 = vcmp.ge.f32.partialorder %v831, 0.0
  %vm848 = vcmp.ge.f32.partialorder %v832, 0.0
  %vm849 = vcmp.ge.f32.partialorder %v833, 0.0
  %v850 = vmul.f32 %v818, 0.2
  %v851 = vmul.f32 %v819, 0.2
  %v852 = vmul.f32 %v820, 0.2
  %v853 = vmul.f32 %v821, 0.2
  %v854 = vmul.f32 %v822, 0.2
  %v855 = vmul.f32 %v823, 0.2
  %v856 = vmul.f32 %v824, 0.2
  %v857 = vmul.f32 %v825, 0.2
  %v858 = vmul.f32 %v826, 0.2
  %v859 = vmul.f32 %v827, 0.2
  %v860 = vmul.f32 %v828, 0.2
  %v861 = vmul.f32 %v829, 0.2
  %v862 = vmul.f32 %v830, 0.2
  %v863 = vmul.f32 %v831, 0.2
  %v864 = vmul.f32 %v832, 0.2
  %v865 = vmul.f32 %v833, 0.2
  %v866 = vsel %vm834, %v818, %v850
  %v867 = vsel %vm835, %v819, %v851
  %v868 = vsel %vm836, %v820, %v852
  %v869 = vsel %vm837, %v821, %v853
  %v870 = vsel %vm838, %v822, %v854
  %v871 = vsel %vm839, %v823, %v855
  %v872 = vsel %vm840, %v824, %v856
  %v873 = vsel %vm841, %v825, %v857
  %v874 = vsel %vm842, %v826, %v858
  %v875 = vsel %vm843, %v827, %v859
  %v876 = vsel %vm844, %v828, %v860
  %v877 = vsel %vm845, %v829, %v861
  %v878 = vsel %vm846, %v830, %v862
  %v879 = vsel %vm847, %v831, %v863
  %v880 = vsel %vm848, %v832, %v864
  %v881 = vsel %vm849, %v833, %v865
  %v882 = vpack.c.bf16 %v867, %v866
  %v883 = vpack.c.bf16 %v869, %v868
  %v884 = vpack.c.bf16 %v871, %v870
  %v885 = vpack.c.bf16 %v873, %v872
  %v886 = vpack.c.bf16 %v875, %v874
  %v887 = vpack.c.bf16 %v877, %v876
  %v888 = vpack.c.bf16 %v879, %v878
  %v889 = vpack.c.bf16 %v881, %v880
  %v898 = vunpack.c.l.b16 %v882
  %v899 = vunpack.c.h.b16 %v882
  %v900 = vunpack.c.l.b16 %v883
  %v901 = vunpack.c.h.b16 %v883
  %v902 = vunpack.c.l.b16 %v884
  %v903 = vunpack.c.h.b16 %v884
  %v904 = vunpack.c.l.b16 %v885
  %v905 = vunpack.c.h.b16 %v885
  %v906 = vunpack.c.l.b16 %v886
  %v907 = vunpack.c.h.b16 %v886
  %v908 = vunpack.c.l.b16 %v887
  %v909 = vunpack.c.h.b16 %v887
  %v910 = vunpack.c.l.b16 %v888
  %v911 = vunpack.c.h.b16 %v888
  %v912 = vunpack.c.l.b16 %v889
  %v913 = vunpack.c.h.b16 %v889
  %v914 = vpack.c.b16 %v898, %v898
  %v915 = vpack.c.b16 %v899, %v899
  %v916 = vpack.c.b16 %v900, %v900
  %v917 = vpack.c.b16 %v901, %v901
  %v918 = vpack.c.b16 %v902, %v902
  %v919 = vpack.c.b16 %v903, %v903
  %v920 = vpack.c.b16 %v904, %v904
  %v921 = vpack.c.b16 %v905, %v905
  %v922 = vpack.c.b16 %v906, %v906
  %v923 = vpack.c.b16 %v907, %v907
  %v924 = vpack.c.b16 %v908, %v908
  %v925 = vpack.c.b16 %v909, %v909
  %v926 = vpack.c.b16 %v910, %v910
  %v927 = vpack.c.b16 %v911, %v911
  %v928 = vpack.c.b16 %v912, %v912
  %v929 = vpack.c.b16 %v913, %v913
  %vm946 = vcmask 519168
  %947 = vst.msk [vmem:[%s4] sm:$0xf] %vm946, %v914
  %948 = vst.msk [vmem:[%s4 + $0x4] sm:$0xf] %vm946, %v915
  %949 = vst.msk [vmem:[%s4 + $0x8] sm:$0xf] %vm946, %v916
  %950 = vst.msk [vmem:[%s4 + $0xc] sm:$0xf] %vm946, %v917
  %951 = vst.msk [vmem:[%s4 + $0x10] sm:$0xf] %vm946, %v918
  %952 = vst.msk [vmem:[%s4 + $0x14] sm:$0xf] %vm946, %v919
  %953 = vst.msk [vmem:[%s4 + $0x18] sm:$0xf] %vm946, %v920
  %954 = vst.msk [vmem:[%s4 + $0x1c] sm:$0xf] %vm946, %v921
  %955 = vst.msk [vmem:[%s4 + $0x20] sm:$0xf] %vm946, %v922
  %956 = vst.msk [vmem:[%s4 + $0x24] sm:$0xf] %vm946, %v923
  %957 = vst.msk [vmem:[%s4 + $0x28] sm:$0xf] %vm946, %v924
  %958 = vst.msk [vmem:[%s4 + $0x2c] sm:$0xf] %vm946, %v925
  %959 = vst.msk [vmem:[%s4 + $0x30] sm:$0xf] %vm946, %v926
  %960 = vst.msk [vmem:[%s4 + $0x34] sm:$0xf] %vm946, %v927
  %961 = vst.msk [vmem:[%s4 + $0x38] sm:$0xf] %vm946, %v928
  %962 = vst.msk [vmem:[%s4 + $0x3c] sm:$0xf] %vm946, %v929
  // Predicated region
  $region18: #{discriminator_forward.7} parent=0 // pred_check
    _
  $region19: #{discriminator_forward.7} parent=0 // pred_check_branch
    %964 = sbr.rel (0) target = $region21
  $region20: #{discriminator_forward.7} parent=0 // pred_region
    _
  $region21: #{discriminator_forward.7} parent=0 // pred_fallthru
    _
  // Predicated region
  $region22: #{discriminator_forward.7} parent=0 // pred_check
    _
  $region23: #{discriminator_forward.7} parent=0 // pred_check_branch
    %966 = sbr.rel (0) target = $region25
  $region24: #{discriminator_forward.7} parent=0 // pred_region
    _
  $region25: #{discriminator_forward.7} parent=0 // pred_fallthru
    _

// kernel: discriminator_forward.8
$region0: #{discriminator_forward.8}
  #allocation0 [shape = 'u32[]', space=smem, size = 0x4, offset = 0x4, fixed_abs, tag = 'smem constant byte address 0x4 - core index']
  #allocation1 [shape = 'u32[144,128]{1,0:T(1,128)}', space=vmem, size = 0x12000, scoped, tag = 'internal scratch']
  %s0 = inlined_call_operand.vmem [shape: bf16[32,1024], index: 0, kind: input, shape index: {}]
  %s1 = inlined_call_operand.vmem [shape: bf16[1024,128], index: 1, kind: input, shape index: {}]
  %s2 = inlined_call_operand.vmem [shape: f32[1,128], index: 2, kind: input, shape index: {}]
  %s3 = inlined_call_operand.vmem [shape: f32[1,128], index: 3, kind: input, shape index: {}]
  %s4 = inlined_call_operand.vmem [shape: bf16[32,128], index: 4, kind: output, shape index: {}]
  %s5 = sld [smem:[#allocation0]]
  $region26: #{discriminator_forward.8} parent=0
    _
  %s7 = ssub.s32 1, %s5
  %s8 = scalar_select 0, %s7, %s5
  // Predicated region
  $region2: #{discriminator_forward.8} parent=0 // pred_check
    _
  $region3: #{discriminator_forward.8} parent=0 // pred_check_branch
    %10 = sbr.rel (0) target = $region5
  $region4: #{discriminator_forward.8} parent=0 // pred_region
    _
  $region5: #{discriminator_forward.8} parent=0 // pred_fallthru
    _
  // Predicated region
  $region6: #{discriminator_forward.8} parent=0 // pred_check
    _
  $region7: #{discriminator_forward.8} parent=0 // pred_check_branch
    %12 = sbr.rel (0) target = $region9
  $region8: #{discriminator_forward.8} parent=0 // pred_region
    _
  $region9: #{discriminator_forward.8} parent=0 // pred_fallthru
    _
  // Predicated region
  $region10: #{discriminator_forward.8} parent=0 // pred_check
    _
  $region11: #{discriminator_forward.8} parent=0 // pred_check_branch
    %14 = sbr.rel (0) target = $region13
  $region12: #{discriminator_forward.8} parent=0 // pred_region
    _
  $region13: #{discriminator_forward.8} parent=0 // pred_fallthru
    _
  // Predicated region
  $region14: #{discriminator_forward.8} parent=0 // pred_check
    _
  $region15: #{discriminator_forward.8} parent=0 // pred_check_branch
    %16 = sbr.rel (0) target = $region17
  $region16: #{discriminator_forward.8} parent=0 // pred_region
    _
  $region17: #{discriminator_forward.8} parent=0 // pred_fallthru
    _
  %v18 = vld [vmem:[%s0] sm:$0xff]
  %v19 = vld [vmem:[%s0 + $0x8] sm:$0xff]
  %v20 = vld [vmem:[%s0 + $0x10] sm:$0xff]
  %v21 = vld [vmem:[%s0 + $0x18] sm:$0xff]
  %v22 = vld [vmem:[%s0 + $0x20] sm:$0xff]
  %v23 = vld [vmem:[%s0 + $0x28] sm:$0xff]
  %v24 = vld [vmem:[%s0 + $0x30] sm:$0xff]
  %v25 = vld [vmem:[%s0 + $0x38] sm:$0xff]
  %v26 = vld [vmem:[%s0 + $0x40] sm:$0xff]
  %v27 = vld [vmem:[%s0 + $0x48] sm:$0xff]
  %v28 = vld [vmem:[%s0 + $0x50] sm:$0xff]
  %v29 = vld [vmem:[%s0 + $0x58] sm:$0xff]
  %v30 = vld [vmem:[%s0 + $0x60] sm:$0xff]
  %v31 = vld [vmem:[%s0 + $0x68] sm:$0xff]
  %v32 = vld [vmem:[%s0 + $0x70] sm:$0xff]
  %v33 = vld [vmem:[%s0 + $0x78] sm:$0xff]
  %v34 = vld [vmem:[%s1] sm:$0xf]
  %v35 = vld [vmem:[%s1 + $0x4] sm:$0xf]
  %v36 = vld [vmem:[%s1 + $0x8] sm:$0xf]
  %v37 = vld [vmem:[%s1 + $0xc] sm:$0xf]
  %v38 = vld [vmem:[%s1 + $0x10] sm:$0xf]
  %v39 = vld [vmem:[%s1 + $0x14] sm:$0xf]
  %v40 = vld [vmem:[%s1 + $0x18] sm:$0xf]
  %v41 = vld [vmem:[%s1 + $0x1c] sm:$0xf]
  %v42 = vld [vmem:[%s1 + $0x20] sm:$0xf]
  %v43 = vld [vmem:[%s1 + $0x24] sm:$0xf]
  %v44 = vld [vmem:[%s1 + $0x28] sm:$0xf]
  %v45 = vld [vmem:[%s1 + $0x2c] sm:$0xf]
  %v46 = vld [vmem:[%s1 + $0x30] sm:$0xf]
  %v47 = vld [vmem:[%s1 + $0x34] sm:$0xf]
  %v48 = vld [vmem:[%s1 + $0x38] sm:$0xf]
  %v49 = vld [vmem:[%s1 + $0x3c] sm:$0xf]
  %v50 = vld [vmem:[%s1 + $0x40] sm:$0xf]
  %v51 = vld [vmem:[%s1 + $0x44] sm:$0xf]
  %v52 = vld [vmem:[%s1 + $0x48] sm:$0xf]
  %v53 = vld [vmem:[%s1 + $0x4c] sm:$0xf]
  %v54 = vld [vmem:[%s1 + $0x50] sm:$0xf]
  %v55 = vld [vmem:[%s1 + $0x54] sm:$0xf]
  %v56 = vld [vmem:[%s1 + $0x58] sm:$0xf]
  %v57 = vld [vmem:[%s1 + $0x5c] sm:$0xf]
  %v58 = vld [vmem:[%s1 + $0x60] sm:$0xf]
  %v59 = vld [vmem:[%s1 + $0x64] sm:$0xf]
  %v60 = vld [vmem:[%s1 + $0x68] sm:$0xf]
  %v61 = vld [vmem:[%s1 + $0x6c] sm:$0xf]
  %v62 = vld [vmem:[%s1 + $0x70] sm:$0xf]
  %v63 = vld [vmem:[%s1 + $0x74] sm:$0xf]
  %v64 = vld [vmem:[%s1 + $0x78] sm:$0xf]
  %v65 = vld [vmem:[%s1 + $0x7c] sm:$0xf]
  %v66 = vld [vmem:[%s1 + $0x80] sm:$0xf]
  %v67 = vld [vmem:[%s1 + $0x84] sm:$0xf]
  %v68 = vld [vmem:[%s1 + $0x88] sm:$0xf]
  %v69 = vld [vmem:[%s1 + $0x8c] sm:$0xf]
  %v70 = vld [vmem:[%s1 + $0x90] sm:$0xf]
  %v71 = vld [vmem:[%s1 + $0x94] sm:$0xf]
  %v72 = vld [vmem:[%s1 + $0x98] sm:$0xf]
  %v73 = vld [vmem:[%s1 + $0x9c] sm:$0xf]
  %v74 = vld [vmem:[%s1 + $0xa0] sm:$0xf]
  %v75 = vld [vmem:[%s1 + $0xa4] sm:$0xf]
  %v76 = vld [vmem:[%s1 + $0xa8] sm:$0xf]
  %v77 = vld [vmem:[%s1 + $0xac] sm:$0xf]
  %v78 = vld [vmem:[%s1 + $0xb0] sm:$0xf]
  %v79 = vld [vmem:[%s1 + $0xb4] sm:$0xf]
  %v80 = vld [vmem:[%s1 + $0xb8] sm:$0xf]
  %v81 = vld [vmem:[%s1 + $0xbc] sm:$0xf]
  %v82 = vld [vmem:[%s1 + $0xc0] sm:$0xf]
  %v83 = vld [vmem:[%s1 + $0xc4] sm:$0xf]
  %v84 = vld [vmem:[%s1 + $0xc8] sm:$0xf]
  %v85 = vld [vmem:[%s1 + $0xcc] sm:$0xf]
  %v86 = vld [vmem:[%s1 + $0xd0] sm:$0xf]
  %v87 = vld [vmem:[%s1 + $0xd4] sm:$0xf]
  %v88 = vld [vmem:[%s1 + $0xd8] sm:$0xf]
  %v89 = vld [vmem:[%s1 + $0xdc] sm:$0xf]
  %v90 = vld [vmem:[%s1 + $0xe0] sm:$0xf]
  %v91 = vld [vmem:[%s1 + $0xe4] sm:$0xf]
  %v92 = vld [vmem:[%s1 + $0xe8] sm:$0xf]
  %v93 = vld [vmem:[%s1 + $0xec] sm:$0xf]
  %v94 = vld [vmem:[%s1 + $0xf0] sm:$0xf]
  %v95 = vld [vmem:[%s1 + $0xf4] sm:$0xf]
  %v96 = vld [vmem:[%s1 + $0xf8] sm:$0xf]
  %v97 = vld [vmem:[%s1 + $0xfc] sm:$0xf]
  %v98 = vld [vmem:[%s1 + $0x100] sm:$0xf]
  %v99 = vld [vmem:[%s1 + $0x104] sm:$0xf]
  %v100 = vld [vmem:[%s1 + $0x108] sm:$0xf]
  %v101 = vld [vmem:[%s1 + $0x10c] sm:$0xf]
  %v102 = vld [vmem:[%s1 + $0x110] sm:$0xf]
  %v103 = vld [vmem:[%s1 + $0x114] sm:$0xf]
  %v104 = vld [vmem:[%s1 + $0x118] sm:$0xf]
  %v105 = vld [vmem:[%s1 + $0x11c] sm:$0xf]
  %v106 = vld [vmem:[%s1 + $0x120] sm:$0xf]
  %v107 = vld [vmem:[%s1 + $0x124] sm:$0xf]
  %v108 = vld [vmem:[%s1 + $0x128] sm:$0xf]
  %v109 = vld [vmem:[%s1 + $0x12c] sm:$0xf]
  %v110 = vld [vmem:[%s1 + $0x130] sm:$0xf]
  %v111 = vld [vmem:[%s1 + $0x134] sm:$0xf]
  %v112 = vld [vmem:[%s1 + $0x138] sm:$0xf]
  %v113 = vld [vmem:[%s1 + $0x13c] sm:$0xf]
  %v114 = vld [vmem:[%s1 + $0x140] sm:$0xf]
  %v115 = vld [vmem:[%s1 + $0x144] sm:$0xf]
  %v116 = vld [vmem:[%s1 + $0x148] sm:$0xf]
  %v117 = vld [vmem:[%s1 + $0x14c] sm:$0xf]
  %v118 = vld [vmem:[%s1 + $0x150] sm:$0xf]
  %v119 = vld [vmem:[%s1 + $0x154] sm:$0xf]
  %v120 = vld [vmem:[%s1 + $0x158] sm:$0xf]
  %v121 = vld [vmem:[%s1 + $0x15c] sm:$0xf]
  %v122 = vld [vmem:[%s1 + $0x160] sm:$0xf]
  %v123 = vld [vmem:[%s1 + $0x164] sm:$0xf]
  %v124 = vld [vmem:[%s1 + $0x168] sm:$0xf]
  %v125 = vld [vmem:[%s1 + $0x16c] sm:$0xf]
  %v126 = vld [vmem:[%s1 + $0x170] sm:$0xf]
  %v127 = vld [vmem:[%s1 + $0x174] sm:$0xf]
  %v128 = vld [vmem:[%s1 + $0x178] sm:$0xf]
  %v129 = vld [vmem:[%s1 + $0x17c] sm:$0xf]
  %v130 = vld [vmem:[%s1 + $0x180] sm:$0xf]
  %v131 = vld [vmem:[%s1 + $0x184] sm:$0xf]
  %v132 = vld [vmem:[%s1 + $0x188] sm:$0xf]
  %v133 = vld [vmem:[%s1 + $0x18c] sm:$0xf]
  %v134 = vld [vmem:[%s1 + $0x190] sm:$0xf]
  %v135 = vld [vmem:[%s1 + $0x194] sm:$0xf]
  %v136 = vld [vmem:[%s1 + $0x198] sm:$0xf]
  %v137 = vld [vmem:[%s1 + $0x19c] sm:$0xf]
  %v138 = vld [vmem:[%s1 + $0x1a0] sm:$0xf]
  %v139 = vld [vmem:[%s1 + $0x1a4] sm:$0xf]
  %v140 = vld [vmem:[%s1 + $0x1a8] sm:$0xf]
  %v141 = vld [vmem:[%s1 + $0x1ac] sm:$0xf]
  %v142 = vld [vmem:[%s1 + $0x1b0] sm:$0xf]
  %v143 = vld [vmem:[%s1 + $0x1b4] sm:$0xf]
  %v144 = vld [vmem:[%s1 + $0x1b8] sm:$0xf]
  %v145 = vld [vmem:[%s1 + $0x1bc] sm:$0xf]
  %v146 = vld [vmem:[%s1 + $0x1c0] sm:$0xf]
  %v147 = vld [vmem:[%s1 + $0x1c4] sm:$0xf]
  %v148 = vld [vmem:[%s1 + $0x1c8] sm:$0xf]
  %v149 = vld [vmem:[%s1 + $0x1cc] sm:$0xf]
  %v150 = vld [vmem:[%s1 + $0x1d0] sm:$0xf]
  %v151 = vld [vmem:[%s1 + $0x1d4] sm:$0xf]
  %v152 = vld [vmem:[%s1 + $0x1d8] sm:$0xf]
  %v153 = vld [vmem:[%s1 + $0x1dc] sm:$0xf]
  %v154 = vld [vmem:[%s1 + $0x1e0] sm:$0xf]
  %v155 = vld [vmem:[%s1 + $0x1e4] sm:$0xf]
  %v156 = vld [vmem:[%s1 + $0x1e8] sm:$0xf]
  %v157 = vld [vmem:[%s1 + $0x1ec] sm:$0xf]
  %v158 = vld [vmem:[%s1 + $0x1f0] sm:$0xf]
  %v159 = vld [vmem:[%s1 + $0x1f4] sm:$0xf]
  %v160 = vld [vmem:[%s1 + $0x1f8] sm:$0xf]
  %v161 = vld [vmem:[%s1 + $0x1fc] sm:$0xf]
  %v178 = vunpack.c.l.b16 %v18
  %v179 = vunpack.c.h.b16 %v18
  %v180 = vunpack.c.l.b16 %v19
  %v181 = vunpack.c.h.b16 %v19
  %v182 = vunpack.c.l.b16 %v20
  %v183 = vunpack.c.h.b16 %v20
  %v184 = vunpack.c.l.b16 %v21
  %v185 = vunpack.c.h.b16 %v21
  %v186 = vunpack.c.l.b16 %v22
  %v187 = vunpack.c.h.b16 %v22
  %v188 = vunpack.c.l.b16 %v23
  %v189 = vunpack.c.h.b16 %v23
  %v190 = vunpack.c.l.b16 %v24
  %v191 = vunpack.c.h.b16 %v24
  %v192 = vunpack.c.l.b16 %v25
  %v193 = vunpack.c.h.b16 %v25
  %v194 = vunpack.c.l.b16 %v26
  %v195 = vunpack.c.h.b16 %v26
  %v196 = vunpack.c.l.b16 %v27
  %v197 = vunpack.c.h.b16 %v27
  %v198 = vunpack.c.l.b16 %v28
  %v199 = vunpack.c.h.b16 %v28
  %v200 = vunpack.c.l.b16 %v29
  %v201 = vunpack.c.h.b16 %v29
  %v202 = vunpack.c.l.b16 %v30
  %v203 = vunpack.c.h.b16 %v30
  %v204 = vunpack.c.l.b16 %v31
  %v205 = vunpack.c.h.b16 %v31
  %v206 = vunpack.c.l.b16 %v32
  %v207 = vunpack.c.h.b16 %v32
  %v208 = vunpack.c.l.b16 %v33
  %v209 = vunpack.c.h.b16 %v33
  %v210 = vpack.c.b16 %v186, %v178
  %v211 = vpack.c.b16 %v187, %v179
  %v212 = vpack.c.b16 %v188, %v180
  %v213 = vpack.c.b16 %v189, %v181
  %v214 = vpack.c.b16 %v190, %v182
  %v215 = vpack.c.b16 %v191, %v183
  %v216 = vpack.c.b16 %v192, %v184
  %v217 = vpack.c.b16 %v193, %v185
  %v218 = vpack.c.b16 %v202, %v194
  %v219 = vpack.c.b16 %v203, %v195
  %v220 = vpack.c.b16 %v204, %v196
  %v221 = vpack.c.b16 %v205, %v197
  %v222 = vpack.c.b16 %v206, %v198
  %v223 = vpack.c.b16 %v207, %v199
  %v224 = vpack.c.b16 %v208, %v200
  %v225 = vpack.c.b16 %v209, %v201
  %v370 = vunpack.c.l.b16 %v34
  %v371 = vunpack.c.l.b16 %v35
  %v372 = vunpack.c.l.b16 %v36
  %v373 = vunpack.c.l.b16 %v37
  %v374 = vunpack.c.l.b16 %v38
  %v375 = vunpack.c.l.b16 %v39
  %v376 = vunpack.c.l.b16 %v40
  %v377 = vunpack.c.l.b16 %v41
  %v378 = vunpack.c.l.b16 %v42
  %v379 = vunpack.c.l.b16 %v43
  %v380 = vunpack.c.l.b16 %v44
  %v381 = vunpack.c.l.b16 %v45
  %v382 = vunpack.c.l.b16 %v46
  %v383 = vunpack.c.l.b16 %v47
  %v384 = vunpack.c.l.b16 %v48
  %v385 = vunpack.c.l.b16 %v49
  %v386 = vunpack.c.l.b16 %v50
  %v387 = vunpack.c.l.b16 %v51
  %v388 = vunpack.c.l.b16 %v52
  %v389 = vunpack.c.l.b16 %v53
  %v390 = vunpack.c.l.b16 %v54
  %v391 = vunpack.c.l.b16 %v55
  %v392 = vunpack.c.l.b16 %v56
  %v393 = vunpack.c.l.b16 %v57
  %v394 = vunpack.c.l.b16 %v58
  %v395 = vunpack.c.l.b16 %v59
  %v396 = vunpack.c.l.b16 %v60
  %v397 = vunpack.c.l.b16 %v61
  %v398 = vunpack.c.l.b16 %v62
  %v399 = vunpack.c.l.b16 %v63
  %v400 = vunpack.c.l.b16 %v64
  %v401 = vunpack.c.l.b16 %v65
  %v402 = vunpack.c.l.b16 %v66
  %v403 = vunpack.c.l.b16 %v67
  %v404 = vunpack.c.l.b16 %v68
  %v405 = vunpack.c.l.b16 %v69
  %v406 = vunpack.c.l.b16 %v70
  %v407 = vunpack.c.l.b16 %v71
  %v408 = vunpack.c.l.b16 %v72
  %v409 = vunpack.c.l.b16 %v73
  %v410 = vunpack.c.l.b16 %v74
  %v411 = vunpack.c.l.b16 %v75
  %v412 = vunpack.c.l.b16 %v76
  %v413 = vunpack.c.l.b16 %v77
  %v414 = vunpack.c.l.b16 %v78
  %v415 = vunpack.c.l.b16 %v79
  %v416 = vunpack.c.l.b16 %v80
  %v417 = vunpack.c.l.b16 %v81
  %v418 = vunpack.c.l.b16 %v82
  %v419 = vunpack.c.l.b16 %v83
  %v420 = vunpack.c.l.b16 %v84
  %v421 = vunpack.c.l.b16 %v85
  %v422 = vunpack.c.l.b16 %v86
  %v423 = vunpack.c.l.b16 %v87
  %v424 = vunpack.c.l.b16 %v88
  %v425 = vunpack.c.l.b16 %v89
  %v426 = vunpack.c.l.b16 %v90
  %v427 = vunpack.c.l.b16 %v91
  %v428 = vunpack.c.l.b16 %v92
  %v429 = vunpack.c.l.b16 %v93
  %v430 = vunpack.c.l.b16 %v94
  %v431 = vunpack.c.l.b16 %v95
  %v432 = vunpack.c.l.b16 %v96
  %v433 = vunpack.c.l.b16 %v97
  %v434 = vunpack.c.l.b16 %v98
  %v435 = vunpack.c.l.b16 %v99
  %v436 = vunpack.c.l.b16 %v100
  %v437 = vunpack.c.l.b16 %v101
  %v438 = vunpack.c.l.b16 %v102
  %v439 = vunpack.c.l.b16 %v103
  %v440 = vunpack.c.l.b16 %v104
  %v441 = vunpack.c.l.b16 %v105
  %v442 = vunpack.c.l.b16 %v106
  %v443 = vunpack.c.l.b16 %v107
  %v444 = vunpack.c.l.b16 %v108
  %v445 = vunpack.c.l.b16 %v109
  %v446 = vunpack.c.l.b16 %v110
  %v447 = vunpack.c.l.b16 %v111
  %v448 = vunpack.c.l.b16 %v112
  %v449 = vunpack.c.l.b16 %v113
  %v450 = vunpack.c.l.b16 %v114
  %v451 = vunpack.c.l.b16 %v115
  %v452 = vunpack.c.l.b16 %v116
  %v453 = vunpack.c.l.b16 %v117
  %v454 = vunpack.c.l.b16 %v118
  %v455 = vunpack.c.l.b16 %v119
  %v456 = vunpack.c.l.b16 %v120
  %v457 = vunpack.c.l.b16 %v121
  %v458 = vunpack.c.l.b16 %v122
  %v459 = vunpack.c.l.b16 %v123
  %v460 = vunpack.c.l.b16 %v124
  %v461 = vunpack.c.l.b16 %v125
  %v462 = vunpack.c.l.b16 %v126
  %v463 = vunpack.c.l.b16 %v127
  %v464 = vunpack.c.l.b16 %v128
  %v465 = vunpack.c.l.b16 %v129
  %v466 = vunpack.c.l.b16 %v130
  %v467 = vunpack.c.l.b16 %v131
  %v468 = vunpack.c.l.b16 %v132
  %v469 = vunpack.c.l.b16 %v133
  %v470 = vunpack.c.l.b16 %v134
  %v471 = vunpack.c.l.b16 %v135
  %v472 = vunpack.c.l.b16 %v136
  %v473 = vunpack.c.l.b16 %v137
  %v474 = vunpack.c.l.b16 %v138
  %v475 = vunpack.c.l.b16 %v139
  %v476 = vunpack.c.l.b16 %v140
  %v477 = vunpack.c.l.b16 %v141
  %v478 = vunpack.c.l.b16 %v142
  %v479 = vunpack.c.l.b16 %v143
  %v480 = vunpack.c.l.b16 %v144
  %v481 = vunpack.c.l.b16 %v145
  %v482 = vunpack.c.l.b16 %v146
  %v483 = vunpack.c.l.b16 %v147
  %v484 = vunpack.c.l.b16 %v148
  %v485 = vunpack.c.l.b16 %v149
  %v486 = vunpack.c.l.b16 %v150
  %v487 = vunpack.c.l.b16 %v151
  %v488 = vunpack.c.l.b16 %v152
  %v489 = vunpack.c.l.b16 %v153
  %v490 = vunpack.c.l.b16 %v154
  %v491 = vunpack.c.l.b16 %v155
  %v492 = vunpack.c.l.b16 %v156
  %v493 = vunpack.c.l.b16 %v157
  %v494 = vunpack.c.l.b16 %v158
  %v495 = vunpack.c.l.b16 %v159
  %v496 = vunpack.c.l.b16 %v160
  %v497 = vunpack.c.l.b16 %v161
  %v498 = vpack.c.b16 %v371, %v370
  %v499 = vpack.c.b16 %v373, %v372
  %v500 = vpack.c.b16 %v375, %v374
  %v501 = vpack.c.b16 %v377, %v376
  %v502 = vpack.c.b16 %v379, %v378
  %v503 = vpack.c.b16 %v381, %v380
  %v504 = vpack.c.b16 %v383, %v382
  %v505 = vpack.c.b16 %v385, %v384
  %v506 = vpack.c.b16 %v387, %v386
  %v507 = vpack.c.b16 %v389, %v388
  %v508 = vpack.c.b16 %v391, %v390
  %v509 = vpack.c.b16 %v393, %v392
  %v510 = vpack.c.b16 %v395, %v394
  %v511 = vpack.c.b16 %v397, %v396
  %v512 = vpack.c.b16 %v399, %v398
  %v513 = vpack.c.b16 %v401, %v400
  %v514 = vpack.c.b16 %v403, %v402
  %v515 = vpack.c.b16 %v405, %v404
  %v516 = vpack.c.b16 %v407, %v406
  %v517 = vpack.c.b16 %v409, %v408
  %v518 = vpack.c.b16 %v411, %v410
  %v519 = vpack.c.b16 %v413, %v412
  %v520 = vpack.c.b16 %v415, %v414
  %v521 = vpack.c.b16 %v417, %v416
  %v522 = vpack.c.b16 %v419, %v418
  %v523 = vpack.c.b16 %v421, %v420
  %v524 = vpack.c.b16 %v423, %v422
  %v525 = vpack.c.b16 %v425, %v424
  %v526 = vpack.c.b16 %v427, %v426
  %v527 = vpack.c.b16 %v429, %v428
  %v528 = vpack.c.b16 %v431, %v430
  %v529 = vpack.c.b16 %v433, %v432
  %v530 = vpack.c.b16 %v435, %v434
  %v531 = vpack.c.b16 %v437, %v436
  %v532 = vpack.c.b16 %v439, %v438
  %v533 = vpack.c.b16 %v441, %v440
  %v534 = vpack.c.b16 %v443, %v442
  %v535 = vpack.c.b16 %v445, %v444
  %v536 = vpack.c.b16 %v447, %v446
  %v537 = vpack.c.b16 %v449, %v448
  %v538 = vpack.c.b16 %v451, %v450
  %v539 = vpack.c.b16 %v453, %v452
  %v540 = vpack.c.b16 %v455, %v454
  %v541 = vpack.c.b16 %v457, %v456
  %v542 = vpack.c.b16 %v459, %v458
  %v543 = vpack.c.b16 %v461, %v460
  %v544 = vpack.c.b16 %v463, %v462
  %v545 = vpack.c.b16 %v465, %v464
  %v546 = vpack.c.b16 %v467, %v466
  %v547 = vpack.c.b16 %v469, %v468
  %v548 = vpack.c.b16 %v471, %v470
  %v549 = vpack.c.b16 %v473, %v472
  %v550 = vpack.c.b16 %v475, %v474
  %v551 = vpack.c.b16 %v477, %v476
  %v552 = vpack.c.b16 %v479, %v478
  %v553 = vpack.c.b16 %v481, %v480
  %v554 = vpack.c.b16 %v483, %v482
  %v555 = vpack.c.b16 %v485, %v484
  %v556 = vpack.c.b16 %v487, %v486
  %v557 = vpack.c.b16 %v489, %v488
  %v558 = vpack.c.b16 %v491, %v490
  %v559 = vpack.c.b16 %v493, %v492
  %v560 = vpack.c.b16 %v495, %v494
  %v561 = vpack.c.b16 %v497, %v496
  %626 = vmatprep.subr.bf16.mxu0 0
  %627 = vmatpush1.bf16.msra.mxu0 %v498
  %628 = vmatprep.subr.bf16.mxu0 0
  %629 = vmatpush1.bf16.msra.mxu0 %v499
  %630 = vmatprep.subr.bf16.mxu0 0
  %631 = vmatpush1.bf16.msra.mxu0 %v500
  %632 = vmatprep.subr.bf16.mxu0 0
  %633 = vmatpush1.bf16.msra.mxu0 %v501
  %634 = vmatprep.subr.bf16.mxu0 0
  %635 = vmatpush1.bf16.msra.mxu0 %v502
  %636 = vmatprep.subr.bf16.mxu0 0
  %637 = vmatpush1.bf16.msra.mxu0 %v503
  %638 = vmatprep.subr.bf16.mxu0 0
  %639 = vmatpush1.bf16.msra.mxu0 %v504
  %640 = vmatprep.subr.bf16.mxu0 0
  %641 = vmatpush1.bf16.msra.mxu0 %v505
  %642 = vmatprep.subr.bf16.mxu0 0
  %643 = vmatpush1.bf16.msra.mxu0 %v506
  %644 = vmatprep.subr.bf16.mxu0 0
  %645 = vmatpush1.bf16.msra.mxu0 %v507
  %646 = vmatprep.subr.bf16.mxu0 0
  %647 = vmatpush1.bf16.msra.mxu0 %v508
  %648 = vmatprep.subr.bf16.mxu0 0
  %649 = vmatpush1.bf16.msra.mxu0 %v509
  %650 = vmatprep.subr.bf16.mxu0 0
  %651 = vmatpush1.bf16.msra.mxu0 %v510
  %652 = vmatprep.subr.bf16.mxu0 0
  %653 = vmatpush1.bf16.msra.mxu0 %v511
  %654 = vmatprep.subr.bf16.mxu0 0
  %655 = vmatpush1.bf16.msra.mxu0 %v512
  %656 = vmatprep.subr.bf16.mxu0 0
  %657 = vmatpush1.bf16.msra.mxu0 %v513
  %658 = vmatprep.mubr.bf16.mxu0 %v211
  %659 = vmatmul.mubr.bf16.gmra.mrb[0].mxu0 %v210
  %v660 = vpop.f32.mrb[0].mxu0
  %v661 = vadd.f32 0.0, %v660
  %v662 = vpop.f32.mrb[0].mxu0
  %v663 = vpop.f32.mrb[0].mxu0
  %v664 = vadd.f32 0.0, %v663
  %v665 = vpop.f32.mrb[0].mxu0
  %666 = vmatprep.mubr.bf16.mxu0 %v219
  %667 = vmatmul.mubr.bf16.gmra.mrb[0].mxu0 %v218
  %v668 = vpop.f32.mrb[0].mxu0
  %v669 = vadd.f32 0.0, %v668
  %v670 = vpop.f32.mrb[0].mxu0
  %v671 = vpop.f32.mrb[0].mxu0
  %v672 = vadd.f32 0.0, %v671
  %v673 = vpop.f32.mrb[0].mxu0
  %674 = vdwg.mxu0
  %675 = vmatprep.subr.bf16.mxu0 0
  %676 = vmatpush1.bf16.msra.mxu0 %v514
  %677 = vmatprep.subr.bf16.mxu0 0
  %678 = vmatpush1.bf16.msra.mxu0 %v515
  %679 = vmatprep.subr.bf16.mxu0 0
  %680 = vmatpush1.bf16.msra.mxu0 %v516
  %681 = vmatprep.subr.bf16.mxu0 0
  %682 = vmatpush1.bf16.msra.mxu0 %v517
  %683 = vmatprep.subr.bf16.mxu0 0
  %684 = vmatpush1.bf16.msra.mxu0 %v518
  %685 = vmatprep.subr.bf16.mxu0 0
  %686 = vmatpush1.bf16.msra.mxu0 %v519
  %687 = vmatprep.subr.bf16.mxu0 0
  %688 = vmatpush1.bf16.msra.mxu0 %v520
  %689 = vmatprep.subr.bf16.mxu0 0
  %690 = vmatpush1.bf16.msra.mxu0 %v521
  %691 = vmatprep.subr.bf16.mxu0 0
  %692 = vmatpush1.bf16.msra.mxu0 %v522
  %693 = vmatprep.subr.bf16.mxu0 0
  %694 = vmatpush1.bf16.msra.mxu0 %v523
  %695 = vmatprep.subr.bf16.mxu0 0
  %696 = vmatpush1.bf16.msra.mxu0 %v524
  %697 = vmatprep.subr.bf16.mxu0 0
  %698 = vmatpush1.bf16.msra.mxu0 %v525
  %699 = vmatprep.subr.bf16.mxu0 0
  %700 = vmatpush1.bf16.msra.mxu0 %v526
  %701 = vmatprep.subr.bf16.mxu0 0
  %702 = vmatpush1.bf16.msra.mxu0 %v527
  %703 = vmatprep.subr.bf16.mxu0 0
  %704 = vmatpush1.bf16.msra.mxu0 %v528
  %705 = vmatprep.subr.bf16.mxu0 0
  %706 = vmatpush1.bf16.msra.mxu0 %v529
  %707 = vmatprep.mubr.bf16.mxu0 %v213
  %708 = vmatmul.mubr.bf16.gmra.mrb[0].mxu0 %v212
  %v709 = vpop.f32.mrb[0].mxu0
  %v710 = vadd.f32 %v661, %v709
  %v711 = vpop.f32.mrb[0].mxu0
  %v712 = vpop.f32.mrb[0].mxu0
  %v713 = vadd.f32 %v664, %v712
  %v714 = vpop.f32.mrb[0].mxu0
  %715 = vmatprep.mubr.bf16.mxu0 %v221
  %716 = vmatmul.mubr.bf16.gmra.mrb[0].mxu0 %v220
  %v717 = vpop.f32.mrb[0].mxu0
  %v718 = vadd.f32 %v669, %v717
  %v719 = vpop.f32.mrb[0].mxu0
  %v720 = vpop.f32.mrb[0].mxu0
  %v721 = vadd.f32 %v672, %v720
  %v722 = vpop.f32.mrb[0].mxu0
  %723 = vdwg.mxu0
  %724 = vmatprep.subr.bf16.mxu0 0
  %725 = vmatpush1.bf16.msra.mxu0 %v530
  %726 = vmatprep.subr.bf16.mxu0 0
  %727 = vmatpush1.bf16.msra.mxu0 %v531
  %728 = vmatprep.subr.bf16.mxu0 0
  %729 = vmatpush1.bf16.msra.mxu0 %v532
  %730 = vmatprep.subr.bf16.mxu0 0
  %731 = vmatpush1.bf16.msra.mxu0 %v533
  %732 = vmatprep.subr.bf16.mxu0 0
  %733 = vmatpush1.bf16.msra.mxu0 %v534
  %734 = vmatprep.subr.bf16.mxu0 0
  %735 = vmatpush1.bf16.msra.mxu0 %v535
  %736 = vmatprep.subr.bf16.mxu0 0
  %737 = vmatpush1.bf16.msra.mxu0 %v536
  %738 = vmatprep.subr.bf16.mxu0 0
  %739 = vmatpush1.bf16.msra.mxu0 %v537
  %740 = vmatprep.subr.bf16.mxu0 0
  %741 = vmatpush1.bf16.msra.mxu0 %v538
  %742 = vmatprep.subr.bf16.mxu0 0
  %743 = vmatpush1.bf16.msra.mxu0 %v539
  %744 = vmatprep.subr.bf16.mxu0 0
  %745 = vmatpush1.bf16.msra.mxu0 %v540
  %746 = vmatprep.subr.bf16.mxu0 0
  %747 = vmatpush1.bf16.msra.mxu0 %v541
  %748 = vmatprep.subr.bf16.mxu0 0
  %749 = vmatpush1.bf16.msra.mxu0 %v542
  %750 = vmatprep.subr.bf16.mxu0 0
  %751 = vmatpush1.bf16.msra.mxu0 %v543
  %752 = vmatprep.subr.bf16.mxu0 0
  %753 = vmatpush1.bf16.msra.mxu0 %v544
  %754 = vmatprep.subr.bf16.mxu0 0
  %755 = vmatpush1.bf16.msra.mxu0 %v545
  %756 = vmatprep.mubr.bf16.mxu0 %v215
  %757 = vmatmul.mubr.bf16.gmra.mrb[0].mxu0 %v214
  %v758 = vpop.f32.mrb[0].mxu0
  %v759 = vadd.f32 %v710, %v758
  %v760 = vpop.f32.mrb[0].mxu0
  %v761 = vpop.f32.mrb[0].mxu0
  %v762 = vadd.f32 %v713, %v761
  %v763 = vpop.f32.mrb[0].mxu0
  %764 = vmatprep.mubr.bf16.mxu0 %v223
  %765 = vmatmul.mubr.bf16.gmra.mrb[0].mxu0 %v222
  %v766 = vpop.f32.mrb[0].mxu0
  %v767 = vadd.f32 %v718, %v766
  %v768 = vpop.f32.mrb[0].mxu0
  %v769 = vpop.f32.mrb[0].mxu0
  %v770 = vadd.f32 %v721, %v769
  %v771 = vpop.f32.mrb[0].mxu0
  %772 = vdwg.mxu0
  %773 = vmatprep.subr.bf16.mxu0 0
  %774 = vmatpush1.bf16.msra.mxu0 %v546
  %775 = vmatprep.subr.bf16.mxu0 0
  %776 = vmatpush1.bf16.msra.mxu0 %v547
  %777 = vmatprep.subr.bf16.mxu0 0
  %778 = vmatpush1.bf16.msra.mxu0 %v548
  %779 = vmatprep.subr.bf16.mxu0 0
  %780 = vmatpush1.bf16.msra.mxu0 %v549
  %781 = vmatprep.subr.bf16.mxu0 0
  %782 = vmatpush1.bf16.msra.mxu0 %v550
  %783 = vmatprep.subr.bf16.mxu0 0
  %784 = vmatpush1.bf16.msra.mxu0 %v551
  %785 = vmatprep.subr.bf16.mxu0 0
  %786 = vmatpush1.bf16.msra.mxu0 %v552
  %787 = vmatprep.subr.bf16.mxu0 0
  %788 = vmatpush1.bf16.msra.mxu0 %v553
  %789 = vmatprep.subr.bf16.mxu0 0
  %790 = vmatpush1.bf16.msra.mxu0 %v554
  %791 = vmatprep.subr.bf16.mxu0 0
  %792 = vmatpush1.bf16.msra.mxu0 %v555
  %793 = vmatprep.subr.bf16.mxu0 0
  %794 = vmatpush1.bf16.msra.mxu0 %v556
  %795 = vmatprep.subr.bf16.mxu0 0
  %796 = vmatpush1.bf16.msra.mxu0 %v557
  %797 = vmatprep.subr.bf16.mxu0 0
  %798 = vmatpush1.bf16.msra.mxu0 %v558
  %799 = vmatprep.subr.bf16.mxu0 0
  %800 = vmatpush1.bf16.msra.mxu0 %v559
  %801 = vmatprep.subr.bf16.mxu0 0
  %802 = vmatpush1.bf16.msra.mxu0 %v560
  %803 = vmatprep.subr.bf16.mxu0 0
  %804 = vmatpush1.bf16.msra.mxu0 %v561
  %805 = vmatprep.mubr.bf16.mxu0 %v217
  %806 = vmatmul.mubr.bf16.gmra.mrb[0].mxu0 %v216
  %v807 = vpop.f32.mrb[0].mxu0
  %v808 = vadd.f32 %v759, %v807
  %v809 = vpop.f32.mrb[0].mxu0
  %v810 = vpop.f32.mrb[0].mxu0
  %v811 = vadd.f32 %v762, %v810
  %v812 = vpop.f32.mrb[0].mxu0
  %813 = vmatprep.mubr.bf16.mxu0 %v225
  %814 = vmatmul.mubr.bf16.gmra.mrb[0].mxu0 %v224
  %v815 = vpop.f32.mrb[0].mxu0
  %v816 = vadd.f32 %v767, %v815
  %v817 = vpop.f32.mrb[0].mxu0
  %v818 = vpop.f32.mrb[0].mxu0
  %v819 = vadd.f32 %v770, %v818
  %v820 = vpop.f32.mrb[0].mxu0
  %821 = vdwg.mxu0
  %v822 = vadd.f32 %v808, %v811
  %v823 = vadd.f32 %v822, %v816
  %v824 = vadd.f32 %v823, %v819
  %v825 = vrot.slane %v824, 4
  %v826 = vadd.f32 %v824, %v825
  %v827 = vrot.slane %v826, 2
  %v828 = vadd.f32 %v826, %v827
  %v829 = vrot.slane %v828, 1
  %v830 = vadd.f32 %v828, %v829
  %v831 = vrcp.pop 32.0
  %v832 = vmul.f32 %v830, %v831
  %v833 = vsub.f32 %v808, %v832
  %v834 = vsub.f32 %v811, %v832
  %v835 = vsub.f32 %v816, %v832
  %v836 = vsub.f32 %v819, %v832
  %v837 = vmul.f32 %v833, %v833
  %v838 = vmul.f32 %v834, %v834
  %v839 = vmul.f32 %v835, %v835
  %v840 = vmul.f32 %v836, %v836
  %v841 = vadd.f32 %v837, %v838
  %v842 = vadd.f32 %v841, %v839
  %v843 = vadd.f32 %v842, %v840
  %v844 = vrot.slane %v843, 4
  %v845 = vadd.f32 %v843, %v844
  %v846 = vrot.slane %v845, 2
  %v847 = vadd.f32 %v845, %v846
  %v848 = vrot.slane %v847, 1
  %v849 = vadd.f32 %v847, %v848
  %v850 = vmul.f32 %v849, %v831
  %v851 = vadd.f32 %v850, 1e-05
  %v852 = vrsqrt.pop %v851
  %v853 = vmul.f32 %v833, %v852
  %v854 = vmul.f32 %v834, %v852
  %v855 = vmul.f32 %v835, %v852
  %v856 = vmul.f32 %v836, %v852
  %v857 = vld [vmem:[%s2] sm:$0x1]
  %v859 = vlaneseq
  %v860 = vshrl.u32 %v859, 7
  %v861 = vsub.s32 0, %v860
  %v862 = vrot.slane %v857, %v861
  %v864 = vmul.f32 %v853, %v862
  %v865 = vmul.f32 %v854, %v862
  %v866 = vmul.f32 %v855, %v862
  %v867 = vmul.f32 %v856, %v862
  %v868 = vld [vmem:[%s3] sm:$0x1]
  %v870 = vlaneseq
  %v871 = vshrl.u32 %v870, 7
  %v872 = vsub.s32 0, %v871
  %v873 = vrot.slane %v868, %v872
  %v875 = vadd.f32 %v864, %v873
  %v876 = vadd.f32 %v865, %v873
  %v877 = vadd.f32 %v866, %v873
  %v878 = vadd.f32 %v867, %v873
  %vm879 = vcmp.ge.f32.partialorder %v875, 0.0
  %vm880 = vcmp.ge.f32.partialorder %v876, 0.0
  %vm881 = vcmp.ge.f32.partialorder %v877, 0.0
  %vm882 = vcmp.ge.f32.partialorder %v878, 0.0
  %v883 = vmul.f32 %v875, 0.2
  %v884 = vmul.f32 %v876, 0.2
  %v885 = vmul.f32 %v877, 0.2
  %v886 = vmul.f32 %v878, 0.2
  %v887 = vsel %vm879, %v875, %v883
  %v888 = vsel %vm880, %v876, %v884
  %v889 = vsel %vm881, %v877, %v885
  %v890 = vsel %vm882, %v878, %v886
  %v891 = vpack.c.bf16 %v888, %v887
  %v892 = vpack.c.bf16 %v890, %v889
  %v895 = vunpack.c.l.b16 %v891
  %v896 = vunpack.c.h.b16 %v891
  %v897 = vunpack.c.l.b16 %v892
  %v898 = vunpack.c.h.b16 %v892
  %v899 = vpack.c.b16 %v895, %v895
  %v900 = vpack.c.b16 %v896, %v896
  %v901 = vpack.c.b16 %v897, %v897
  %v902 = vpack.c.b16 %v898, %v898
  %907 = vst [vmem:[%s4] sm:$0xf] %v899
  %908 = vst [vmem:[%s4 + $0x4] sm:$0xf] %v900
  %909 = vst [vmem:[%s4 + $0x8] sm:$0xf] %v901
  %910 = vst [vmem:[%s4 + $0xc] sm:$0xf] %v902
  // Predicated region
  $region18: #{discriminator_forward.8} parent=0 // pred_check
    _
  $region19: #{discriminator_forward.8} parent=0 // pred_check_branch
    %912 = sbr.rel (0) target = $region21
  $region20: #{discriminator_forward.8} parent=0 // pred_region
    _
  $region21: #{discriminator_forward.8} parent=0 // pred_fallthru
    _
  // Predicated region
  $region22: #{discriminator_forward.8} parent=0 // pred_check
    _
  $region23: #{discriminator_forward.8} parent=0 // pred_check_branch
    %914 = sbr.rel (0) target = $region25
  $region24: #{discriminator_forward.8} parent=0 // pred_region
    _
  $region25: #{discriminator_forward.8} parent=0 // pred_fallthru
    _

// kernel: discriminator_forward.9
$region0: #{discriminator_forward.9}
  #allocation0 [shape = 'u32[]', space=smem, size = 0x4, offset = 0x4, fixed_abs, tag = 'smem constant byte address 0x4 - core index']
  #allocation1 [shape = 'u32[144,128]{1,0:T(1,128)}', space=vmem, size = 0x12000, scoped, tag = 'internal scratch']
  %s0 = inlined_call_operand.vmem [shape: bf16[8,2048], index: 0, kind: input, shape index: {}]
  %s1 = inlined_call_operand.vmem [shape: bf16[2048,1], index: 1, kind: input, shape index: {}]
  %s2 = inlined_call_operand.vmem [shape: f32[8,1], index: 2, kind: output, shape index: {}]
  %s3 = sld [smem:[#allocation0]]
  $region18: #{discriminator_forward.9} parent=0
    _
  %s5 = ssub.s32 1, %s3
  %s6 = scalar_select 0, %s5, %s3
  // Predicated region
  $region2: #{discriminator_forward.9} parent=0 // pred_check
    _
  $region3: #{discriminator_forward.9} parent=0 // pred_check_branch
    %8 = sbr.rel (0) target = $region5
  $region4: #{discriminator_forward.9} parent=0 // pred_region
    _
  $region5: #{discriminator_forward.9} parent=0 // pred_fallthru
    _
  // Predicated region
  $region6: #{discriminator_forward.9} parent=0 // pred_check
    _
  $region7: #{discriminator_forward.9} parent=0 // pred_check_branch
    %10 = sbr.rel (0) target = $region9
  $region8: #{discriminator_forward.9} parent=0 // pred_region
    _
  $region9: #{discriminator_forward.9} parent=0 // pred_fallthru
    _
  %v12 = vld [vmem:[%s0] sm:$0xff]
  %v13 = vld [vmem:[%s0 + $0x8] sm:$0xff]
  %v14 = vld [vmem:[%s0 + $0x10] sm:$0xff]
  %v15 = vld [vmem:[%s0 + $0x18] sm:$0xff]
  %v16 = vld [vmem:[%s0 + $0x20] sm:$0xff]
  %v17 = vld [vmem:[%s0 + $0x28] sm:$0xff]
  %v18 = vld [vmem:[%s0 + $0x30] sm:$0xff]
  %v19 = vld [vmem:[%s0 + $0x38] sm:$0xff]
  %v20 = vld [vmem:[%s1] sm:$0xf]
  %v21 = vld [vmem:[%s1 + $0x4] sm:$0xf]
  %v22 = vld [vmem:[%s1 + $0x8] sm:$0xf]
  %v23 = vld [vmem:[%s1 + $0xc] sm:$0xf]
  %v24 = vld [vmem:[%s1 + $0x10] sm:$0xf]
  %v25 = vld [vmem:[%s1 + $0x14] sm:$0xf]
  %v26 = vld [vmem:[%s1 + $0x18] sm:$0xf]
  %v27 = vld [vmem:[%s1 + $0x1c] sm:$0xf]
  %v28 = vld [vmem:[%s1 + $0x20] sm:$0xf]
  %v29 = vld [vmem:[%s1 + $0x24] sm:$0xf]
  %v30 = vld [vmem:[%s1 + $0x28] sm:$0xf]
  %v31 = vld [vmem:[%s1 + $0x2c] sm:$0xf]
  %v32 = vld [vmem:[%s1 + $0x30] sm:$0xf]
  %v33 = vld [vmem:[%s1 + $0x34] sm:$0xf]
  %v34 = vld [vmem:[%s1 + $0x38] sm:$0xf]
  %v35 = vld [vmem:[%s1 + $0x3c] sm:$0xf]
  %v36 = vld [vmem:[%s1 + $0x40] sm:$0xf]
  %v37 = vld [vmem:[%s1 + $0x44] sm:$0xf]
  %v38 = vld [vmem:[%s1 + $0x48] sm:$0xf]
  %v39 = vld [vmem:[%s1 + $0x4c] sm:$0xf]
  %v40 = vld [vmem:[%s1 + $0x50] sm:$0xf]
  %v41 = vld [vmem:[%s1 + $0x54] sm:$0xf]
  %v42 = vld [vmem:[%s1 + $0x58] sm:$0xf]
  %v43 = vld [vmem:[%s1 + $0x5c] sm:$0xf]
  %v44 = vld [vmem:[%s1 + $0x60] sm:$0xf]
  %v45 = vld [vmem:[%s1 + $0x64] sm:$0xf]
  %v46 = vld [vmem:[%s1 + $0x68] sm:$0xf]
  %v47 = vld [vmem:[%s1 + $0x6c] sm:$0xf]
  %v48 = vld [vmem:[%s1 + $0x70] sm:$0xf]
  %v49 = vld [vmem:[%s1 + $0x74] sm:$0xf]
  %v50 = vld [vmem:[%s1 + $0x78] sm:$0xf]
  %v51 = vld [vmem:[%s1 + $0x7c] sm:$0xf]
  %v52 = vld [vmem:[%s1 + $0x80] sm:$0xf]
  %v53 = vld [vmem:[%s1 + $0x84] sm:$0xf]
  %v54 = vld [vmem:[%s1 + $0x88] sm:$0xf]
  %v55 = vld [vmem:[%s1 + $0x8c] sm:$0xf]
  %v56 = vld [vmem:[%s1 + $0x90] sm:$0xf]
  %v57 = vld [vmem:[%s1 + $0x94] sm:$0xf]
  %v58 = vld [vmem:[%s1 + $0x98] sm:$0xf]
  %v59 = vld [vmem:[%s1 + $0x9c] sm:$0xf]
  %v60 = vld [vmem:[%s1 + $0xa0] sm:$0xf]
  %v61 = vld [vmem:[%s1 + $0xa4] sm:$0xf]
  %v62 = vld [vmem:[%s1 + $0xa8] sm:$0xf]
  %v63 = vld [vmem:[%s1 + $0xac] sm:$0xf]
  %v64 = vld [vmem:[%s1 + $0xb0] sm:$0xf]
  %v65 = vld [vmem:[%s1 + $0xb4] sm:$0xf]
  %v66 = vld [vmem:[%s1 + $0xb8] sm:$0xf]
  %v67 = vld [vmem:[%s1 + $0xbc] sm:$0xf]
  %v68 = vld [vmem:[%s1 + $0xc0] sm:$0xf]
  %v69 = vld [vmem:[%s1 + $0xc4] sm:$0xf]
  %v70 = vld [vmem:[%s1 + $0xc8] sm:$0xf]
  %v71 = vld [vmem:[%s1 + $0xcc] sm:$0xf]
  %v72 = vld [vmem:[%s1 + $0xd0] sm:$0xf]
  %v73 = vld [vmem:[%s1 + $0xd4] sm:$0xf]
  %v74 = vld [vmem:[%s1 + $0xd8] sm:$0xf]
  %v75 = vld [vmem:[%s1 + $0xdc] sm:$0xf]
  %v76 = vld [vmem:[%s1 + $0xe0] sm:$0xf]
  %v77 = vld [vmem:[%s1 + $0xe4] sm:$0xf]
  %v78 = vld [vmem:[%s1 + $0xe8] sm:$0xf]
  %v79 = vld [vmem:[%s1 + $0xec] sm:$0xf]
  %v80 = vld [vmem:[%s1 + $0xf0] sm:$0xf]
  %v81 = vld [vmem:[%s1 + $0xf4] sm:$0xf]
  %v82 = vld [vmem:[%s1 + $0xf8] sm:$0xf]
  %v83 = vld [vmem:[%s1 + $0xfc] sm:$0xf]
  %v84 = vld [vmem:[%s1 + $0x100] sm:$0xf]
  %v85 = vld [vmem:[%s1 + $0x104] sm:$0xf]
  %v86 = vld [vmem:[%s1 + $0x108] sm:$0xf]
  %v87 = vld [vmem:[%s1 + $0x10c] sm:$0xf]
  %v88 = vld [vmem:[%s1 + $0x110] sm:$0xf]
  %v89 = vld [vmem:[%s1 + $0x114] sm:$0xf]
  %v90 = vld [vmem:[%s1 + $0x118] sm:$0xf]
  %v91 = vld [vmem:[%s1 + $0x11c] sm:$0xf]
  %v92 = vld [vmem:[%s1 + $0x120] sm:$0xf]
  %v93 = vld [vmem:[%s1 + $0x124] sm:$0xf]
  %v94 = vld [vmem:[%s1 + $0x128] sm:$0xf]
  %v95 = vld [vmem:[%s1 + $0x12c] sm:$0xf]
  %v96 = vld [vmem:[%s1 + $0x130] sm:$0xf]
  %v97 = vld [vmem:[%s1 + $0x134] sm:$0xf]
  %v98 = vld [vmem:[%s1 + $0x138] sm:$0xf]
  %v99 = vld [vmem:[%s1 + $0x13c] sm:$0xf]
  %v100 = vld [vmem:[%s1 + $0x140] sm:$0xf]
  %v101 = vld [vmem:[%s1 + $0x144] sm:$0xf]
  %v102 = vld [vmem:[%s1 + $0x148] sm:$0xf]
  %v103 = vld [vmem:[%s1 + $0x14c] sm:$0xf]
  %v104 = vld [vmem:[%s1 + $0x150] sm:$0xf]
  %v105 = vld [vmem:[%s1 + $0x154] sm:$0xf]
  %v106 = vld [vmem:[%s1 + $0x158] sm:$0xf]
  %v107 = vld [vmem:[%s1 + $0x15c] sm:$0xf]
  %v108 = vld [vmem:[%s1 + $0x160] sm:$0xf]
  %v109 = vld [vmem:[%s1 + $0x164] sm:$0xf]
  %v110 = vld [vmem:[%s1 + $0x168] sm:$0xf]
  %v111 = vld [vmem:[%s1 + $0x16c] sm:$0xf]
  %v112 = vld [vmem:[%s1 + $0x170] sm:$0xf]
  %v113 = vld [vmem:[%s1 + $0x174] sm:$0xf]
  %v114 = vld [vmem:[%s1 + $0x178] sm:$0xf]
  %v115 = vld [vmem:[%s1 + $0x17c] sm:$0xf]
  %v116 = vld [vmem:[%s1 + $0x180] sm:$0xf]
  %v117 = vld [vmem:[%s1 + $0x184] sm:$0xf]
  %v118 = vld [vmem:[%s1 + $0x188] sm:$0xf]
  %v119 = vld [vmem:[%s1 + $0x18c] sm:$0xf]
  %v120 = vld [vmem:[%s1 + $0x190] sm:$0xf]
  %v121 = vld [vmem:[%s1 + $0x194] sm:$0xf]
  %v122 = vld [vmem:[%s1 + $0x198] sm:$0xf]
  %v123 = vld [vmem:[%s1 + $0x19c] sm:$0xf]
  %v124 = vld [vmem:[%s1 + $0x1a0] sm:$0xf]
  %v125 = vld [vmem:[%s1 + $0x1a4] sm:$0xf]
  %v126 = vld [vmem:[%s1 + $0x1a8] sm:$0xf]
  %v127 = vld [vmem:[%s1 + $0x1ac] sm:$0xf]
  %v128 = vld [vmem:[%s1 + $0x1b0] sm:$0xf]
  %v129 = vld [vmem:[%s1 + $0x1b4] sm:$0xf]
  %v130 = vld [vmem:[%s1 + $0x1b8] sm:$0xf]
  %v131 = vld [vmem:[%s1 + $0x1bc] sm:$0xf]
  %v132 = vld [vmem:[%s1 + $0x1c0] sm:$0xf]
  %v133 = vld [vmem:[%s1 + $0x1c4] sm:$0xf]
  %v134 = vld [vmem:[%s1 + $0x1c8] sm:$0xf]
  %v135 = vld [vmem:[%s1 + $0x1cc] sm:$0xf]
  %v136 = vld [vmem:[%s1 + $0x1d0] sm:$0xf]
  %v137 = vld [vmem:[%s1 + $0x1d4] sm:$0xf]
  %v138 = vld [vmem:[%s1 + $0x1d8] sm:$0xf]
  %v139 = vld [vmem:[%s1 + $0x1dc] sm:$0xf]
  %v140 = vld [vmem:[%s1 + $0x1e0] sm:$0xf]
  %v141 = vld [vmem:[%s1 + $0x1e4] sm:$0xf]
  %v142 = vld [vmem:[%s1 + $0x1e8] sm:$0xf]
  %v143 = vld [vmem:[%s1 + $0x1ec] sm:$0xf]
  %v144 = vld [vmem:[%s1 + $0x1f0] sm:$0xf]
  %v145 = vld [vmem:[%s1 + $0x1f4] sm:$0xf]
  %v146 = vld [vmem:[%s1 + $0x1f8] sm:$0xf]
  %v147 = vld [vmem:[%s1 + $0x1fc] sm:$0xf]
  %v148 = vld [vmem:[%s1 + $0x200] sm:$0xf]
  %v149 = vld [vmem:[%s1 + $0x204] sm:$0xf]
  %v150 = vld [vmem:[%s1 + $0x208] sm:$0xf]
  %v151 = vld [vmem:[%s1 + $0x20c] sm:$0xf]
  %v152 = vld [vmem:[%s1 + $0x210] sm:$0xf]
  %v153 = vld [vmem:[%s1 + $0x214] sm:$0xf]
  %v154 = vld [vmem:[%s1 + $0x218] sm:$0xf]
  %v155 = vld [vmem:[%s1 + $0x21c] sm:$0xf]
  %v156 = vld [vmem:[%s1 + $0x220] sm:$0xf]
  %v157 = vld [vmem:[%s1 + $0x224] sm:$0xf]
  %v158 = vld [vmem:[%s1 + $0x228] sm:$0xf]
  %v159 = vld [vmem:[%s1 + $0x22c] sm:$0xf]
  %v160 = vld [vmem:[%s1 + $0x230] sm:$0xf]
  %v161 = vld [vmem:[%s1 + $0x234] sm:$0xf]
  %v162 = vld [vmem:[%s1 + $0x238] sm:$0xf]
  %v163 = vld [vmem:[%s1 + $0x23c] sm:$0xf]
  %v164 = vld [vmem:[%s1 + $0x240] sm:$0xf]
  %v165 = vld [vmem:[%s1 + $0x244] sm:$0xf]
  %v166 = vld [vmem:[%s1 + $0x248] sm:$0xf]
  %v167 = vld [vmem:[%s1 + $0x24c] sm:$0xf]
  %v168 = vld [vmem:[%s1 + $0x250] sm:$0xf]
  %v169 = vld [vmem:[%s1 + $0x254] sm:$0xf]
  %v170 = vld [vmem:[%s1 + $0x258] sm:$0xf]
  %v171 = vld [vmem:[%s1 + $0x25c] sm:$0xf]
  %v172 = vld [vmem:[%s1 + $0x260] sm:$0xf]
  %v173 = vld [vmem:[%s1 + $0x264] sm:$0xf]
  %v174 = vld [vmem:[%s1 + $0x268] sm:$0xf]
  %v175 = vld [vmem:[%s1 + $0x26c] sm:$0xf]
  %v176 = vld [vmem:[%s1 + $0x270] sm:$0xf]
  %v177 = vld [vmem:[%s1 + $0x274] sm:$0xf]
  %v178 = vld [vmem:[%s1 + $0x278] sm:$0xf]
  %v179 = vld [vmem:[%s1 + $0x27c] sm:$0xf]
  %v180 = vld [vmem:[%s1 + $0x280] sm:$0xf]
  %v181 = vld [vmem:[%s1 + $0x284] sm:$0xf]
  %v182 = vld [vmem:[%s1 + $0x288] sm:$0xf]
  %v183 = vld [vmem:[%s1 + $0x28c] sm:$0xf]
  %v184 = vld [vmem:[%s1 + $0x290] sm:$0xf]
  %v185 = vld [vmem:[%s1 + $0x294] sm:$0xf]
  %v186 = vld [vmem:[%s1 + $0x298] sm:$0xf]
  %v187 = vld [vmem:[%s1 + $0x29c] sm:$0xf]
  %v188 = vld [vmem:[%s1 + $0x2a0] sm:$0xf]
  %v189 = vld [vmem:[%s1 + $0x2a4] sm:$0xf]
  %v190 = vld [vmem:[%s1 + $0x2a8] sm:$0xf]
  %v191 = vld [vmem:[%s1 + $0x2ac] sm:$0xf]
  %v192 = vld [vmem:[%s1 + $0x2b0] sm:$0xf]
  %v193 = vld [vmem:[%s1 + $0x2b4] sm:$0xf]
  %v194 = vld [vmem:[%s1 + $0x2b8] sm:$0xf]
  %v195 = vld [vmem:[%s1 + $0x2bc] sm:$0xf]
  %v196 = vld [vmem:[%s1 + $0x2c0] sm:$0xf]
  %v197 = vld [vmem:[%s1 + $0x2c4] sm:$0xf]
  %v198 = vld [vmem:[%s1 + $0x2c8] sm:$0xf]
  %v199 = vld [vmem:[%s1 + $0x2cc] sm:$0xf]
  %v200 = vld [vmem:[%s1 + $0x2d0] sm:$0xf]
  %v201 = vld [vmem:[%s1 + $0x2d4] sm:$0xf]
  %v202 = vld [vmem:[%s1 + $0x2d8] sm:$0xf]
  %v203 = vld [vmem:[%s1 + $0x2dc] sm:$0xf]
  %v204 = vld [vmem:[%s1 + $0x2e0] sm:$0xf]
  %v205 = vld [vmem:[%s1 + $0x2e4] sm:$0xf]
  %v206 = vld [vmem:[%s1 + $0x2e8] sm:$0xf]
  %v207 = vld [vmem:[%s1 + $0x2ec] sm:$0xf]
  %v208 = vld [vmem:[%s1 + $0x2f0] sm:$0xf]
  %v209 = vld [vmem:[%s1 + $0x2f4] sm:$0xf]
  %v210 = vld [vmem:[%s1 + $0x2f8] sm:$0xf]
  %v211 = vld [vmem:[%s1 + $0x2fc] sm:$0xf]
  %v212 = vld [vmem:[%s1 + $0x300] sm:$0xf]
  %v213 = vld [vmem:[%s1 + $0x304] sm:$0xf]
  %v214 = vld [vmem:[%s1 + $0x308] sm:$0xf]
  %v215 = vld [vmem:[%s1 + $0x30c] sm:$0xf]
  %v216 = vld [vmem:[%s1 + $0x310] sm:$0xf]
  %v217 = vld [vmem:[%s1 + $0x314] sm:$0xf]
  %v218 = vld [vmem:[%s1 + $0x318] sm:$0xf]
  %v219 = vld [vmem:[%s1 + $0x31c] sm:$0xf]
  %v220 = vld [vmem:[%s1 + $0x320] sm:$0xf]
  %v221 = vld [vmem:[%s1 + $0x324] sm:$0xf]
  %v222 = vld [vmem:[%s1 + $0x328] sm:$0xf]
  %v223 = vld [vmem:[%s1 + $0x32c] sm:$0xf]
  %v224 = vld [vmem:[%s1 + $0x330] sm:$0xf]
  %v225 = vld [vmem:[%s1 + $0x334] sm:$0xf]
  %v226 = vld [vmem:[%s1 + $0x338] sm:$0xf]
  %v227 = vld [vmem:[%s1 + $0x33c] sm:$0xf]
  %v228 = vld [vmem:[%s1 + $0x340] sm:$0xf]
  %v229 = vld [vmem:[%s1 + $0x344] sm:$0xf]
  %v230 = vld [vmem:[%s1 + $0x348] sm:$0xf]
  %v231 = vld [vmem:[%s1 + $0x34c] sm:$0xf]
  %v232 = vld [vmem:[%s1 + $0x350] sm:$0xf]
  %v233 = vld [vmem:[%s1 + $0x354] sm:$0xf]
  %v234 = vld [vmem:[%s1 + $0x358] sm:$0xf]
  %v235 = vld [vmem:[%s1 + $0x35c] sm:$0xf]
  %v236 = vld [vmem:[%s1 + $0x360] sm:$0xf]
  %v237 = vld [vmem:[%s1 + $0x364] sm:$0xf]
  %v238 = vld [vmem:[%s1 + $0x368] sm:$0xf]
  %v239 = vld [vmem:[%s1 + $0x36c] sm:$0xf]
  %v240 = vld [vmem:[%s1 + $0x370] sm:$0xf]
  %v241 = vld [vmem:[%s1 + $0x374] sm:$0xf]
  %v242 = vld [vmem:[%s1 + $0x378] sm:$0xf]
  %v243 = vld [vmem:[%s1 + $0x37c] sm:$0xf]
  %v244 = vld [vmem:[%s1 + $0x380] sm:$0xf]
  %v245 = vld [vmem:[%s1 + $0x384] sm:$0xf]
  %v246 = vld [vmem:[%s1 + $0x388] sm:$0xf]
  %v247 = vld [vmem:[%s1 + $0x38c] sm:$0xf]
  %v248 = vld [vmem:[%s1 + $0x390] sm:$0xf]
  %v249 = vld [vmem:[%s1 + $0x394] sm:$0xf]
  %v250 = vld [vmem:[%s1 + $0x398] sm:$0xf]
  %v251 = vld [vmem:[%s1 + $0x39c] sm:$0xf]
  %v252 = vld [vmem:[%s1 + $0x3a0] sm:$0xf]
  %v253 = vld [vmem:[%s1 + $0x3a4] sm:$0xf]
  %v254 = vld [vmem:[%s1 + $0x3a8] sm:$0xf]
  %v255 = vld [vmem:[%s1 + $0x3ac] sm:$0xf]
  %v256 = vld [vmem:[%s1 + $0x3b0] sm:$0xf]
  %v257 = vld [vmem:[%s1 + $0x3b4] sm:$0xf]
  %v258 = vld [vmem:[%s1 + $0x3b8] sm:$0xf]
  %v259 = vld [vmem:[%s1 + $0x3bc] sm:$0xf]
  %v260 = vld [vmem:[%s1 + $0x3c0] sm:$0xf]
  %v261 = vld [vmem:[%s1 + $0x3c4] sm:$0xf]
  %v262 = vld [vmem:[%s1 + $0x3c8] sm:$0xf]
  %v263 = vld [vmem:[%s1 + $0x3cc] sm:$0xf]
  %v264 = vld [vmem:[%s1 + $0x3d0] sm:$0xf]
  %v265 = vld [vmem:[%s1 + $0x3d4] sm:$0xf]
  %v266 = vld [vmem:[%s1 + $0x3d8] sm:$0xf]
  %v267 = vld [vmem:[%s1 + $0x3dc] sm:$0xf]
  %v268 = vld [vmem:[%s1 + $0x3e0] sm:$0xf]
  %v269 = vld [vmem:[%s1 + $0x3e4] sm:$0xf]
  %v270 = vld [vmem:[%s1 + $0x3e8] sm:$0xf]
  %v271 = vld [vmem:[%s1 + $0x3ec] sm:$0xf]
  %v272 = vld [vmem:[%s1 + $0x3f0] sm:$0xf]
  %v273 = vld [vmem:[%s1 + $0x3f4] sm:$0xf]
  %v274 = vld [vmem:[%s1 + $0x3f8] sm:$0xf]
  %v275 = vld [vmem:[%s1 + $0x3fc] sm:$0xf]
  %v284 = vunpack.c.l.b16 %v12
  %v285 = vunpack.c.h.b16 %v12
  %v286 = vunpack.c.l.b16 %v13
  %v287 = vunpack.c.h.b16 %v13
  %v288 = vunpack.c.l.b16 %v14
  %v289 = vunpack.c.h.b16 %v14
  %v290 = vunpack.c.l.b16 %v15
  %v291 = vunpack.c.h.b16 %v15
  %v292 = vunpack.c.l.b16 %v16
  %v293 = vunpack.c.h.b16 %v16
  %v294 = vunpack.c.l.b16 %v17
  %v295 = vunpack.c.h.b16 %v17
  %v296 = vunpack.c.l.b16 %v18
  %v297 = vunpack.c.h.b16 %v18
  %v298 = vunpack.c.l.b16 %v19
  %v299 = vunpack.c.h.b16 %v19
  %v300 = vpack.c.b16 %v284, %v284
  %v301 = vpack.c.b16 %v285, %v285
  %v302 = vpack.c.b16 %v286, %v286
  %v303 = vpack.c.b16 %v287, %v287
  %v304 = vpack.c.b16 %v288, %v288
  %v305 = vpack.c.b16 %v289, %v289
  %v306 = vpack.c.b16 %v290, %v290
  %v307 = vpack.c.b16 %v291, %v291
  %v308 = vpack.c.b16 %v292, %v292
  %v309 = vpack.c.b16 %v293, %v293
  %v310 = vpack.c.b16 %v294, %v294
  %v311 = vpack.c.b16 %v295, %v295
  %v312 = vpack.c.b16 %v296, %v296
  %v313 = vpack.c.b16 %v297, %v297
  %v314 = vpack.c.b16 %v298, %v298
  %v315 = vpack.c.b16 %v299, %v299
  %v588 = vunpack.c.l.b16 %v20
  %v589 = vunpack.c.l.b16 %v21
  %v590 = vunpack.c.l.b16 %v22
  %v591 = vunpack.c.l.b16 %v23
  %v592 = vunpack.c.l.b16 %v24
  %v593 = vunpack.c.l.b16 %v25
  %v594 = vunpack.c.l.b16 %v26
  %v595 = vunpack.c.l.b16 %v27
  %v596 = vunpack.c.l.b16 %v28
  %v597 = vunpack.c.l.b16 %v29
  %v598 = vunpack.c.l.b16 %v30
  %v599 = vunpack.c.l.b16 %v31
  %v600 = vunpack.c.l.b16 %v32
  %v601 = vunpack.c.l.b16 %v33
  %v602 = vunpack.c.l.b16 %v34
  %v603 = vunpack.c.l.b16 %v35
  %v604 = vunpack.c.l.b16 %v36
  %v605 = vunpack.c.l.b16 %v37
  %v606 = vunpack.c.l.b16 %v38
  %v607 = vunpack.c.l.b16 %v39
  %v608 = vunpack.c.l.b16 %v40
  %v609 = vunpack.c.l.b16 %v41
  %v610 = vunpack.c.l.b16 %v42
  %v611 = vunpack.c.l.b16 %v43
  %v612 = vunpack.c.l.b16 %v44
  %v613 = vunpack.c.l.b16 %v45
  %v614 = vunpack.c.l.b16 %v46
  %v615 = vunpack.c.l.b16 %v47
  %v616 = vunpack.c.l.b16 %v48
  %v617 = vunpack.c.l.b16 %v49
  %v618 = vunpack.c.l.b16 %v50
  %v619 = vunpack.c.l.b16 %v51
  %v620 = vunpack.c.l.b16 %v52
  %v621 = vunpack.c.l.b16 %v53
  %v622 = vunpack.c.l.b16 %v54
  %v623 = vunpack.c.l.b16 %v55
  %v624 = vunpack.c.l.b16 %v56
  %v625 = vunpack.c.l.b16 %v57
  %v626 = vunpack.c.l.b16 %v58
  %v627 = vunpack.c.l.b16 %v59
  %v628 = vunpack.c.l.b16 %v60
  %v629 = vunpack.c.l.b16 %v61
  %v630 = vunpack.c.l.b16 %v62
  %v631 = vunpack.c.l.b16 %v63
  %v632 = vunpack.c.l.b16 %v64
  %v633 = vunpack.c.l.b16 %v65
  %v634 = vunpack.c.l.b16 %v66
  %v635 = vunpack.c.l.b16 %v67
  %v636 = vunpack.c.l.b16 %v68
  %v637 = vunpack.c.l.b16 %v69
  %v638 = vunpack.c.l.b16 %v70
  %v639 = vunpack.c.l.b16 %v71
  %v640 = vunpack.c.l.b16 %v72
  %v641 = vunpack.c.l.b16 %v73
  %v642 = vunpack.c.l.b16 %v74
  %v643 = vunpack.c.l.b16 %v75
  %v644 = vunpack.c.l.b16 %v76
  %v645 = vunpack.c.l.b16 %v77
  %v646 = vunpack.c.l.b16 %v78
  %v647 = vunpack.c.l.b16 %v79
  %v648 = vunpack.c.l.b16 %v80
  %v649 = vunpack.c.l.b16 %v81
  %v650 = vunpack.c.l.b16 %v82
  %v651 = vunpack.c.l.b16 %v83
  %v652 = vunpack.c.l.b16 %v84
  %v653 = vunpack.c.l.b16 %v85
  %v654 = vunpack.c.l.b16 %v86
  %v655 = vunpack.c.l.b16 %v87
  %v656 = vunpack.c.l.b16 %v88
  %v657 = vunpack.c.l.b16 %v89
  %v658 = vunpack.c.l.b16 %v90
  %v659 = vunpack.c.l.b16 %v91
  %v660 = vunpack.c.l.b16 %v92
  %v661 = vunpack.c.l.b16 %v93
  %v662 = vunpack.c.l.b16 %v94
  %v663 = vunpack.c.l.b16 %v95
  %v664 = vunpack.c.l.b16 %v96
  %v665 = vunpack.c.l.b16 %v97
  %v666 = vunpack.c.l.b16 %v98
  %v667 = vunpack.c.l.b16 %v99
  %v668 = vunpack.c.l.b16 %v100
  %v669 = vunpack.c.l.b16 %v101
  %v670 = vunpack.c.l.b16 %v102
  %v671 = vunpack.c.l.b16 %v103
  %v672 = vunpack.c.l.b16 %v104
  %v673 = vunpack.c.l.b16 %v105
  %v674 = vunpack.c.l.b16 %v106
  %v675 = vunpack.c.l.b16 %v107
  %v676 = vunpack.c.l.b16 %v108
  %v677 = vunpack.c.l.b16 %v109
  %v678 = vunpack.c.l.b16 %v110
  %v679 = vunpack.c.l.b16 %v111
  %v680 = vunpack.c.l.b16 %v112
  %v681 = vunpack.c.l.b16 %v113
  %v682 = vunpack.c.l.b16 %v114
  %v683 = vunpack.c.l.b16 %v115
  %v684 = vunpack.c.l.b16 %v116
  %v685 = vunpack.c.l.b16 %v117
  %v686 = vunpack.c.l.b16 %v118
  %v687 = vunpack.c.l.b16 %v119
  %v688 = vunpack.c.l.b16 %v120
  %v689 = vunpack.c.l.b16 %v121
  %v690 = vunpack.c.l.b16 %v122
  %v691 = vunpack.c.l.b16 %v123
  %v692 = vunpack.c.l.b16 %v124
  %v693 = vunpack.c.l.b16 %v125
  %v694 = vunpack.c.l.b16 %v126
  %v695 = vunpack.c.l.b16 %v127
  %v696 = vunpack.c.l.b16 %v128
  %v697 = vunpack.c.l.b16 %v129
  %v698 = vunpack.c.l.b16 %v130
  %v699 = vunpack.c.l.b16 %v131
  %v700 = vunpack.c.l.b16 %v132
  %v701 = vunpack.c.l.b16 %v133
  %v702 = vunpack.c.l.b16 %v134
  %v703 = vunpack.c.l.b16 %v135
  %v704 = vunpack.c.l.b16 %v136
  %v705 = vunpack.c.l.b16 %v137
  %v706 = vunpack.c.l.b16 %v138
  %v707 = vunpack.c.l.b16 %v139
  %v708 = vunpack.c.l.b16 %v140
  %v709 = vunpack.c.l.b16 %v141
  %v710 = vunpack.c.l.b16 %v142
  %v711 = vunpack.c.l.b16 %v143
  %v712 = vunpack.c.l.b16 %v144
  %v713 = vunpack.c.l.b16 %v145
  %v714 = vunpack.c.l.b16 %v146
  %v715 = vunpack.c.l.b16 %v147
  %v716 = vunpack.c.l.b16 %v148
  %v717 = vunpack.c.l.b16 %v149
  %v718 = vunpack.c.l.b16 %v150
  %v719 = vunpack.c.l.b16 %v151
  %v720 = vunpack.c.l.b16 %v152
  %v721 = vunpack.c.l.b16 %v153
  %v722 = vunpack.c.l.b16 %v154
  %v723 = vunpack.c.l.b16 %v155
  %v724 = vunpack.c.l.b16 %v156
  %v725 = vunpack.c.l.b16 %v157
  %v726 = vunpack.c.l.b16 %v158
  %v727 = vunpack.c.l.b16 %v159
  %v728 = vunpack.c.l.b16 %v160
  %v729 = vunpack.c.l.b16 %v161
  %v730 = vunpack.c.l.b16 %v162
  %v731 = vunpack.c.l.b16 %v163
  %v732 = vunpack.c.l.b16 %v164
  %v733 = vunpack.c.l.b16 %v165
  %v734 = vunpack.c.l.b16 %v166
  %v735 = vunpack.c.l.b16 %v167
  %v736 = vunpack.c.l.b16 %v168
  %v737 = vunpack.c.l.b16 %v169
  %v738 = vunpack.c.l.b16 %v170
  %v739 = vunpack.c.l.b16 %v171
  %v740 = vunpack.c.l.b16 %v172
  %v741 = vunpack.c.l.b16 %v173
  %v742 = vunpack.c.l.b16 %v174
  %v743 = vunpack.c.l.b16 %v175
  %v744 = vunpack.c.l.b16 %v176
  %v745 = vunpack.c.l.b16 %v177
  %v746 = vunpack.c.l.b16 %v178
  %v747 = vunpack.c.l.b16 %v179
  %v748 = vunpack.c.l.b16 %v180
  %v749 = vunpack.c.l.b16 %v181
  %v750 = vunpack.c.l.b16 %v182
  %v751 = vunpack.c.l.b16 %v183
  %v752 = vunpack.c.l.b16 %v184
  %v753 = vunpack.c.l.b16 %v185
  %v754 = vunpack.c.l.b16 %v186
  %v755 = vunpack.c.l.b16 %v187
  %v756 = vunpack.c.l.b16 %v188
  %v757 = vunpack.c.l.b16 %v189
  %v758 = vunpack.c.l.b16 %v190
  %v759 = vunpack.c.l.b16 %v191
  %v760 = vunpack.c.l.b16 %v192
  %v761 = vunpack.c.l.b16 %v193
  %v762 = vunpack.c.l.b16 %v194
  %v763 = vunpack.c.l.b16 %v195
  %v764 = vunpack.c.l.b16 %v196
  %v765 = vunpack.c.l.b16 %v197
  %v766 = vunpack.c.l.b16 %v198
  %v767 = vunpack.c.l.b16 %v199
  %v768 = vunpack.c.l.b16 %v200
  %v769 = vunpack.c.l.b16 %v201
  %v770 = vunpack.c.l.b16 %v202
  %v771 = vunpack.c.l.b16 %v203
  %v772 = vunpack.c.l.b16 %v204
  %v773 = vunpack.c.l.b16 %v205
  %v774 = vunpack.c.l.b16 %v206
  %v775 = vunpack.c.l.b16 %v207
  %v776 = vunpack.c.l.b16 %v208
  %v777 = vunpack.c.l.b16 %v209
  %v778 = vunpack.c.l.b16 %v210
  %v779 = vunpack.c.l.b16 %v211
  %v780 = vunpack.c.l.b16 %v212
  %v781 = vunpack.c.l.b16 %v213
  %v782 = vunpack.c.l.b16 %v214
  %v783 = vunpack.c.l.b16 %v215
  %v784 = vunpack.c.l.b16 %v216
  %v785 = vunpack.c.l.b16 %v217
  %v786 = vunpack.c.l.b16 %v218
  %v787 = vunpack.c.l.b16 %v219
  %v788 = vunpack.c.l.b16 %v220
  %v789 = vunpack.c.l.b16 %v221
  %v790 = vunpack.c.l.b16 %v222
  %v791 = vunpack.c.l.b16 %v223
  %v792 = vunpack.c.l.b16 %v224
  %v793 = vunpack.c.l.b16 %v225
  %v794 = vunpack.c.l.b16 %v226
  %v795 = vunpack.c.l.b16 %v227
  %v796 = vunpack.c.l.b16 %v228
  %v797 = vunpack.c.l.b16 %v229
  %v798 = vunpack.c.l.b16 %v230
  %v799 = vunpack.c.l.b16 %v231
  %v800 = vunpack.c.l.b16 %v232
  %v801 = vunpack.c.l.b16 %v233
  %v802 = vunpack.c.l.b16 %v234
  %v803 = vunpack.c.l.b16 %v235
  %v804 = vunpack.c.l.b16 %v236
  %v805 = vunpack.c.l.b16 %v237
  %v806 = vunpack.c.l.b16 %v238
  %v807 = vunpack.c.l.b16 %v239
  %v808 = vunpack.c.l.b16 %v240
  %v809 = vunpack.c.l.b16 %v241
  %v810 = vunpack.c.l.b16 %v242
  %v811 = vunpack.c.l.b16 %v243
  %v812 = vunpack.c.l.b16 %v244
  %v813 = vunpack.c.l.b16 %v245
  %v814 = vunpack.c.l.b16 %v246
  %v815 = vunpack.c.l.b16 %v247
  %v816 = vunpack.c.l.b16 %v248
  %v817 = vunpack.c.l.b16 %v249
  %v818 = vunpack.c.l.b16 %v250
  %v819 = vunpack.c.l.b16 %v251
  %v820 = vunpack.c.l.b16 %v252
  %v821 = vunpack.c.l.b16 %v253
  %v822 = vunpack.c.l.b16 %v254
  %v823 = vunpack.c.l.b16 %v255
  %v824 = vunpack.c.l.b16 %v256
  %v825 = vunpack.c.l.b16 %v257
  %v826 = vunpack.c.l.b16 %v258
  %v827 = vunpack.c.l.b16 %v259
  %v828 = vunpack.c.l.b16 %v260
  %v829 = vunpack.c.l.b16 %v261
  %v830 = vunpack.c.l.b16 %v262
  %v831 = vunpack.c.l.b16 %v263
  %v832 = vunpack.c.l.b16 %v264
  %v833 = vunpack.c.l.b16 %v265
  %v834 = vunpack.c.l.b16 %v266
  %v835 = vunpack.c.l.b16 %v267
  %v836 = vunpack.c.l.b16 %v268
  %v837 = vunpack.c.l.b16 %v269
  %v838 = vunpack.c.l.b16 %v270
  %v839 = vunpack.c.l.b16 %v271
  %v840 = vunpack.c.l.b16 %v272
  %v841 = vunpack.c.l.b16 %v273
  %v842 = vunpack.c.l.b16 %v274
  %v843 = vunpack.c.l.b16 %v275
  %v844 = vpack.c.b16 %v589, %v588
  %v845 = vpack.c.b16 %v591, %v590
  %v846 = vpack.c.b16 %v593, %v592
  %v847 = vpack.c.b16 %v595, %v594
  %v848 = vpack.c.b16 %v597, %v596
  %v849 = vpack.c.b16 %v599, %v598
  %v850 = vpack.c.b16 %v601, %v600
  %v851 = vpack.c.b16 %v603, %v602
  %v852 = vpack.c.b16 %v605, %v604
  %v853 = vpack.c.b16 %v607, %v606
  %v854 = vpack.c.b16 %v609, %v608
  %v855 = vpack.c.b16 %v611, %v610
  %v856 = vpack.c.b16 %v613, %v612
  %v857 = vpack.c.b16 %v615, %v614
  %v858 = vpack.c.b16 %v617, %v616
  %v859 = vpack.c.b16 %v619, %v618
  %v860 = vpack.c.b16 %v621, %v620
  %v861 = vpack.c.b16 %v623, %v622
  %v862 = vpack.c.b16 %v625, %v624
  %v863 = vpack.c.b16 %v627, %v626
  %v864 = vpack.c.b16 %v629, %v628
  %v865 = vpack.c.b16 %v631, %v630
  %v866 = vpack.c.b16 %v633, %v632
  %v867 = vpack.c.b16 %v635, %v634
  %v868 = vpack.c.b16 %v637, %v636
  %v869 = vpack.c.b16 %v639, %v638
  %v870 = vpack.c.b16 %v641, %v640
  %v871 = vpack.c.b16 %v643, %v642
  %v872 = vpack.c.b16 %v645, %v644
  %v873 = vpack.c.b16 %v647, %v646
  %v874 = vpack.c.b16 %v649, %v648
  %v875 = vpack.c.b16 %v651, %v650
  %v876 = vpack.c.b16 %v653, %v652
  %v877 = vpack.c.b16 %v655, %v654
  %v878 = vpack.c.b16 %v657, %v656
  %v879 = vpack.c.b16 %v659, %v658
  %v880 = vpack.c.b16 %v661, %v660
  %v881 = vpack.c.b16 %v663, %v662
  %v882 = vpack.c.b16 %v665, %v664
  %v883 = vpack.c.b16 %v667, %v666
  %v884 = vpack.c.b16 %v669, %v668
  %v885 = vpack.c.b16 %v671, %v670
  %v886 = vpack.c.b16 %v673, %v672
  %v887 = vpack.c.b16 %v675, %v674
  %v888 = vpack.c.b16 %v677, %v676
  %v889 = vpack.c.b16 %v679, %v678
  %v890 = vpack.c.b16 %v681, %v680
  %v891 = vpack.c.b16 %v683, %v682
  %v892 = vpack.c.b16 %v685, %v684
  %v893 = vpack.c.b16 %v687, %v686
  %v894 = vpack.c.b16 %v689, %v688
  %v895 = vpack.c.b16 %v691, %v690
  %v896 = vpack.c.b16 %v693, %v692
  %v897 = vpack.c.b16 %v695, %v694
  %v898 = vpack.c.b16 %v697, %v696
  %v899 = vpack.c.b16 %v699, %v698
  %v900 = vpack.c.b16 %v701, %v700
  %v901 = vpack.c.b16 %v703, %v702
  %v902 = vpack.c.b16 %v705, %v704
  %v903 = vpack.c.b16 %v707, %v706
  %v904 = vpack.c.b16 %v709, %v708
  %v905 = vpack.c.b16 %v711, %v710
  %v906 = vpack.c.b16 %v713, %v712
  %v907 = vpack.c.b16 %v715, %v714
  %v908 = vpack.c.b16 %v717, %v716
  %v909 = vpack.c.b16 %v719, %v718
  %v910 = vpack.c.b16 %v721, %v720
  %v911 = vpack.c.b16 %v723, %v722
  %v912 = vpack.c.b16 %v725, %v724
  %v913 = vpack.c.b16 %v727, %v726
  %v914 = vpack.c.b16 %v729, %v728
  %v915 = vpack.c.b16 %v731, %v730
  %v916 = vpack.c.b16 %v733, %v732
  %v917 = vpack.c.b16 %v735, %v734
  %v918 = vpack.c.b16 %v737, %v736
  %v919 = vpack.c.b16 %v739, %v738
  %v920 = vpack.c.b16 %v741, %v740
  %v921 = vpack.c.b16 %v743, %v742
  %v922 = vpack.c.b16 %v745, %v744
  %v923 = vpack.c.b16 %v747, %v746
  %v924 = vpack.c.b16 %v749, %v748
  %v925 = vpack.c.b16 %v751, %v750
  %v926 = vpack.c.b16 %v753, %v752
  %v927 = vpack.c.b16 %v755, %v754
  %v928 = vpack.c.b16 %v757, %v756
  %v929 = vpack.c.b16 %v759, %v758
  %v930 = vpack.c.b16 %v761, %v760
  %v931 = vpack.c.b16 %v763, %v762
  %v932 = vpack.c.b16 %v765, %v764
  %v933 = vpack.c.b16 %v767, %v766
  %v934 = vpack.c.b16 %v769, %v768
  %v935 = vpack.c.b16 %v771, %v770
  %v936 = vpack.c.b16 %v773, %v772
  %v937 = vpack.c.b16 %v775, %v774
  %v938 = vpack.c.b16 %v777, %v776
  %v939 = vpack.c.b16 %v779, %v778
  %v940 = vpack.c.b16 %v781, %v780
  %v941 = vpack.c.b16 %v783, %v782
  %v942 = vpack.c.b16 %v785, %v784
  %v943 = vpack.c.b16 %v787, %v786
  %v944 = vpack.c.b16 %v789, %v788
  %v945 = vpack.c.b16 %v791, %v790
  %v946 = vpack.c.b16 %v793, %v792
  %v947 = vpack.c.b16 %v795, %v794
  %v948 = vpack.c.b16 %v797, %v796
  %v949 = vpack.c.b16 %v799, %v798
  %v950 = vpack.c.b16 %v801, %v800
  %v951 = vpack.c.b16 %v803, %v802
  %v952 = vpack.c.b16 %v805, %v804
  %v953 = vpack.c.b16 %v807, %v806
  %v954 = vpack.c.b16 %v809, %v808
  %v955 = vpack.c.b16 %v811, %v810
  %v956 = vpack.c.b16 %v813, %v812
  %v957 = vpack.c.b16 %v815, %v814
  %v958 = vpack.c.b16 %v817, %v816
  %v959 = vpack.c.b16 %v819, %v818
  %v960 = vpack.c.b16 %v821, %v820
  %v961 = vpack.c.b16 %v823, %v822
  %v962 = vpack.c.b16 %v825, %v824
  %v963 = vpack.c.b16 %v827, %v826
  %v964 = vpack.c.b16 %v829, %v828
  %v965 = vpack.c.b16 %v831, %v830
  %v966 = vpack.c.b16 %v833, %v832
  %v967 = vpack.c.b16 %v835, %v834
  %v968 = vpack.c.b16 %v837, %v836
  %v969 = vpack.c.b16 %v839, %v838
  %v970 = vpack.c.b16 %v841, %v840
  %v971 = vpack.c.b16 %v843, %v842
  %1100 = vmatprep.subr.bf16.mxu0 0
  %1101 = vmatpush1.bf16.msra.mxu0 %v844
  %1102 = vmatprep.subr.bf16.mxu0 0
  %1103 = vmatpush1.bf16.msra.mxu0 %v845
  %1104 = vmatprep.subr.bf16.mxu0 0
  %1105 = vmatpush1.bf16.msra.mxu0 %v846
  %1106 = vmatprep.subr.bf16.mxu0 0
  %1107 = vmatpush1.bf16.msra.mxu0 %v847
  %1108 = vmatprep.subr.bf16.mxu0 0
  %1109 = vmatpush1.bf16.msra.mxu0 %v848
  %1110 = vmatprep.subr.bf16.mxu0 0
  %1111 = vmatpush1.bf16.msra.mxu0 %v849
  %1112 = vmatprep.subr.bf16.mxu0 0
  %1113 = vmatpush1.bf16.msra.mxu0 %v850
  %1114 = vmatprep.subr.bf16.mxu0 0
  %1115 = vmatpush1.bf16.msra.mxu0 %v851
  %1116 = vmatprep.subr.bf16.mxu0 0
  %1117 = vmatpush1.bf16.msra.mxu0 %v852
  %1118 = vmatprep.subr.bf16.mxu0 0
  %1119 = vmatpush1.bf16.msra.mxu0 %v853
  %1120 = vmatprep.subr.bf16.mxu0 0
  %1121 = vmatpush1.bf16.msra.mxu0 %v854
  %1122 = vmatprep.subr.bf16.mxu0 0
  %1123 = vmatpush1.bf16.msra.mxu0 %v855
  %1124 = vmatprep.subr.bf16.mxu0 0
  %1125 = vmatpush1.bf16.msra.mxu0 %v856
  %1126 = vmatprep.subr.bf16.mxu0 0
  %1127 = vmatpush1.bf16.msra.mxu0 %v857
  %1128 = vmatprep.subr.bf16.mxu0 0
  %1129 = vmatpush1.bf16.msra.mxu0 %v858
  %1130 = vmatprep.subr.bf16.mxu0 0
  %1131 = vmatpush1.bf16.msra.mxu0 %v859
  %1132 = vmatprep.mubr.bf16.mxu0 %v301
  %1133 = vmatmul.mubr.bf16.gmra.mrb[0].mxu0 %v300
  %v1134 = vpop.f32.mrb[0].mxu0
  %v1135 = vadd.f32 0.0, %v1134
  %v1136 = vpop.f32.mrb[0].mxu0
  %v1137 = vpop.f32.mrb[0].mxu0
  %v1138 = vpop.f32.mrb[0].mxu0
  %1139 = vdwg.mxu0
  %1140 = vmatprep.subr.bf16.mxu0 0
  %1141 = vmatpush1.bf16.msra.mxu0 %v860
  %1142 = vmatprep.subr.bf16.mxu0 0
  %1143 = vmatpush1.bf16.msra.mxu0 %v861
  %1144 = vmatprep.subr.bf16.mxu0 0
  %1145 = vmatpush1.bf16.msra.mxu0 %v862
  %1146 = vmatprep.subr.bf16.mxu0 0
  %1147 = vmatpush1.bf16.msra.mxu0 %v863
  %1148 = vmatprep.subr.bf16.mxu0 0
  %1149 = vmatpush1.bf16.msra.mxu0 %v864
  %1150 = vmatprep.subr.bf16.mxu0 0
  %1151 = vmatpush1.bf16.msra.mxu0 %v865
  %1152 = vmatprep.subr.bf16.mxu0 0
  %1153 = vmatpush1.bf16.msra.mxu0 %v866
  %1154 = vmatprep.subr.bf16.mxu0 0
  %1155 = vmatpush1.bf16.msra.mxu0 %v867
  %1156 = vmatprep.subr.bf16.mxu0 0
  %1157 = vmatpush1.bf16.msra.mxu0 %v868
  %1158 = vmatprep.subr.bf16.mxu0 0
  %1159 = vmatpush1.bf16.msra.mxu0 %v869
  %1160 = vmatprep.subr.bf16.mxu0 0
  %1161 = vmatpush1.bf16.msra.mxu0 %v870
  %1162 = vmatprep.subr.bf16.mxu0 0
  %1163 = vmatpush1.bf16.msra.mxu0 %v871
  %1164 = vmatprep.subr.bf16.mxu0 0
  %1165 = vmatpush1.bf16.msra.mxu0 %v872
  %1166 = vmatprep.subr.bf16.mxu0 0
  %1167 = vmatpush1.bf16.msra.mxu0 %v873
  %1168 = vmatprep.subr.bf16.mxu0 0
  %1169 = vmatpush1.bf16.msra.mxu0 %v874
  %1170 = vmatprep.subr.bf16.mxu0 0
  %1171 = vmatpush1.bf16.msra.mxu0 %v875
  %1172 = vmatprep.mubr.bf16.mxu0 %v303
  %1173 = vmatmul.mubr.bf16.gmra.mrb[0].mxu0 %v302
  %v1174 = vpop.f32.mrb[0].mxu0
  %v1175 = vadd.f32 %v1135, %v1174
  %v1176 = vpop.f32.mrb[0].mxu0
  %v1177 = vpop.f32.mrb[0].mxu0
  %v1178 = vpop.f32.mrb[0].mxu0
  %1179 = vdwg.mxu0
  %1180 = vmatprep.subr.bf16.mxu0 0
  %1181 = vmatpush1.bf16.msra.mxu0 %v876
  %1182 = vmatprep.subr.bf16.mxu0 0
  %1183 = vmatpush1.bf16.msra.mxu0 %v877
  %1184 = vmatprep.subr.bf16.mxu0 0
  %1185 = vmatpush1.bf16.msra.mxu0 %v878
  %1186 = vmatprep.subr.bf16.mxu0 0
  %1187 = vmatpush1.bf16.msra.mxu0 %v879
  %1188 = vmatprep.subr.bf16.mxu0 0
  %1189 = vmatpush1.bf16.msra.mxu0 %v880
  %1190 = vmatprep.subr.bf16.mxu0 0
  %1191 = vmatpush1.bf16.msra.mxu0 %v881
  %1192 = vmatprep.subr.bf16.mxu0 0
  %1193 = vmatpush1.bf16.msra.mxu0 %v882
  %1194 = vmatprep.subr.bf16.mxu0 0
  %1195 = vmatpush1.bf16.msra.mxu0 %v883
  %1196 = vmatprep.subr.bf16.mxu0 0
  %1197 = vmatpush1.bf16.msra.mxu0 %v884
  %1198 = vmatprep.subr.bf16.mxu0 0
  %1199 = vmatpush1.bf16.msra.mxu0 %v885
  %1200 = vmatprep.subr.bf16.mxu0 0
  %1201 = vmatpush1.bf16.msra.mxu0 %v886
  %1202 = vmatprep.subr.bf16.mxu0 0
  %1203 = vmatpush1.bf16.msra.mxu0 %v887
  %1204 = vmatprep.subr.bf16.mxu0 0
  %1205 = vmatpush1.bf16.msra.mxu0 %v888
  %1206 = vmatprep.subr.bf16.mxu0 0
  %1207 = vmatpush1.bf16.msra.mxu0 %v889
  %1208 = vmatprep.subr.bf16.mxu0 0
  %1209 = vmatpush1.bf16.msra.mxu0 %v890
  %1210 = vmatprep.subr.bf16.mxu0 0
  %1211 = vmatpush1.bf16.msra.mxu0 %v891
  %1212 = vmatprep.mubr.bf16.mxu0 %v305
  %1213 = vmatmul.mubr.bf16.gmra.mrb[0].mxu0 %v304
  %v1214 = vpop.f32.mrb[0].mxu0
  %v1215 = vadd.f32 %v1175, %v1214
  %v1216 = vpop.f32.mrb[0].mxu0
  %v1217 = vpop.f32.mrb[0].mxu0
  %v1218 = vpop.f32.mrb[0].mxu0
  %1219 = vdwg.mxu0
  %1220 = vmatprep.subr.bf16.mxu0 0
  %1221 = vmatpush1.bf16.msra.mxu0 %v892
  %1222 = vmatprep.subr.bf16.mxu0 0
  %1223 = vmatpush1.bf16.msra.mxu0 %v893
  %1224 = vmatprep.subr.bf16.mxu0 0
  %1225 = vmatpush1.bf16.msra.mxu0 %v894
  %1226 = vmatprep.subr.bf16.mxu0 0
  %1227 = vmatpush1.bf16.msra.mxu0 %v895
  %1228 = vmatprep.subr.bf16.mxu0 0
  %1229 = vmatpush1.bf16.msra.mxu0 %v896
  %1230 = vmatprep.subr.bf16.mxu0 0
  %1231 = vmatpush1.bf16.msra.mxu0 %v897
  %1232 = vmatprep.subr.bf16.mxu0 0
  %1233 = vmatpush1.bf16.msra.mxu0 %v898
  %1234 = vmatprep.subr.bf16.mxu0 0
  %1235 = vmatpush1.bf16.msra.mxu0 %v899
  %1236 = vmatprep.subr.bf16.mxu0 0
  %1237 = vmatpush1.bf16.msra.mxu0 %v900
  %1238 = vmatprep.subr.bf16.mxu0 0
  %1239 = vmatpush1.bf16.msra.mxu0 %v901
  %1240 = vmatprep.subr.bf16.mxu0 0
  %1241 = vmatpush1.bf16.msra.mxu0 %v902
  %1242 = vmatprep.subr.bf16.mxu0 0
  %1243 = vmatpush1.bf16.msra.mxu0 %v903
  %1244 = vmatprep.subr.bf16.mxu0 0
  %1245 = vmatpush1.bf16.msra.mxu0 %v904
  %1246 = vmatprep.subr.bf16.mxu0 0
  %1247 = vmatpush1.bf16.msra.mxu0 %v905
  %1248 = vmatprep.subr.bf16.mxu0 0
  %1249 = vmatpush1.bf16.msra.mxu0 %v906
  %1250 = vmatprep.subr.bf16.mxu0 0
  %1251 = vmatpush1.bf16.msra.mxu0 %v907
  %1252 = vmatprep.mubr.bf16.mxu0 %v307
  %1253 = vmatmul.mubr.bf16.gmra.mrb[0].mxu0 %v306
  %v1254 = vpop.f32.mrb[0].mxu0
  %v1255 = vadd.f32 %v1215, %v1254
  %v1256 = vpop.f32.mrb[0].mxu0
  %v1257 = vpop.f32.mrb[0].mxu0
  %v1258 = vpop.f32.mrb[0].mxu0
  %1259 = vdwg.mxu0
  %1260 = vmatprep.subr.bf16.mxu0 0
  %1261 = vmatpush1.bf16.msra.mxu0 %v908
  %1262 = vmatprep.subr.bf16.mxu0 0
  %1263 = vmatpush1.bf16.msra.mxu0 %v909
  %1264 = vmatprep.subr.bf16.mxu0 0
  %1265 = vmatpush1.bf16.msra.mxu0 %v910
  %1266 = vmatprep.subr.bf16.mxu0 0
  %1267 = vmatpush1.bf16.msra.mxu0 %v911
  %1268 = vmatprep.subr.bf16.mxu0 0
  %1269 = vmatpush1.bf16.msra.mxu0 %v912
  %1270 = vmatprep.subr.bf16.mxu0 0
  %1271 = vmatpush1.bf16.msra.mxu0 %v913
  %1272 = vmatprep.subr.bf16.mxu0 0
  %1273 = vmatpush1.bf16.msra.mxu0 %v914
  %1274 = vmatprep.subr.bf16.mxu0 0
  %1275 = vmatpush1.bf16.msra.mxu0 %v915
  %1276 = vmatprep.subr.bf16.mxu0 0
  %1277 = vmatpush1.bf16.msra.mxu0 %v916
  %1278 = vmatprep.subr.bf16.mxu0 0
  %1279 = vmatpush1.bf16.msra.mxu0 %v917
  %1280 = vmatprep.subr.bf16.mxu0 0
  %1281 = vmatpush1.bf16.msra.mxu0 %v918
  %1282 = vmatprep.subr.bf16.mxu0 0
  %1283 = vmatpush1.bf16.msra.mxu0 %v919
  %1284 = vmatprep.subr.bf16.mxu0 0
  %1285 = vmatpush1.bf16.msra.mxu0 %v920
  %1286 = vmatprep.subr.bf16.mxu0 0
  %1287 = vmatpush1.bf16.msra.mxu0 %v921
  %1288 = vmatprep.subr.bf16.mxu0 0
  %1289 = vmatpush1.bf16.msra.mxu0 %v922
  %1290 = vmatprep.subr.bf16.mxu0 0
  %1291 = vmatpush1.bf16.msra.mxu0 %v923
  %1292 = vmatprep.mubr.bf16.mxu0 %v309
  %1293 = vmatmul.mubr.bf16.gmra.mrb[0].mxu0 %v308
  %v1294 = vpop.f32.mrb[0].mxu0
  %v1295 = vadd.f32 %v1255, %v1294
  %v1296 = vpop.f32.mrb[0].mxu0
  %v1297 = vpop.f32.mrb[0].mxu0
  %v1298 = vpop.f32.mrb[0].mxu0
  %1299 = vdwg.mxu0
  %1300 = vmatprep.subr.bf16.mxu0 0
  %1301 = vmatpush1.bf16.msra.mxu0 %v924
  %1302 = vmatprep.subr.bf16.mxu0 0
  %1303 = vmatpush1.bf16.msra.mxu0 %v925
  %1304 = vmatprep.subr.bf16.mxu0 0
  %1305 = vmatpush1.bf16.msra.mxu0 %v926
  %1306 = vmatprep.subr.bf16.mxu0 0
  %1307 = vmatpush1.bf16.msra.mxu0 %v927
  %1308 = vmatprep.subr.bf16.mxu0 0
  %1309 = vmatpush1.bf16.msra.mxu0 %v928
  %1310 = vmatprep.subr.bf16.mxu0 0
  %1311 = vmatpush1.bf16.msra.mxu0 %v929
  %1312 = vmatprep.subr.bf16.mxu0 0
  %1313 = vmatpush1.bf16.msra.mxu0 %v930
  %1314 = vmatprep.subr.bf16.mxu0 0
  %1315 = vmatpush1.bf16.msra.mxu0 %v931
  %1316 = vmatprep.subr.bf16.mxu0 0
  %1317 = vmatpush1.bf16.msra.mxu0 %v932
  %1318 = vmatprep.subr.bf16.mxu0 0
  %1319 = vmatpush1.bf16.msra.mxu0 %v933
  %1320 = vmatprep.subr.bf16.mxu0 0
  %1321 = vmatpush1.bf16.msra.mxu0 %v934
  %1322 = vmatprep.subr.bf16.mxu0 0
  %1323 = vmatpush1.bf16.msra.mxu0 %v935
  %1324 = vmatprep.subr.bf16.mxu0 0
  %1325 = vmatpush1.bf16.msra.mxu0 %v936
  %1326 = vmatprep.subr.bf16.mxu0 0
  %1327 = vmatpush1.bf16.msra.mxu0 %v937
  %1328 = vmatprep.subr.bf16.mxu0 0
  %1329 = vmatpush1.bf16.msra.mxu0 %v938
  %1330 = vmatprep.subr.bf16.mxu0 0
  %1331 = vmatpush1.bf16.msra.mxu0 %v939
  %1332 = vmatprep.mubr.bf16.mxu0 %v311
  %1333 = vmatmul.mubr.bf16.gmra.mrb[0].mxu0 %v310
  %v1334 = vpop.f32.mrb[0].mxu0
  %v1335 = vadd.f32 %v1295, %v1334
  %v1336 = vpop.f32.mrb[0].mxu0
  %v1337 = vpop.f32.mrb[0].mxu0
  %v1338 = vpop.f32.mrb[0].mxu0
  %1339 = vdwg.mxu0
  %1340 = vmatprep.subr.bf16.mxu0 0
  %1341 = vmatpush1.bf16.msra.mxu0 %v940
  %1342 = vmatprep.subr.bf16.mxu0 0
  %1343 = vmatpush1.bf16.msra.mxu0 %v941
  %1344 = vmatprep.subr.bf16.mxu0 0
  %1345 = vmatpush1.bf16.msra.mxu0 %v942
  %1346 = vmatprep.subr.bf16.mxu0 0
  %1347 = vmatpush1.bf16.msra.mxu0 %v943
  %1348 = vmatprep.subr.bf16.mxu0 0
  %1349 = vmatpush1.bf16.msra.mxu0 %v944
  %1350 = vmatprep.subr.bf16.mxu0 0
  %1351 = vmatpush1.bf16.msra.mxu0 %v945
  %1352 = vmatprep.subr.bf16.mxu0 0
  %1353 = vmatpush1.bf16.msra.mxu0 %v946
  %1354 = vmatprep.subr.bf16.mxu0 0
  %1355 = vmatpush1.bf16.msra.mxu0 %v947
  %1356 = vmatprep.subr.bf16.mxu0 0
  %1357 = vmatpush1.bf16.msra.mxu0 %v948
  %1358 = vmatprep.subr.bf16.mxu0 0
  %1359 = vmatpush1.bf16.msra.mxu0 %v949
  %1360 = vmatprep.subr.bf16.mxu0 0
  %1361 = vmatpush1.bf16.msra.mxu0 %v950
  %1362 = vmatprep.subr.bf16.mxu0 0
  %1363 = vmatpush1.bf16.msra.mxu0 %v951
  %1364 = vmatprep.subr.bf16.mxu0 0
  %1365 = vmatpush1.bf16.msra.mxu0 %v952
  %1366 = vmatprep.subr.bf16.mxu0 0
  %1367 = vmatpush1.bf16.msra.mxu0 %v953
  %1368 = vmatprep.subr.bf16.mxu0 0
  %1369 = vmatpush1.bf16.msra.mxu0 %v954
  %1370 = vmatprep.subr.bf16.mxu0 0
  %1371 = vmatpush1.bf16.msra.mxu0 %v955
  %1372 = vmatprep.mubr.bf16.mxu0 %v313
  %1373 = vmatmul.mubr.bf16.gmra.mrb[0].mxu0 %v312
  %v1374 = vpop.f32.mrb[0].mxu0
  %v1375 = vadd.f32 %v1335, %v1374
  %v1376 = vpop.f32.mrb[0].mxu0
  %v1377 = vpop.f32.mrb[0].mxu0
  %v1378 = vpop.f32.mrb[0].mxu0
  %1379 = vdwg.mxu0
  %1380 = vmatprep.subr.bf16.mxu0 0
  %1381 = vmatpush1.bf16.msra.mxu0 %v956
  %1382 = vmatprep.subr.bf16.mxu0 0
  %1383 = vmatpush1.bf16.msra.mxu0 %v957
  %1384 = vmatprep.subr.bf16.mxu0 0
  %1385 = vmatpush1.bf16.msra.mxu0 %v958
  %1386 = vmatprep.subr.bf16.mxu0 0
  %1387 = vmatpush1.bf16.msra.mxu0 %v959
  %1388 = vmatprep.subr.bf16.mxu0 0
  %1389 = vmatpush1.bf16.msra.mxu0 %v960
  %1390 = vmatprep.subr.bf16.mxu0 0
  %1391 = vmatpush1.bf16.msra.mxu0 %v961
  %1392 = vmatprep.subr.bf16.mxu0 0
  %1393 = vmatpush1.bf16.msra.mxu0 %v962
  %1394 = vmatprep.subr.bf16.mxu0 0
  %1395 = vmatpush1.bf16.msra.mxu0 %v963
  %1396 = vmatprep.subr.bf16.mxu0 0
  %1397 = vmatpush1.bf16.msra.mxu0 %v964
  %1398 = vmatprep.subr.bf16.mxu0 0
  %1399 = vmatpush1.bf16.msra.mxu0 %v965
  %1400 = vmatprep.subr.bf16.mxu0 0
  %1401 = vmatpush1.bf16.msra.mxu0 %v966
  %1402 = vmatprep.subr.bf16.mxu0 0
  %1403 = vmatpush1.bf16.msra.mxu0 %v967
  %1404 = vmatprep.subr.bf16.mxu0 0
  %1405 = vmatpush1.bf16.msra.mxu0 %v968
  %1406 = vmatprep.subr.bf16.mxu0 0
  %1407 = vmatpush1.bf16.msra.mxu0 %v969
  %1408 = vmatprep.subr.bf16.mxu0 0
  %1409 = vmatpush1.bf16.msra.mxu0 %v970
  %1410 = vmatprep.subr.bf16.mxu0 0
  %1411 = vmatpush1.bf16.msra.mxu0 %v971
  %1412 = vmatprep.mubr.bf16.mxu0 %v315
  %1413 = vmatmul.mubr.bf16.gmra.mrb[0].mxu0 %v314
  %v1414 = vpop.f32.mrb[0].mxu0
  %v1415 = vadd.f32 %v1375, %v1414
  %v1416 = vpop.f32.mrb[0].mxu0
  %v1417 = vpop.f32.mrb[0].mxu0
  %v1418 = vpop.f32.mrb[0].mxu0
  %1419 = vdwg.mxu0
  %v1420 = vsub.f32 0.0, %v1415
  %v1421 = vmul.f32 %v1420, 1.442695
  %v1422 = vpow.pop %v1421
  %v1423 = vadd.f32 %v1422, 1.0
  %v1424 = vrcp.pop %v1423
  %v1425 = vmul.f32 1.0, %v1424
  %vm1426 = vcmask 7168
  %1427 = vst.msk [vmem:[%s2] sm:$0xff] %vm1426, %v1425
  // Predicated region
  $region10: #{discriminator_forward.9} parent=0 // pred_check
    _
  $region11: #{discriminator_forward.9} parent=0 // pred_check_branch
    %1429 = sbr.rel (0) target = $region13
  $region12: #{discriminator_forward.9} parent=0 // pred_region
    _
  $region13: #{discriminator_forward.9} parent=0 // pred_fallthru
    _
  // Predicated region
  $region14: #{discriminator_forward.9} parent=0 // pred_check
    _
  $region15: #{discriminator_forward.9} parent=0 // pred_check_branch
    %1431 = sbr.rel (0) target = $region17
  $region16: #{discriminator_forward.9} parent=0 // pred_region
    _
  $region17: #{discriminator_forward.9} parent=0 // pred_fallthru
    _

</llo_original>
